<compile_context>
chip_gen: v7x
topology: tpu7x:2x2x1
jax: 0.10.0
libtpu: 0.0.40
codegen_flags: <defaults>
</compile_context>

<pallas_src>
import functools

import jax
import jax.numpy as jnp
from jax import lax
from jax.experimental import pallas as pl
from jax.experimental.pallas import tpu as pltpu


def _feature_attention_kernel(x_ref, wqkv_ref, wl_ref, bl_ref, o_ref, *,
                              n_heads: int, d_model: int, n_valid: int,
                              residual: bool, compute_dtype):
    Bb, Np, Dp = x_ref.shape          # padded cluster (Np % 8 == 0) / feature (Dp % 128 == 0)
    M = Bb * Np
    dh = d_model // n_heads
    inv_n = 1.0 / n_valid
    needs_mask = Np > n_valid         # static: padded cluster rows present?

    x3 = x_ref[...]                                        # (Bb, Np, Dp) compute_dtype
    # Residual contribution to the cluster-mean (padded rows are zero -> no mask needed).
    x_sum = jnp.sum(x3.astype(jnp.float32), axis=1)        # (Bb, Dp) f32

    # Fused QKV projection: one wide MXU matmul (f32 accumulation), then a single cast
    # to the compute dtype -- q/k/v are only ever consumed through MXU matmuls.
    # 1/sqrt(cluster) is already folded into the Wq columns (wrapper).
    x2 = x3.reshape(M, Dp)                                  # Np % 8 == 0 -> trivial collapse
    qkv = jnp.dot(x2, wqkv_ref[...],
                  preferred_element_type=jnp.float32).astype(compute_dtype)   # (M, 3Dp)
    qkv = qkv.reshape(Bb, Np, 3 * Dp)

    if needs_mask:
        key_mask = lax.broadcasted_iota(jnp.int32, (1, 1, Np), 2) < n_valid
        row_mask = (lax.broadcasted_iota(jnp.int32, (1, Np, 1), 1)
                    < n_valid).astype(jnp.float32)

    lin = None            # running feedforward pre-activation, (M, Dp) f32
    head_sums = []        # per-head sum over cluster of the attention output, (Bb, dh) f32
    for h in range(n_heads):
        lo, hi = h * dh, (h + 1) * dh
        qh = qkv[:, :, lo:hi]                               # (Bb, Np, dh) compute_dtype
        kh = qkv[:, :, Dp + lo:Dp + hi]
        vh = qkv[:, :, 2 * Dp + lo:2 * Dp + hi]

        s = jnp.einsum("bnd,bmd->bnm", qh, kh,
                       preferred_element_type=jnp.float32)  # (Bb, Np, Np) f32
        if needs_mask:
            s = jnp.where(key_mask, s, -1e30)               # padded keys get no softmax mass
        s = s - jnp.max(s, axis=-1, keepdims=True)
        p = jnp.exp(s)
        p = p * pl.reciprocal(jnp.sum(p, axis=-1, keepdims=True), approx=True)
        o = jnp.einsum("bnm,bmd->bnd", p.astype(compute_dtype), vh,
                       preferred_element_type=jnp.float32)  # (Bb, Np, dh) f32
        if needs_mask:
            o = o * row_mask                                # padded query rows contribute 0

        # Attention skip connection, folded into the cluster-mean per head.
        head_sums.append(jnp.sum(o, axis=1))                # (Bb, dh) f32

        # Accumulate the feedforward matmul per head: lin += o_h @ Wl[rows of head h, :].
        contrib = jnp.dot(o.reshape(M, dh).astype(compute_dtype), wl_ref[lo:hi, :],
                          preferred_element_type=jnp.float32)        # (M, Dp) f32
        lin = contrib if lin is None else lin + contrib

    lin = lin + bl_ref[...]                                 # bias broadcast (1, Dp)
    ff = jnp.maximum(lin, 0.0).reshape(Bb, Np, Dp)          # relu, back to (Bb, Np, Dp)
    if needs_mask:
        ff = ff * row_mask                                  # drop padded query rows
    total = jnp.sum(ff, axis=1)                             # (Bb, Dp) f32

    if Dp > d_model:
        head_sums.append(jnp.zeros((Bb, Dp - d_model), jnp.float32))
    total = total + jnp.concatenate(head_sums, axis=-1)     # + sum_n(attn), tiny concat
    if residual:
        total = total + x_sum                               # + sum_n(x)
    o_ref[...] = (total * inv_n).astype(o_ref.dtype)        # mean over the true cluster size


def feature_attention_layer(x, wq, wk, wv, wl, bl, *, n_heads, cluster,
                            residual=True, block_b=128,
                            compute_dtype=jnp.bfloat16,
                            vmem_budget_bytes=40 * 1024 * 1024):
    """x: (B, cluster, in_dim) ; Wq/Wk/Wv/Wl: (in_dim, in_dim) stored (in, out) ;
    bl: (1, in_dim). Returns (B, in_dim) f32."""
    B, N, D = x.shape
    assert N == cluster
    assert D % n_heads == 0
    dh = D // n_heads
    f32 = jnp.float32

    # ---- pad feature dim to a lane multiple (128) and cluster dim to a sublane
    #      multiple (8); zero padding keeps the math exact (softmax/mean leakage is
    #      masked in-kernel, and that mask is statically skipped when unneeded). ----
    Dp = ((D + 127) // 128) * 128
    Np = ((N + 7) // 8) * 8

    scale = 1.0 / (cluster ** 0.5)   # score scale folded into Wq columns: zero in-kernel cost

    def pad_w(w, col_scale=1.0):
        w = jnp.asarray(w, f32) * col_scale
        return jnp.zeros((Dp, Dp), f32).at[:D, :D].set(w)

    wqkv = jnp.concatenate([pad_w(wq, scale), pad_w(wk), pad_w(wv)],
                           axis=1).astype(compute_dtype)                      # (Dp, 3Dp)
    wl_p = pad_w(wl).astype(compute_dtype)                                    # (Dp, Dp)
    bl_p = jnp.zeros((1, Dp), f32).at[:, :D].set(jnp.asarray(bl, f32).reshape(1, D))

    # ---- batch blocking: largest sublane-aligned Bb under the VMEM budget, capped so
    #      the grid has >= 2 parallel steps when the batch allows (v7x: 2 TensorCores). ----
    cbytes = jnp.dtype(compute_dtype).itemsize

    def step_bytes(bb):
        xblk = 2 * bb * Np * Dp * cbytes         # double-buffered x block (compute dtype)
        oblk = 2 * bb * Dp * 4                   # double-buffered output block (f32)
        qkv = bb * Np * 3 * Dp * cbytes          # fused projection result (compute dtype)
        lin = 2 * bb * Np * Dp * 4               # FF accumulator + relu temp (f32)
        sc = 2 * bb * Np * Np * 4                # scores + probs for one head (f32)
        oh = bb * Np * max(dh, 1) * 4            # one head output (f32)
        return xblk + oblk + qkv + lin + sc + oh

    weight_bytes = (Dp * 3 * Dp + Dp * Dp) * cbytes * 2 + Dp * 4 * 2

    split_cap = max(8, (((B + 1) // 2 + 7) // 8) * 8)       # aim for >= 2 grid steps
    Bb = max(8, (min(int(block_b), split_cap) // 8) * 8)
    while Bb > 8 and weight_bytes + step_bytes(Bb) > vmem_budget_bytes:
        Bb -= 8

    B_pad = ((B + Bb - 1) // Bb) * Bb
    grid = (B_pad // Bb,)

    vmem_limit = int(1.5 * (weight_bytes + step_bytes(Bb)))
    vmem_limit = min(max(vmem_limit, 32 * 1024 * 1024), 64 * 1024 * 1024)

    # ---- input: zero-pad batch/cluster/feature, stream as compute dtype (halves the
    #      HBM bytes and the x double buffer); padded rows/cols are exact zeros. ----
    xp = jnp.zeros((B_pad, Np, Dp), compute_dtype)
    xp = xp.at[:B, :N, :D].set(jnp.asarray(x, f32).astype(compute_dtype))

    kernel = functools.partial(
        _feature_attention_kernel, n_heads=n_heads, d_model=D, n_valid=N,
        residual=residual, compute_dtype=compute_dtype)

    out = pl.pallas_call(
        kernel,
        out_shape=jax.ShapeDtypeStruct((B_pad, Dp), jnp.float32),
        grid_spec=pltpu.PrefetchScalarGridSpec(
            num_scalar_prefetch=0,
            grid=grid,
            in_specs=[
                pl.BlockSpec((Bb, Np, Dp), lambda b: (b, 0, 0)),   # x: Bb batch rows per step
                pl.BlockSpec((Dp, 3 * Dp), lambda b: (0, 0)),      # fused Wqkv (constant block)
                pl.BlockSpec((Dp, Dp), lambda b: (0, 0)),          # W_lin (in, out)
                pl.BlockSpec((1, Dp), lambda b: (0, 0)),           # bias
            ],
            out_specs=pl.BlockSpec((Bb, Dp), lambda b: (b, 0)),    # lane-dense 2-D block
        ),
        compiler_params=pltpu.CompilerParams(
            dimension_semantics=("parallel",),
            vmem_limit_bytes=vmem_limit),
    )(xp, wqkv, wl_p, bl_p)
    return out[:B, :D]


def _reference(x, wq, wk, wv, wl, bl, *, n_heads, cluster, residual=True):
    # plain-JAX f32 reference mirroring the torch forward (eval mode)
    B, N, D = x.shape
    dh = D // n_heads
    q = jnp.einsum("bnd,de->bne", x, wq)
    k = jnp.einsum("bnd,de->bne", x, wk)
    v = jnp.einsum("bnd,de->bne", x, wv)
    outs = []
    for h in range(n_heads):
        qh, kh, vh = (t[..., h * dh:(h + 1) * dh] for t in (q, k, v))
        s = jnp.einsum("bnd,bmd->bnm", qh, kh) / (cluster ** 0.5)
        p = jax.nn.softmax(s, axis=-1)
        outs.append(jnp.einsum("bnm,bmd->bnd", p, vh))
    attn = jnp.concatenate(outs, axis=-1)
    ff = jax.nn.relu(attn @ wl + bl) + attn
    out = ff + x if residual else ff
    return jnp.mean(out, axis=1)


def _xavier_uniform(key, shape):
    fan_in, fan_out = shape[-2], shape[-1]
    limit = (6.0 / (fan_in + fan_out)) ** 0.5
    return jax.random.uniform(key, shape, jnp.float32, -limit, limit)


if __name__ == "__main__":
    # small shapes consistent with the module
    B, cluster, in_dim, n_heads = 2, 8, 32, 4

    key = jax.random.PRNGKey(0)
    kx, kq, kk, kv, kw, kb, kx2, kx3 = jax.random.split(key, 8)

    x = jax.random.normal(kx, (B, cluster, in_dim), jnp.float32)
    wq = _xavier_uniform(kq, (in_dim, in_dim))
    wk = _xavier_uniform(kk, (in_dim, in_dim))
    wv = _xavier_uniform(kv, (in_dim, in_dim))
    wl = _xavier_uniform(kw, (in_dim, in_dim))             # linear weight stored as (in, out)
    bl = jax.random.uniform(kb, (1, in_dim), jnp.float32, -0.1, 0.1)

    # bf16 MXU operands / bf16-streamed x + approx reciprocal -> loosened tolerance.
    tol = 5e-2

    # test 1: basic
    y = feature_attention_layer(x, wq, wk, wv, wl, bl,
                                n_heads=n_heads, cluster=cluster, residual=True)
    y = jax.block_until_ready(y)
    y_ref = _reference(x, wq, wk, wv, wl, bl,
                       n_heads=n_heads, cluster=cluster, residual=True)
    assert y.shape == (B, in_dim)
    assert jnp.allclose(y, y_ref, atol=tol, rtol=tol), "mismatch vs JAX reference (test 1)"

    # test 2: batch not a multiple of the block -> padding + multi-step parallel grid
    B2 = 20
    x2 = jax.random.normal(kx2, (B2, cluster, in_dim), jnp.float32)
    y2 = feature_attention_layer(x2, wq, wk, wv, wl, bl,
                                 n_heads=n_heads, cluster=cluster, residual=True,
                                 block_b=8)
    y2 = jax.block_until_ready(y2)
    y2_ref = _reference(x2, wq, wk, wv, wl, bl,
                        n_heads=n_heads, cluster=cluster, residual=True)
    assert y2.shape == (B2, in_dim)
    assert jnp.allclose(y2, y2_ref, atol=tol, rtol=tol), "mismatch vs JAX reference (test 2)"

    # test 3: cluster not a multiple of 8 -> sublane padding + in-kernel softmax/row masking
    cluster3 = 6
    x3 = jax.random.normal(kx3, (B2, cluster3, in_dim), jnp.float32)
    y3 = feature_attention_layer(x3, wq, wk, wv, wl, bl,
                                 n_heads=n_heads, cluster=cluster3, residual=True)
    y3 = jax.block_until_ready(y3)
    y3_ref = _reference(x3, wq, wk, wv, wl, bl,
                        n_heads=n_heads, cluster=cluster3, residual=True)
    assert y3.shape == (B2, in_dim)
    assert jnp.allclose(y3, y3_ref, atol=tol, rtol=tol), "mismatch vs JAX reference (test 3)"

    print("KERNEL_OK")
</pallas_src>

<mosaic_0001>
module attributes {stable_mosaic.version = 11 : i64} {
  func.func @_feature_attention_kernel(%arg0: i32, %arg1: memref<8x8x128xbf16, #tpu.memory_space<vmem>>, %arg2: memref<128x384xbf16, #tpu.memory_space<vmem>>, %arg3: memref<128x128xbf16, #tpu.memory_space<vmem>>, %arg4: memref<1x128xf32, #tpu.memory_space<vmem>>, %arg5: memref<8x128xf32, #tpu.memory_space<vmem>>) attributes {dimension_semantics = [#tpu.dimension_semantics<parallel>], iteration_bounds = array<i64: 1>, scalar_prefetch = 0 : i64, scratch_operands = 0 : i64, tpu.core_type = #tpu.core_type<tc>, window_params = [{transform_indices = @transform_0, window_bounds = array<i64: 8, 8, 128>}, {pipeline_mode = #tpu.pipeline_mode<synchronous>, transform_indices = @transform_1, window_bounds = array<i64: 128, 384>}, {pipeline_mode = #tpu.pipeline_mode<synchronous>, transform_indices = @transform_2, window_bounds = array<i64: 128, 128>}, {pipeline_mode = #tpu.pipeline_mode<synchronous>, transform_indices = @transform_3, window_bounds = array<i64: 1, 128>}, {transform_indices = @transform_4, window_bounds = array<i64: 8, 128>}]} {
    %c0 = arith.constant 0 : index
    %c0_0 = arith.constant 0 : index
    %c0_1 = arith.constant 0 : index
    %0 = vector.load %arg1[%c0, %c0_0, %c0_1] : memref<8x8x128xbf16, #tpu.memory_space<vmem>>, vector<8x8x128xbf16>
    %1 = arith.extf %0 : vector<8x8x128xbf16> to vector<8x8x128xf32>
    %cst = arith.constant dense<0.000000e+00> : vector<8x128xf32>
    %2 = vector.multi_reduction <add>, %1, %cst [1] : vector<8x8x128xf32> to vector<8x128xf32>
    %3 = vector.shape_cast %0 : vector<8x8x128xbf16> to vector<64x128xbf16>
    %c0_2 = arith.constant 0 : index
    %c0_3 = arith.constant 0 : index
    %4 = vector.load %arg2[%c0_2, %c0_3] : memref<128x384xbf16, #tpu.memory_space<vmem>>, vector<128x384xbf16>
    %cst_4 = arith.constant dense<0.000000e+00> : vector<64x384xf32>
    %5 = tpu.matmul %3, %4, %cst_4 {dimension_numbers = #tpu.dot_dimension_numbers<[1], [0], [0], [1], [0, 0, 1, 1], [], []>} : vector<64x128xbf16>, vector<128x384xbf16>, vector<64x384xf32> -> vector<64x384xf32>
    %6 = arith.truncf %5 : vector<64x384xf32> to vector<64x384xbf16>
    %7 = vector.shape_cast %6 : vector<64x384xbf16> to vector<8x8x384xbf16>
    %8 = vector.extract_strided_slice %7 {offsets = [0, 0, 0], sizes = [8, 8, 8], strides = [1, 1, 1]} : vector<8x8x384xbf16> to vector<8x8x8xbf16>
    %9 = vector.extract_strided_slice %7 {offsets = [0, 0, 128], sizes = [8, 8, 8], strides = [1, 1, 1]} : vector<8x8x384xbf16> to vector<8x8x8xbf16>
    %10 = vector.extract_strided_slice %7 {offsets = [0, 0, 256], sizes = [8, 8, 8], strides = [1, 1, 1]} : vector<8x8x384xbf16> to vector<8x8x8xbf16>
    "tpu.trace_start"() <{level = 10 : i32, message = "bnd,bmd->bnm"}> : () -> ()
    %cst_5 = arith.constant dense<0.000000e+00> : vector<8x8x8xf32>
    %11 = tpu.matmul %8, %9, %cst_5 {dimension_numbers = #tpu.dot_dimension_numbers<[2], [2], [1], [1], [0, 0, 0, 1, 1, 1], [0], [0]>} : vector<8x8x8xbf16>, vector<8x8x8xbf16>, vector<8x8x8xf32> -> vector<8x8x8xf32>
    "tpu.trace_stop"() : () -> ()
    %cst_6 = arith.constant dense<0xFF800000> : vector<8x8xf32>
    %12 = vector.multi_reduction <maximumf>, %11, %cst_6 [2] : vector<8x8x8xf32> to vector<8x8xf32>
    %13 = vector.shape_cast %12 : vector<8x8xf32> to vector<8x8x1xf32>
    %14 = vector.broadcast %13 : vector<8x8x1xf32> to vector<8x8x8xf32>
    %15 = arith.subf %11, %14 : vector<8x8x8xf32>
    %16 = math.exp %15 : vector<8x8x8xf32>
    %cst_7 = arith.constant dense<0.000000e+00> : vector<8x8xf32>
    %17 = vector.multi_reduction <add>, %16, %cst_7 [2] : vector<8x8x8xf32> to vector<8x8xf32>
    %18 = vector.shape_cast %17 : vector<8x8xf32> to vector<8x8x1xf32>
    %19 = tpu.reciprocal %18 {approx = true} : vector<8x8x1xf32> -> vector<8x8x1xf32>
    %20 = vector.broadcast %19 : vector<8x8x1xf32> to vector<8x8x8xf32>
    %21 = arith.mulf %16, %20 : vector<8x8x8xf32>
    %22 = arith.truncf %21 : vector<8x8x8xf32> to vector<8x8x8xbf16>
    "tpu.trace_start"() <{level = 10 : i32, message = "bnm,bmd->bnd"}> : () -> ()
    %cst_8 = arith.constant dense<0.000000e+00> : vector<8x8x8xf32>
    %23 = tpu.matmul %22, %10, %cst_8 {dimension_numbers = #tpu.dot_dimension_numbers<[2], [1], [1], [2], [0, 0, 0, 1, 1, 2], [0], [0]>} : vector<8x8x8xbf16>, vector<8x8x8xbf16>, vector<8x8x8xf32> -> vector<8x8x8xf32>
    "tpu.trace_stop"() : () -> ()
    %cst_9 = arith.constant dense<0.000000e+00> : vector<8x8xf32>
    %24 = vector.multi_reduction <add>, %23, %cst_9 [1] : vector<8x8x8xf32> to vector<8x8xf32>
    %25 = vector.shape_cast %23 : vector<8x8x8xf32> to vector<64x8xf32>
    %26 = arith.truncf %25 : vector<64x8xf32> to vector<64x8xbf16>
    %c0_10 = arith.constant 0 : index
    %c0_11 = arith.constant 0 : index
    %27 = vector.load %arg3[%c0_10, %c0_11] : memref<128x128xbf16, #tpu.memory_space<vmem>>, vector<8x128xbf16>
    %cst_12 = arith.constant dense<0.000000e+00> : vector<64x128xf32>
    %28 = tpu.matmul %26, %27, %cst_12 {dimension_numbers = #tpu.dot_dimension_numbers<[1], [0], [0], [1], [0, 0, 1, 1], [], []>} : vector<64x8xbf16>, vector<8x128xbf16>, vector<64x128xf32> -> vector<64x128xf32>
    %29 = vector.extract_strided_slice %7 {offsets = [0, 0, 8], sizes = [8, 8, 8], strides = [1, 1, 1]} : vector<8x8x384xbf16> to vector<8x8x8xbf16>
    %30 = vector.extract_strided_slice %7 {offsets = [0, 0, 136], sizes = [8, 8, 8], strides = [1, 1, 1]} : vector<8x8x384xbf16> to vector<8x8x8xbf16>
    %31 = vector.extract_strided_slice %7 {offsets = [0, 0, 264], sizes = [8, 8, 8], strides = [1, 1, 1]} : vector<8x8x384xbf16> to vector<8x8x8xbf16>
    "tpu.trace_start"() <{level = 10 : i32, message = "bnd,bmd->bnm"}> : () -> ()
    %cst_13 = arith.constant dense<0.000000e+00> : vector<8x8x8xf32>
    %32 = tpu.matmul %29, %30, %cst_13 {dimension_numbers = #tpu.dot_dimension_numbers<[2], [2], [1], [1], [0, 0, 0, 1, 1, 1], [0], [0]>} : vector<8x8x8xbf16>, vector<8x8x8xbf16>, vector<8x8x8xf32> -> vector<8x8x8xf32>
    "tpu.trace_stop"() : () -> ()
    %cst_14 = arith.constant dense<0xFF800000> : vector<8x8xf32>
    %33 = vector.multi_reduction <maximumf>, %32, %cst_14 [2] : vector<8x8x8xf32> to vector<8x8xf32>
    %34 = vector.shape_cast %33 : vector<8x8xf32> to vector<8x8x1xf32>
    %35 = vector.broadcast %34 : vector<8x8x1xf32> to vector<8x8x8xf32>
    %36 = arith.subf %32, %35 : vector<8x8x8xf32>
    %37 = math.exp %36 : vector<8x8x8xf32>
    %cst_15 = arith.constant dense<0.000000e+00> : vector<8x8xf32>
    %38 = vector.multi_reduction <add>, %37, %cst_15 [2] : vector<8x8x8xf32> to vector<8x8xf32>
    %39 = vector.shape_cast %38 : vector<8x8xf32> to vector<8x8x1xf32>
    %40 = tpu.reciprocal %39 {approx = true} : vector<8x8x1xf32> -> vector<8x8x1xf32>
    %41 = vector.broadcast %40 : vector<8x8x1xf32> to vector<8x8x8xf32>
    %42 = arith.mulf %37, %41 : vector<8x8x8xf32>
    %43 = arith.truncf %42 : vector<8x8x8xf32> to vector<8x8x8xbf16>
    "tpu.trace_start"() <{level = 10 : i32, message = "bnm,bmd->bnd"}> : () -> ()
    %cst_16 = arith.constant dense<0.000000e+00> : vector<8x8x8xf32>
    %44 = tpu.matmul %43, %31, %cst_16 {dimension_numbers = #tpu.dot_dimension_numbers<[2], [1], [1], [2], [0, 0, 0, 1, 1, 2], [0], [0]>} : vector<8x8x8xbf16>, vector<8x8x8xbf16>, vector<8x8x8xf32> -> vector<8x8x8xf32>
    "tpu.trace_stop"() : () -> ()
    %cst_17 = arith.constant dense<0.000000e+00> : vector<8x8xf32>
    %45 = vector.multi_reduction <add>, %44, %cst_17 [1] : vector<8x8x8xf32> to vector<8x8xf32>
    %46 = vector.shape_cast %44 : vector<8x8x8xf32> to vector<64x8xf32>
    %47 = arith.truncf %46 : vector<64x8xf32> to vector<64x8xbf16>
    %c8 = arith.constant 8 : index
    %c0_18 = arith.constant 0 : index
    %48 = vector.load %arg3[%c8, %c0_18] : memref<128x128xbf16, #tpu.memory_space<vmem>>, vector<8x128xbf16>
    %cst_19 = arith.constant dense<0.000000e+00> : vector<64x128xf32>
    %49 = tpu.matmul %47, %48, %cst_19 {dimension_numbers = #tpu.dot_dimension_numbers<[1], [0], [0], [1], [0, 0, 1, 1], [], []>} : vector<64x8xbf16>, vector<8x128xbf16>, vector<64x128xf32> -> vector<64x128xf32>
    %50 = arith.addf %28, %49 : vector<64x128xf32>
    %51 = vector.extract_strided_slice %7 {offsets = [0, 0, 16], sizes = [8, 8, 8], strides = [1, 1, 1]} : vector<8x8x384xbf16> to vector<8x8x8xbf16>
    %52 = vector.extract_strided_slice %7 {offsets = [0, 0, 144], sizes = [8, 8, 8], strides = [1, 1, 1]} : vector<8x8x384xbf16> to vector<8x8x8xbf16>
    %53 = vector.extract_strided_slice %7 {offsets = [0, 0, 272], sizes = [8, 8, 8], strides = [1, 1, 1]} : vector<8x8x384xbf16> to vector<8x8x8xbf16>
    "tpu.trace_start"() <{level = 10 : i32, message = "bnd,bmd->bnm"}> : () -> ()
    %cst_20 = arith.constant dense<0.000000e+00> : vector<8x8x8xf32>
    %54 = tpu.matmul %51, %52, %cst_20 {dimension_numbers = #tpu.dot_dimension_numbers<[2], [2], [1], [1], [0, 0, 0, 1, 1, 1], [0], [0]>} : vector<8x8x8xbf16>, vector<8x8x8xbf16>, vector<8x8x8xf32> -> vector<8x8x8xf32>
    "tpu.trace_stop"() : () -> ()
    %cst_21 = arith.constant dense<0xFF800000> : vector<8x8xf32>
    %55 = vector.multi_reduction <maximumf>, %54, %cst_21 [2] : vector<8x8x8xf32> to vector<8x8xf32>
    %56 = vector.shape_cast %55 : vector<8x8xf32> to vector<8x8x1xf32>
    %57 = vector.broadcast %56 : vector<8x8x1xf32> to vector<8x8x8xf32>
    %58 = arith.subf %54, %57 : vector<8x8x8xf32>
    %59 = math.exp %58 : vector<8x8x8xf32>
    %cst_22 = arith.constant dense<0.000000e+00> : vector<8x8xf32>
    %60 = vector.multi_reduction <add>, %59, %cst_22 [2] : vector<8x8x8xf32> to vector<8x8xf32>
    %61 = vector.shape_cast %60 : vector<8x8xf32> to vector<8x8x1xf32>
    %62 = tpu.reciprocal %61 {approx = true} : vector<8x8x1xf32> -> vector<8x8x1xf32>
    %63 = vector.broadcast %62 : vector<8x8x1xf32> to vector<8x8x8xf32>
    %64 = arith.mulf %59, %63 : vector<8x8x8xf32>
    %65 = arith.truncf %64 : vector<8x8x8xf32> to vector<8x8x8xbf16>
    "tpu.trace_start"() <{level = 10 : i32, message = "bnm,bmd->bnd"}> : () -> ()
    %cst_23 = arith.constant dense<0.000000e+00> : vector<8x8x8xf32>
    %66 = tpu.matmul %65, %53, %cst_23 {dimension_numbers = #tpu.dot_dimension_numbers<[2], [1], [1], [2], [0, 0, 0, 1, 1, 2], [0], [0]>} : vector<8x8x8xbf16>, vector<8x8x8xbf16>, vector<8x8x8xf32> -> vector<8x8x8xf32>
    "tpu.trace_stop"() : () -> ()
    %cst_24 = arith.constant dense<0.000000e+00> : vector<8x8xf32>
    %67 = vector.multi_reduction <add>, %66, %cst_24 [1] : vector<8x8x8xf32> to vector<8x8xf32>
    %68 = vector.shape_cast %66 : vector<8x8x8xf32> to vector<64x8xf32>
    %69 = arith.truncf %68 : vector<64x8xf32> to vector<64x8xbf16>
    %c16 = arith.constant 16 : index
    %c0_25 = arith.constant 0 : index
    %70 = vector.load %arg3[%c16, %c0_25] : memref<128x128xbf16, #tpu.memory_space<vmem>>, vector<8x128xbf16>
    %cst_26 = arith.constant dense<0.000000e+00> : vector<64x128xf32>
    %71 = tpu.matmul %69, %70, %cst_26 {dimension_numbers = #tpu.dot_dimension_numbers<[1], [0], [0], [1], [0, 0, 1, 1], [], []>} : vector<64x8xbf16>, vector<8x128xbf16>, vector<64x128xf32> -> vector<64x128xf32>
    %72 = arith.addf %50, %71 : vector<64x128xf32>
    %73 = vector.extract_strided_slice %7 {offsets = [0, 0, 24], sizes = [8, 8, 8], strides = [1, 1, 1]} : vector<8x8x384xbf16> to vector<8x8x8xbf16>
    %74 = vector.extract_strided_slice %7 {offsets = [0, 0, 152], sizes = [8, 8, 8], strides = [1, 1, 1]} : vector<8x8x384xbf16> to vector<8x8x8xbf16>
    %75 = vector.extract_strided_slice %7 {offsets = [0, 0, 280], sizes = [8, 8, 8], strides = [1, 1, 1]} : vector<8x8x384xbf16> to vector<8x8x8xbf16>
    "tpu.trace_start"() <{level = 10 : i32, message = "bnd,bmd->bnm"}> : () -> ()
    %cst_27 = arith.constant dense<0.000000e+00> : vector<8x8x8xf32>
    %76 = tpu.matmul %73, %74, %cst_27 {dimension_numbers = #tpu.dot_dimension_numbers<[2], [2], [1], [1], [0, 0, 0, 1, 1, 1], [0], [0]>} : vector<8x8x8xbf16>, vector<8x8x8xbf16>, vector<8x8x8xf32> -> vector<8x8x8xf32>
    "tpu.trace_stop"() : () -> ()
    %cst_28 = arith.constant dense<0xFF800000> : vector<8x8xf32>
    %77 = vector.multi_reduction <maximumf>, %76, %cst_28 [2] : vector<8x8x8xf32> to vector<8x8xf32>
    %78 = vector.shape_cast %77 : vector<8x8xf32> to vector<8x8x1xf32>
    %79 = vector.broadcast %78 : vector<8x8x1xf32> to vector<8x8x8xf32>
    %80 = arith.subf %76, %79 : vector<8x8x8xf32>
    %81 = math.exp %80 : vector<8x8x8xf32>
    %cst_29 = arith.constant dense<0.000000e+00> : vector<8x8xf32>
    %82 = vector.multi_reduction <add>, %81, %cst_29 [2] : vector<8x8x8xf32> to vector<8x8xf32>
    %83 = vector.shape_cast %82 : vector<8x8xf32> to vector<8x8x1xf32>
    %84 = tpu.reciprocal %83 {approx = true} : vector<8x8x1xf32> -> vector<8x8x1xf32>
    %85 = vector.broadcast %84 : vector<8x8x1xf32> to vector<8x8x8xf32>
    %86 = arith.mulf %81, %85 : vector<8x8x8xf32>
    %87 = arith.truncf %86 : vector<8x8x8xf32> to vector<8x8x8xbf16>
    "tpu.trace_start"() <{level = 10 : i32, message = "bnm,bmd->bnd"}> : () -> ()
    %cst_30 = arith.constant dense<0.000000e+00> : vector<8x8x8xf32>
    %88 = tpu.matmul %87, %75, %cst_30 {dimension_numbers = #tpu.dot_dimension_numbers<[2], [1], [1], [2], [0, 0, 0, 1, 1, 2], [0], [0]>} : vector<8x8x8xbf16>, vector<8x8x8xbf16>, vector<8x8x8xf32> -> vector<8x8x8xf32>
    "tpu.trace_stop"() : () -> ()
    %cst_31 = arith.constant dense<0.000000e+00> : vector<8x8xf32>
    %89 = vector.multi_reduction <add>, %88, %cst_31 [1] : vector<8x8x8xf32> to vector<8x8xf32>
    %90 = vector.shape_cast %88 : vector<8x8x8xf32> to vector<64x8xf32>
    %91 = arith.truncf %90 : vector<64x8xf32> to vector<64x8xbf16>
    %c24 = arith.constant 24 : index
    %c0_32 = arith.constant 0 : index
    %92 = vector.load %arg3[%c24, %c0_32] : memref<128x128xbf16, #tpu.memory_space<vmem>>, vector<8x128xbf16>
    %cst_33 = arith.constant dense<0.000000e+00> : vector<64x128xf32>
    %93 = tpu.matmul %91, %92, %cst_33 {dimension_numbers = #tpu.dot_dimension_numbers<[1], [0], [0], [1], [0, 0, 1, 1], [], []>} : vector<64x8xbf16>, vector<8x128xbf16>, vector<64x128xf32> -> vector<64x128xf32>
    %94 = arith.addf %72, %93 : vector<64x128xf32>
    %c0_34 = arith.constant 0 : index
    %c0_35 = arith.constant 0 : index
    %95 = vector.load %arg4[%c0_34, %c0_35] : memref<1x128xf32, #tpu.memory_space<vmem>>, vector<1x128xf32>
    %96 = vector.broadcast %95 : vector<1x128xf32> to vector<64x128xf32>
    %97 = arith.addf %94, %96 : vector<64x128xf32>
    %cst_36 = arith.constant 0.000000e+00 : f32
    %98 = vector.broadcast %cst_36 : f32 to vector<64x128xf32>
    %99 = arith.maximumf %97, %98 : vector<64x128xf32>
    %100 = vector.shape_cast %99 : vector<64x128xf32> to vector<8x8x128xf32>
    %cst_37 = arith.constant dense<0.000000e+00> : vector<8x128xf32>
    %101 = vector.multi_reduction <add>, %100, %cst_37 [1] : vector<8x8x128xf32> to vector<8x128xf32>
    %cst_38 = arith.constant 0.000000e+00 : f32
    %102 = vector.broadcast %cst_38 : f32 to vector<8x96xf32>
    %103 = tpu.concatenate %24, %45, %67, %89, %102 in 1 : vector<8x8xf32>, vector<8x8xf32>, vector<8x8xf32>, vector<8x8xf32>, vector<8x96xf32> -> vector<8x128xf32>
    %104 = arith.addf %101, %103 : vector<8x128xf32>
    %105 = arith.addf %104, %2 : vector<8x128xf32>
    %cst_39 = arith.constant 1.250000e-01 : f32
    %106 = vector.broadcast %cst_39 : f32 to vector<8x128xf32>
    %107 = arith.mulf %105, %106 : vector<8x128xf32>
    %c0_40 = arith.constant 0 : index
    %c0_41 = arith.constant 0 : index
    %108 = vector.load %arg5[%c0_40, %c0_41] : memref<8x128xf32, #tpu.memory_space<vmem>>, vector<8x128xf32>
    tpu.vector_store %arg5[%c0_40, %c0_41], %107 {strides = array<i32>} : memref<8x128xf32, #tpu.memory_space<vmem>>, vector<8x128xf32>,
    return
  }
  func.func @transform_0(%arg0: i32) -> (i32, i32, i32) {
    %c0_i32 = arith.constant 0 : i32
    %c0_i32_0 = arith.constant 0 : i32
    %c0_i32_1 = arith.constant 0 : i32
    return %arg0, %c0_i32, %c0_i32_0 : i32, i32, i32
  }
  func.func @transform_1(%arg0: i32) -> (i32, i32) {
    %c0_i32 = arith.constant 0 : i32
    %c0_i32_0 = arith.constant 0 : i32
    %c0_i32_1 = arith.constant 0 : i32
    return %c0_i32, %c0_i32_0 : i32, i32
  }
  func.func @transform_2(%arg0: i32) -> (i32, i32) {
    %c0_i32 = arith.constant 0 : i32
    %c0_i32_0 = arith.constant 0 : i32
    %c0_i32_1 = arith.constant 0 : i32
    return %c0_i32, %c0_i32_0 : i32, i32
  }
  func.func @transform_3(%arg0: i32) -> (i32, i32) {
    %c0_i32 = arith.constant 0 : i32
    %c0_i32_0 = arith.constant 0 : i32
    %c0_i32_1 = arith.constant 0 : i32
    return %c0_i32, %c0_i32_0 : i32, i32
  }
  func.func @transform_4(%arg0: i32) -> (i32, i32) {
    %c0_i32 = arith.constant 0 : i32
    %c0_i32_0 = arith.constant 0 : i32
    return %arg0, %c0_i32 : i32, i32
  }
}

</mosaic_0001>

<llo_original>
// kernel: tpu_custom_call.1
$region0: #{tpu_custom_call.1}
  #allocation0 [shape = 'u32[]', space=smem, size = 0x4, offset = 0x4, fixed_abs, tag = 'smem constant byte address 0x4 - core index']
  #allocation1 [shape = 'u32[144,128]{1,0:T(1,128)}', space=vmem, size = 0x12000, scoped, tag = 'internal scratch']
  %s0 = inlined_call_operand.hbm [shape: bf16[8,8,128], index: 0, kind: input, shape index: {}]
  %s1 = inlined_call_operand.hbm [shape: bf16[128,384], index: 1, kind: input, shape index: {}]
  %s2 = inlined_call_operand.hbm [shape: bf16[128,128], index: 2, kind: input, shape index: {}]
  %s3 = inlined_call_operand.vmem [shape: f32[1,128], index: 3, kind: input, shape index: {}]
  %s4 = inlined_call_operand.hbm [shape: f32[8,128], index: 4, kind: output, shape index: {}]
  %s5 = sld [smem:[#allocation0]]
  $region38: #{tpu_custom_call.1} parent=0
    _
  %s7 = ssub.s32 1, %s5
  %s8 = scalar_select 0, %s7, %s5
  $region1: #{tpu_custom_call.1} parent=0
    #allocation2 [shape = 'u8[16384]{0}', space=vmem, size = 0x4000, scoped, tag = 'input window, operand 0, single buffered']
    #allocation3 [shape = 's32[1]{0}', space=sflag, size = 0x4, scoped, tag = 'scoped memory for tpu_custom_call.1']
    #allocation4 [shape = 's32[1]{0}', space=sflag, size = 0x4, scoped, tag = 'scoped memory for tpu_custom_call.1']
    #allocation5 [shape = 'u8[98304]{0}', space=vmem, size = 0x18000, scoped, tag = 'input window, operand 1, single buffered']
    #allocation6 [shape = 's32[1]{0}', space=sflag, size = 0x4, scoped, tag = 'scoped memory for tpu_custom_call.1']
    #allocation7 [shape = 'u8[32768]{0}', space=vmem, size = 0x8000, scoped, tag = 'input window, operand 2, single buffered']
    #allocation8 [shape = 'u8[4096]{0}', space=vmem, size = 0x1000, scoped, tag = 'output window, operand 0, single buffered']
    %9 = vsyncpa [#allocation3], 0
    %10 = vsyncpa [#allocation6], 0
    %11 = vsyncpa [#allocation4], 0
    // Predicated region
    $region2: #{tpu_custom_call.1} parent=1 // pred_check
      _
    $region3: #{tpu_custom_call.1} parent=1 // pred_check_branch
      %13 = sbr.rel (0) target = $region5
    $region4: #{tpu_custom_call.1} parent=1 // pred_region
      %s15 = ssub.s32 512, 512
      %16 = vsyncadd [#allocation3], %s15
      %s17 = sshll.u32 [#allocation2], 4
      %s18 = int_to_ptr.vmem [resolvable:$true] %s17
      %23 = dma.hbm_to_vmem [thread:$0]  %s0, 512, %s18, [#allocation3], 64, 64, 4
    $region5: #{tpu_custom_call.1} parent=1 // pred_fallthru
      _
    // Predicated region
    $region6: #{tpu_custom_call.1} parent=1 // pred_check
      _
    $region7: #{tpu_custom_call.1} parent=1 // pred_check_branch
      %25 = sbr.rel (0) target = $region9
    $region8: #{tpu_custom_call.1} parent=1 // pred_region
      %s27 = ssub.s32 3072, 3072
      %28 = vsyncadd [#allocation6], %s27
      %s29 = sshll.u32 [#allocation5], 4
      %s30 = int_to_ptr.vmem [resolvable:$true] %s29
      %35 = dma.hbm_to_vmem [thread:$0]  %s1, 3072, %s30, [#allocation6], 192, 192, 12
    $region9: #{tpu_custom_call.1} parent=1 // pred_fallthru
      _
    // Predicated region
    $region10: #{tpu_custom_call.1} parent=1 // pred_check
      _
    $region11: #{tpu_custom_call.1} parent=1 // pred_check_branch
      %37 = sbr.rel (0) target = $region13
    $region12: #{tpu_custom_call.1} parent=1 // pred_region
      %s39 = ssub.s32 1024, 1024
      %40 = vsyncadd [#allocation6], %s39
      %s41 = sshll.u32 [#allocation7], 4
      %s42 = int_to_ptr.vmem [resolvable:$true] %s41
      %47 = dma.hbm_to_vmem [thread:$0]  %s2, 1024, %s42, [#allocation6], 64, 64, 4
    $region13: #{tpu_custom_call.1} parent=1 // pred_fallthru
      _
    // Predicated region
    $region14: #{tpu_custom_call.1} parent=1 // pred_check
      _
    $region15: #{tpu_custom_call.1} parent=1 // pred_check_branch
      %49 = sbr.rel (0) target = $region17
    $region16: #{tpu_custom_call.1} parent=1 // pred_region
      _
    $region17: #{tpu_custom_call.1} parent=1 // pred_fallthru
      _
    // Predicated region
    $region18: #{tpu_custom_call.1} parent=1 // pred_check
      _
    $region19: #{tpu_custom_call.1} parent=1 // pred_check_branch
      %51 = sbr.rel (0) target = $region21
    $region20: #{tpu_custom_call.1} parent=1 // pred_region
      %52 = dma.done [#allocation3], 512
    $region21: #{tpu_custom_call.1} parent=1 // pred_fallthru
      _
    // Predicated region
    $region22: #{tpu_custom_call.1} parent=1 // pred_check
      _
    $region23: #{tpu_custom_call.1} parent=1 // pred_check_branch
      %54 = sbr.rel (0) target = $region25
    $region24: #{tpu_custom_call.1} parent=1 // pred_region
      %55 = dma.done [#allocation6], 3072
    $region25: #{tpu_custom_call.1} parent=1 // pred_fallthru
      _
    // Predicated region
    $region26: #{tpu_custom_call.1} parent=1 // pred_check
      _
    $region27: #{tpu_custom_call.1} parent=1 // pred_check_branch
      %57 = sbr.rel (0) target = $region29
    $region28: #{tpu_custom_call.1} parent=1 // pred_region
      %58 = dma.done [#allocation6], 1024
    $region29: #{tpu_custom_call.1} parent=1 // pred_fallthru
      _
    %v60 = vld [vmem:[#allocation2] sm:$0xf]
    %v61 = vld [vmem:[#allocation2 + $0x4] sm:$0xf]
    %v62 = vld [vmem:[#allocation2 + $0x8] sm:$0xf]
    %v63 = vld [vmem:[#allocation2 + $0xc] sm:$0xf]
    %v64 = vld [vmem:[#allocation2 + $0x10] sm:$0xf]
    %v65 = vld [vmem:[#allocation2 + $0x14] sm:$0xf]
    %v66 = vld [vmem:[#allocation2 + $0x18] sm:$0xf]
    %v67 = vld [vmem:[#allocation2 + $0x1c] sm:$0xf]
    %v68 = vunpack.c.l.bf16 %v60
    %v69 = vunpack.c.l.bf16 %v61
    %v70 = vunpack.c.l.bf16 %v62
    %v71 = vunpack.c.l.bf16 %v63
    %v72 = vunpack.c.l.bf16 %v64
    %v73 = vunpack.c.l.bf16 %v65
    %v74 = vunpack.c.l.bf16 %v66
    %v75 = vunpack.c.l.bf16 %v67
    %v76 = vrot.slane %v68, 4
    %v77 = vadd.f32 %v68, %v76
    %v78 = vrot.slane %v77, 2
    %v79 = vadd.f32 %v77, %v78
    %v80 = vrot.slane %v79, 1
    %v81 = vadd.f32 %v79, %v80
    %v82 = vrot.slane %v69, 4
    %v83 = vadd.f32 %v69, %v82
    %v84 = vrot.slane %v83, 2
    %v85 = vadd.f32 %v83, %v84
    %v86 = vrot.slane %v85, 1
    %v87 = vadd.f32 %v85, %v86
    %v88 = vrot.slane %v70, 4
    %v89 = vadd.f32 %v70, %v88
    %v90 = vrot.slane %v89, 2
    %v91 = vadd.f32 %v89, %v90
    %v92 = vrot.slane %v91, 1
    %v93 = vadd.f32 %v91, %v92
    %v94 = vrot.slane %v71, 4
    %v95 = vadd.f32 %v71, %v94
    %v96 = vrot.slane %v95, 2
    %v97 = vadd.f32 %v95, %v96
    %v98 = vrot.slane %v97, 1
    %v99 = vadd.f32 %v97, %v98
    %v100 = vrot.slane %v72, 4
    %v101 = vadd.f32 %v72, %v100
    %v102 = vrot.slane %v101, 2
    %v103 = vadd.f32 %v101, %v102
    %v104 = vrot.slane %v103, 1
    %v105 = vadd.f32 %v103, %v104
    %v106 = vrot.slane %v73, 4
    %v107 = vadd.f32 %v73, %v106
    %v108 = vrot.slane %v107, 2
    %v109 = vadd.f32 %v107, %v108
    %v110 = vrot.slane %v109, 1
    %v111 = vadd.f32 %v109, %v110
    %v112 = vrot.slane %v74, 4
    %v113 = vadd.f32 %v74, %v112
    %v114 = vrot.slane %v113, 2
    %v115 = vadd.f32 %v113, %v114
    %v116 = vrot.slane %v115, 1
    %v117 = vadd.f32 %v115, %v116
    %v118 = vrot.slane %v75, 4
    %v119 = vadd.f32 %v75, %v118
    %v120 = vrot.slane %v119, 2
    %v121 = vadd.f32 %v119, %v120
    %v122 = vrot.slane %v121, 1
    %v123 = vadd.f32 %v121, %v122
    %v124 = vld [vmem:[#allocation5] sm:$0xff]
    %v125 = vld [vmem:[#allocation5 + $0x8] sm:$0xf]
    %v126 = vld [vmem:[#allocation5 + $0xc] sm:$0xff]
    %v127 = vld [vmem:[#allocation5 + $0x14] sm:$0xf]
    %v128 = vld [vmem:[#allocation5 + $0x18] sm:$0xff]
    %v129 = vld [vmem:[#allocation5 + $0x20] sm:$0xf]
    %v130 = vld [vmem:[#allocation5 + $0x24] sm:$0xff]
    %v131 = vld [vmem:[#allocation5 + $0x2c] sm:$0xf]
    %v132 = vld [vmem:[#allocation5 + $0x30] sm:$0xff]
    %v133 = vld [vmem:[#allocation5 + $0x38] sm:$0xf]
    %v134 = vld [vmem:[#allocation5 + $0x3c] sm:$0xff]
    %v135 = vld [vmem:[#allocation5 + $0x44] sm:$0xf]
    %v136 = vld [vmem:[#allocation5 + $0x48] sm:$0xff]
    %v137 = vld [vmem:[#allocation5 + $0x50] sm:$0xf]
    %v138 = vld [vmem:[#allocation5 + $0x54] sm:$0xff]
    %v139 = vld [vmem:[#allocation5 + $0x5c] sm:$0xf]
    %v140 = vld [vmem:[#allocation5 + $0x60] sm:$0xff]
    %v141 = vld [vmem:[#allocation5 + $0x68] sm:$0xf]
    %v142 = vld [vmem:[#allocation5 + $0x6c] sm:$0xff]
    %v143 = vld [vmem:[#allocation5 + $0x74] sm:$0xf]
    %v144 = vld [vmem:[#allocation5 + $0x78] sm:$0xff]
    %v145 = vld [vmem:[#allocation5 + $0x80] sm:$0xf]
    %v146 = vld [vmem:[#allocation5 + $0x84] sm:$0xff]
    %v147 = vld [vmem:[#allocation5 + $0x8c] sm:$0xf]
    %v148 = vld [vmem:[#allocation5 + $0x90] sm:$0xff]
    %v149 = vld [vmem:[#allocation5 + $0x98] sm:$0xf]
    %v150 = vld [vmem:[#allocation5 + $0x9c] sm:$0xff]
    %v151 = vld [vmem:[#allocation5 + $0xa4] sm:$0xf]
    %v152 = vld [vmem:[#allocation5 + $0xa8] sm:$0xff]
    %v153 = vld [vmem:[#allocation5 + $0xb0] sm:$0xf]
    %v154 = vld [vmem:[#allocation5 + $0xb4] sm:$0xff]
    %v155 = vld [vmem:[#allocation5 + $0xbc] sm:$0xf]
    %v164 = vunpack.c.l.b16 %v60
    %v165 = vunpack.c.l.b16 %v61
    %v166 = vunpack.c.l.b16 %v62
    %v167 = vunpack.c.l.b16 %v63
    %v168 = vunpack.c.l.b16 %v64
    %v169 = vunpack.c.l.b16 %v65
    %v170 = vunpack.c.l.b16 %v66
    %v171 = vunpack.c.l.b16 %v67
    %v172 = vpack.c.b16 %v165, %v164
    %v173 = vpack.c.b16 %v167, %v166
    %v174 = vpack.c.b16 %v169, %v168
    %v175 = vpack.c.b16 %v171, %v170
    %v212 = vunpack.c.l.b16 %v124
    %v213 = vunpack.c.h.b16 %v124
    %v214 = vunpack.c.l.b16 %v125
    %v215 = vunpack.c.l.b16 %v126
    %v216 = vunpack.c.h.b16 %v126
    %v217 = vunpack.c.l.b16 %v127
    %v218 = vunpack.c.l.b16 %v128
    %v219 = vunpack.c.h.b16 %v128
    %v220 = vunpack.c.l.b16 %v129
    %v221 = vunpack.c.l.b16 %v130
    %v222 = vunpack.c.h.b16 %v130
    %v223 = vunpack.c.l.b16 %v131
    %v224 = vunpack.c.l.b16 %v132
    %v225 = vunpack.c.h.b16 %v132
    %v226 = vunpack.c.l.b16 %v133
    %v227 = vunpack.c.l.b16 %v134
    %v228 = vunpack.c.h.b16 %v134
    %v229 = vunpack.c.l.b16 %v135
    %v230 = vunpack.c.l.b16 %v136
    %v231 = vunpack.c.h.b16 %v136
    %v232 = vunpack.c.l.b16 %v137
    %v233 = vunpack.c.l.b16 %v138
    %v234 = vunpack.c.h.b16 %v138
    %v235 = vunpack.c.l.b16 %v139
    %v236 = vunpack.c.l.b16 %v140
    %v237 = vunpack.c.h.b16 %v140
    %v238 = vunpack.c.l.b16 %v141
    %v239 = vunpack.c.l.b16 %v142
    %v240 = vunpack.c.h.b16 %v142
    %v241 = vunpack.c.l.b16 %v143
    %v242 = vunpack.c.l.b16 %v144
    %v243 = vunpack.c.h.b16 %v144
    %v244 = vunpack.c.l.b16 %v145
    %v245 = vunpack.c.l.b16 %v146
    %v246 = vunpack.c.h.b16 %v146
    %v247 = vunpack.c.l.b16 %v147
    %v248 = vunpack.c.l.b16 %v148
    %v249 = vunpack.c.h.b16 %v148
    %v250 = vunpack.c.l.b16 %v149
    %v251 = vunpack.c.l.b16 %v150
    %v252 = vunpack.c.h.b16 %v150
    %v253 = vunpack.c.l.b16 %v151
    %v254 = vunpack.c.l.b16 %v152
    %v255 = vunpack.c.h.b16 %v152
    %v256 = vunpack.c.l.b16 %v153
    %v257 = vunpack.c.l.b16 %v154
    %v258 = vunpack.c.h.b16 %v154
    %v259 = vunpack.c.l.b16 %v155
    %v260 = vpack.c.b16 %v215, %v212
    %v261 = vpack.c.b16 %v216, %v213
    %v262 = vpack.c.b16 %v217, %v214
    %v263 = vpack.c.b16 %v221, %v218
    %v264 = vpack.c.b16 %v222, %v219
    %v265 = vpack.c.b16 %v223, %v220
    %v266 = vpack.c.b16 %v227, %v224
    %v267 = vpack.c.b16 %v228, %v225
    %v268 = vpack.c.b16 %v229, %v226
    %v269 = vpack.c.b16 %v233, %v230
    %v270 = vpack.c.b16 %v234, %v231
    %v271 = vpack.c.b16 %v235, %v232
    %v272 = vpack.c.b16 %v239, %v236
    %v273 = vpack.c.b16 %v240, %v237
    %v274 = vpack.c.b16 %v241, %v238
    %v275 = vpack.c.b16 %v245, %v242
    %v276 = vpack.c.b16 %v246, %v243
    %v277 = vpack.c.b16 %v247, %v244
    %v278 = vpack.c.b16 %v251, %v248
    %v279 = vpack.c.b16 %v252, %v249
    %v280 = vpack.c.b16 %v253, %v250
    %v281 = vpack.c.b16 %v257, %v254
    %v282 = vpack.c.b16 %v258, %v255
    %v283 = vpack.c.b16 %v259, %v256
    %308 = vmatprep.subr.bf16.mxu0 %v261
    %309 = vmatpush1.bf16.msra.mxu0 %v260
    %310 = vmatprep.subr.bf16.mxu0 %v264
    %311 = vmatpush1.bf16.msra.mxu0 %v263
    %312 = vmatprep.subr.bf16.mxu0 %v267
    %313 = vmatpush1.bf16.msra.mxu0 %v266
    %314 = vmatprep.subr.bf16.mxu0 %v270
    %315 = vmatpush1.bf16.msra.mxu0 %v269
    %316 = vmatprep.subr.bf16.mxu0 %v273
    %317 = vmatpush1.bf16.msra.mxu0 %v272
    %318 = vmatprep.subr.bf16.mxu0 %v276
    %319 = vmatpush1.bf16.msra.mxu0 %v275
    %320 = vmatprep.subr.bf16.mxu0 %v279
    %321 = vmatpush1.bf16.msra.mxu0 %v278
    %322 = vmatprep.subr.bf16.mxu0 %v282
    %323 = vmatpush1.bf16.msra.mxu0 %v281
    %324 = vmatprep.subr.bf16.mxu0 0
    %325 = vmatpush1.bf16.msra.mxu0 0
    %326 = vmatprep.subr.bf16.mxu0 0
    %327 = vmatpush1.bf16.msra.mxu0 0
    %328 = vmatprep.subr.bf16.mxu0 0
    %329 = vmatpush1.bf16.msra.mxu0 0
    %330 = vmatprep.subr.bf16.mxu0 0
    %331 = vmatpush1.bf16.msra.mxu0 0
    %332 = vmatprep.subr.bf16.mxu0 0
    %333 = vmatpush1.bf16.msra.mxu0 0
    %334 = vmatprep.subr.bf16.mxu0 0
    %335 = vmatpush1.bf16.msra.mxu0 0
    %336 = vmatprep.subr.bf16.mxu0 0
    %337 = vmatpush1.bf16.msra.mxu0 0
    %338 = vmatprep.subr.bf16.mxu0 0
    %339 = vmatpush1.bf16.msra.mxu0 0
    %340 = vmatprep.mubr.bf16.mxu0 0
    %341 = vmatmul.mubr.bf16.gmra.mrb[0].mxu0 %v172
    %v342 = vpop.f32.mrb[0].mxu0
    %v343 = vadd.f32 0.0, %v342
    %v344 = vpop.f32.mrb[0].mxu0
    %v345 = vadd.f32 0.0, %v344
    %v346 = vpop.f32.mrb[0].mxu0
    %v347 = vadd.f32 0.0, %v346
    %v348 = vpop.f32.mrb[0].mxu0
    %v349 = vadd.f32 0.0, %v348
    %350 = vmatprep.mubr.bf16.mxu0 0
    %351 = vmatmul.mubr.bf16.gmra.mrb[0].mxu0 %v173
    %v352 = vpop.f32.mrb[0].mxu0
    %v353 = vadd.f32 0.0, %v352
    %v354 = vpop.f32.mrb[0].mxu0
    %v355 = vadd.f32 0.0, %v354
    %v356 = vpop.f32.mrb[0].mxu0
    %v357 = vadd.f32 0.0, %v356
    %v358 = vpop.f32.mrb[0].mxu0
    %v359 = vadd.f32 0.0, %v358
    %360 = vmatprep.mubr.bf16.mxu0 0
    %361 = vmatmul.mubr.bf16.gmra.mrb[0].mxu0 %v174
    %v362 = vpop.f32.mrb[0].mxu0
    %v363 = vadd.f32 0.0, %v362
    %v364 = vpop.f32.mrb[0].mxu0
    %v365 = vadd.f32 0.0, %v364
    %v366 = vpop.f32.mrb[0].mxu0
    %v367 = vadd.f32 0.0, %v366
    %v368 = vpop.f32.mrb[0].mxu0
    %v369 = vadd.f32 0.0, %v368
    %370 = vmatprep.mubr.bf16.mxu0 0
    %371 = vmatmul.mubr.bf16.gmra.mrb[0].mxu0 %v175
    %v372 = vpop.f32.mrb[0].mxu0
    %v373 = vadd.f32 0.0, %v372
    %v374 = vpop.f32.mrb[0].mxu0
    %v375 = vadd.f32 0.0, %v374
    %v376 = vpop.f32.mrb[0].mxu0
    %v377 = vadd.f32 0.0, %v376
    %v378 = vpop.f32.mrb[0].mxu0
    %v379 = vadd.f32 0.0, %v378
    %380 = vdwg.mxu0
    %381 = vmatprep.subr.bf16.mxu0 0
    %382 = vmatpush1.bf16.msra.mxu0 %v262
    %383 = vmatprep.subr.bf16.mxu0 0
    %384 = vmatpush1.bf16.msra.mxu0 %v265
    %385 = vmatprep.subr.bf16.mxu0 0
    %386 = vmatpush1.bf16.msra.mxu0 %v268
    %387 = vmatprep.subr.bf16.mxu0 0
    %388 = vmatpush1.bf16.msra.mxu0 %v271
    %389 = vmatprep.subr.bf16.mxu0 0
    %390 = vmatpush1.bf16.msra.mxu0 %v274
    %391 = vmatprep.subr.bf16.mxu0 0
    %392 = vmatpush1.bf16.msra.mxu0 %v277
    %393 = vmatprep.subr.bf16.mxu0 0
    %394 = vmatpush1.bf16.msra.mxu0 %v280
    %395 = vmatprep.subr.bf16.mxu0 0
    %396 = vmatpush1.bf16.msra.mxu0 %v283
    %397 = vmatprep.subr.bf16.mxu0 0
    %398 = vmatpush1.bf16.msra.mxu0 0
    %399 = vmatprep.subr.bf16.mxu0 0
    %400 = vmatpush1.bf16.msra.mxu0 0
    %401 = vmatprep.subr.bf16.mxu0 0
    %402 = vmatpush1.bf16.msra.mxu0 0
    %403 = vmatprep.subr.bf16.mxu0 0
    %404 = vmatpush1.bf16.msra.mxu0 0
    %405 = vmatprep.subr.bf16.mxu0 0
    %406 = vmatpush1.bf16.msra.mxu0 0
    %407 = vmatprep.subr.bf16.mxu0 0
    %408 = vmatpush1.bf16.msra.mxu0 0
    %409 = vmatprep.subr.bf16.mxu0 0
    %410 = vmatpush1.bf16.msra.mxu0 0
    %411 = vmatprep.subr.bf16.mxu0 0
    %412 = vmatpush1.bf16.msra.mxu0 0
    %413 = vmatprep.mubr.bf16.mxu0 0
    %414 = vmatmul.mubr.bf16.gmra.mrb[0].mxu0 %v172
    %v415 = vpop.f32.mrb[0].mxu0
    %v416 = vadd.f32 0.0, %v415
    %v417 = vpop.f32.mrb[0].mxu0
    %v418 = vpop.f32.mrb[0].mxu0
    %v419 = vadd.f32 0.0, %v418
    %v420 = vpop.f32.mrb[0].mxu0
    %421 = vmatprep.mubr.bf16.mxu0 0
    %422 = vmatmul.mubr.bf16.gmra.mrb[0].mxu0 %v173
    %v423 = vpop.f32.mrb[0].mxu0
    %v424 = vadd.f32 0.0, %v423
    %v425 = vpop.f32.mrb[0].mxu0
    %v426 = vpop.f32.mrb[0].mxu0
    %v427 = vadd.f32 0.0, %v426
    %v428 = vpop.f32.mrb[0].mxu0
    %429 = vmatprep.mubr.bf16.mxu0 0
    %430 = vmatmul.mubr.bf16.gmra.mrb[0].mxu0 %v174
    %v431 = vpop.f32.mrb[0].mxu0
    %v432 = vadd.f32 0.0, %v431
    %v433 = vpop.f32.mrb[0].mxu0
    %v434 = vpop.f32.mrb[0].mxu0
    %v435 = vadd.f32 0.0, %v434
    %v436 = vpop.f32.mrb[0].mxu0
    %437 = vmatprep.mubr.bf16.mxu0 0
    %438 = vmatmul.mubr.bf16.gmra.mrb[0].mxu0 %v175
    %v439 = vpop.f32.mrb[0].mxu0
    %v440 = vadd.f32 0.0, %v439
    %v441 = vpop.f32.mrb[0].mxu0
    %v442 = vpop.f32.mrb[0].mxu0
    %v443 = vadd.f32 0.0, %v442
    %v444 = vpop.f32.mrb[0].mxu0
    %445 = vdwg.mxu0
    %v446 = vpack.c.bf16 %v347, %v343
    %v447 = vpack.c.bf16 %v349, %v345
    %v448 = vpack.c.bf16 %v419, %v416
    %v449 = vpack.c.bf16 %v357, %v353
    %v450 = vpack.c.bf16 %v359, %v355
    %v451 = vpack.c.bf16 %v427, %v424
    %v452 = vpack.c.bf16 %v367, %v363
    %v453 = vpack.c.bf16 %v369, %v365
    %v454 = vpack.c.bf16 %v435, %v432
    %v455 = vpack.c.bf16 %v377, %v373
    %v456 = vpack.c.bf16 %v379, %v375
    %v457 = vpack.c.bf16 %v443, %v440
    %v470 = vunpack.c.l.b16 %v446
    %v471 = vunpack.c.l.b16 %v447
    %v472 = vunpack.c.l.b16 %v448
    %v473 = vunpack.c.h.b16 %v446
    %v474 = vunpack.c.h.b16 %v447
    %v475 = vunpack.c.h.b16 %v448
    %v476 = vunpack.c.l.b16 %v449
    %v477 = vunpack.c.l.b16 %v450
    %v478 = vunpack.c.l.b16 %v451
    %v479 = vunpack.c.h.b16 %v449
    %v480 = vunpack.c.h.b16 %v450
    %v481 = vunpack.c.h.b16 %v451
    %v482 = vunpack.c.l.b16 %v452
    %v483 = vunpack.c.l.b16 %v453
    %v484 = vunpack.c.l.b16 %v454
    %v485 = vunpack.c.h.b16 %v452
    %v486 = vunpack.c.h.b16 %v453
    %v487 = vunpack.c.h.b16 %v454
    %v488 = vunpack.c.l.b16 %v455
    %v489 = vunpack.c.l.b16 %v456
    %v490 = vunpack.c.l.b16 %v457
    %v491 = vunpack.c.h.b16 %v455
    %v492 = vunpack.c.h.b16 %v456
    %v493 = vunpack.c.h.b16 %v457
    %v494 = vpack.c.b16 %v471, %v470
    %v495 = vpack.c.b16 %v472, %v472
    %v496 = vpack.c.b16 %v474, %v473
    %v497 = vpack.c.b16 %v475, %v475
    %v498 = vpack.c.b16 %v477, %v476
    %v499 = vpack.c.b16 %v478, %v478
    %v500 = vpack.c.b16 %v480, %v479
    %v501 = vpack.c.b16 %v481, %v481
    %v502 = vpack.c.b16 %v483, %v482
    %v503 = vpack.c.b16 %v484, %v484
    %v504 = vpack.c.b16 %v486, %v485
    %v505 = vpack.c.b16 %v487, %v487
    %v506 = vpack.c.b16 %v489, %v488
    %v507 = vpack.c.b16 %v490, %v490
    %v508 = vpack.c.b16 %v492, %v491
    %v509 = vpack.c.b16 %v493, %v493
    %v510 = vrot.slane %v494, 4
    %vm511 = vcmask 64512
    %v513 = vsel %vm511, %v494, 0
    %v516 = vsel %vm511, %v510, 0
    %518 = vmatprep.subr.bf16.mxu0 0
    %519 = vmatpush1.bf16.xpose.msra.mxu0 %v516
    %520 = vmatprep.subr.bf16.mxu0 0
    %521 = vmatpush1.bf16.xpose.msra.mxu0 0
    %522 = vmatprep.subr.bf16.mxu0 0
    %523 = vmatpush1.bf16.xpose.msra.mxu0 0
    %524 = vmatprep.subr.bf16.mxu0 0
    %525 = vmatpush1.bf16.xpose.msra.mxu0 0
    %526 = vmatprep.subr.bf16.mxu0 0
    %527 = vmatpush1.bf16.xpose.msra.mxu0 0
    %528 = vmatprep.subr.bf16.mxu0 0
    %529 = vmatpush1.bf16.xpose.msra.mxu0 0
    %530 = vmatprep.subr.bf16.mxu0 0
    %531 = vmatpush1.bf16.xpose.msra.mxu0 0
    %532 = vmatprep.subr.bf16.mxu0 0
    %533 = vmatpush1.bf16.xpose.msra.mxu0 0
    %534 = vmatprep.subr.bf16.mxu0 0
    %535 = vmatpush1.bf16.xpose.msra.mxu0 0
    %536 = vmatprep.subr.bf16.mxu0 0
    %537 = vmatpush1.bf16.xpose.msra.mxu0 0
    %538 = vmatprep.subr.bf16.mxu0 0
    %539 = vmatpush1.bf16.xpose.msra.mxu0 0
    %540 = vmatprep.subr.bf16.mxu0 0
    %541 = vmatpush1.bf16.xpose.msra.mxu0 0
    %542 = vmatprep.subr.bf16.mxu0 0
    %543 = vmatpush1.bf16.xpose.msra.mxu0 0
    %544 = vmatprep.subr.bf16.mxu0 0
    %545 = vmatpush1.bf16.xpose.msra.mxu0 0
    %546 = vmatprep.subr.bf16.mxu0 0
    %547 = vmatpush1.bf16.xpose.msra.mxu0 0
    %548 = vmatprep.subr.bf16.mxu0 0
    %549 = vmatpush1.bf16.xpose.msra.mxu0 0
    %550 = vmatprep.mubr.bf16.mxu0 0
    %551 = vmatmul.mubr.bf16.gmra.mrb[0].mxu0 %v513
    %v552 = vpop.f32.mrb[0].mxu0
    %v553 = vadd.f32 0.0, %v552
    %v554 = vpop.f32.mrb[0].mxu0
    %v555 = vpop.f32.mrb[0].mxu0
    %v556 = vpop.f32.mrb[0].mxu0
    %557 = vdwg.mxu0
    %v558 = vrot.slane %v496, 4
    %v560 = vsel %vm511, %v496, 0
    %v563 = vsel %vm511, %v558, 0
    %565 = vmatprep.subr.bf16.mxu0 0
    %566 = vmatpush1.bf16.xpose.msra.mxu0 %v563
    %567 = vmatprep.subr.bf16.mxu0 0
    %568 = vmatpush1.bf16.xpose.msra.mxu0 0
    %569 = vmatprep.subr.bf16.mxu0 0
    %570 = vmatpush1.bf16.xpose.msra.mxu0 0
    %571 = vmatprep.subr.bf16.mxu0 0
    %572 = vmatpush1.bf16.xpose.msra.mxu0 0
    %573 = vmatprep.subr.bf16.mxu0 0
    %574 = vmatpush1.bf16.xpose.msra.mxu0 0
    %575 = vmatprep.subr.bf16.mxu0 0
    %576 = vmatpush1.bf16.xpose.msra.mxu0 0
    %577 = vmatprep.subr.bf16.mxu0 0
    %578 = vmatpush1.bf16.xpose.msra.mxu0 0
    %579 = vmatprep.subr.bf16.mxu0 0
    %580 = vmatpush1.bf16.xpose.msra.mxu0 0
    %581 = vmatprep.subr.bf16.mxu0 0
    %582 = vmatpush1.bf16.xpose.msra.mxu0 0
    %583 = vmatprep.subr.bf16.mxu0 0
    %584 = vmatpush1.bf16.xpose.msra.mxu0 0
    %585 = vmatprep.subr.bf16.mxu0 0
    %586 = vmatpush1.bf16.xpose.msra.mxu0 0
    %587 = vmatprep.subr.bf16.mxu0 0
    %588 = vmatpush1.bf16.xpose.msra.mxu0 0
    %589 = vmatprep.subr.bf16.mxu0 0
    %590 = vmatpush1.bf16.xpose.msra.mxu0 0
    %591 = vmatprep.subr.bf16.mxu0 0
    %592 = vmatpush1.bf16.xpose.msra.mxu0 0
    %593 = vmatprep.subr.bf16.mxu0 0
    %594 = vmatpush1.bf16.xpose.msra.mxu0 0
    %595 = vmatprep.subr.bf16.mxu0 0
    %596 = vmatpush1.bf16.xpose.msra.mxu0 0
    %597 = vmatprep.mubr.bf16.mxu0 0
    %598 = vmatmul.mubr.bf16.gmra.mrb[0].mxu0 %v560
    %v599 = vpop.f32.mrb[0].mxu0
    %v600 = vadd.f32 0.0, %v599
    %v601 = vpop.f32.mrb[0].mxu0
    %v602 = vpop.f32.mrb[0].mxu0
    %v603 = vpop.f32.mrb[0].mxu0
    %604 = vdwg.mxu0
    %v605 = vrot.slane %v498, 4
    %v607 = vsel %vm511, %v498, 0
    %v610 = vsel %vm511, %v605, 0
    %612 = vmatprep.subr.bf16.mxu0 0
    %613 = vmatpush1.bf16.xpose.msra.mxu0 %v610
    %614 = vmatprep.subr.bf16.mxu0 0
    %615 = vmatpush1.bf16.xpose.msra.mxu0 0
    %616 = vmatprep.subr.bf16.mxu0 0
    %617 = vmatpush1.bf16.xpose.msra.mxu0 0
    %618 = vmatprep.subr.bf16.mxu0 0
    %619 = vmatpush1.bf16.xpose.msra.mxu0 0
    %620 = vmatprep.subr.bf16.mxu0 0
    %621 = vmatpush1.bf16.xpose.msra.mxu0 0
    %622 = vmatprep.subr.bf16.mxu0 0
    %623 = vmatpush1.bf16.xpose.msra.mxu0 0
    %624 = vmatprep.subr.bf16.mxu0 0
    %625 = vmatpush1.bf16.xpose.msra.mxu0 0
    %626 = vmatprep.subr.bf16.mxu0 0
    %627 = vmatpush1.bf16.xpose.msra.mxu0 0
    %628 = vmatprep.subr.bf16.mxu0 0
    %629 = vmatpush1.bf16.xpose.msra.mxu0 0
    %630 = vmatprep.subr.bf16.mxu0 0
    %631 = vmatpush1.bf16.xpose.msra.mxu0 0
    %632 = vmatprep.subr.bf16.mxu0 0
    %633 = vmatpush1.bf16.xpose.msra.mxu0 0
    %634 = vmatprep.subr.bf16.mxu0 0
    %635 = vmatpush1.bf16.xpose.msra.mxu0 0
    %636 = vmatprep.subr.bf16.mxu0 0
    %637 = vmatpush1.bf16.xpose.msra.mxu0 0
    %638 = vmatprep.subr.bf16.mxu0 0
    %639 = vmatpush1.bf16.xpose.msra.mxu0 0
    %640 = vmatprep.subr.bf16.mxu0 0
    %641 = vmatpush1.bf16.xpose.msra.mxu0 0
    %642 = vmatprep.subr.bf16.mxu0 0
    %643 = vmatpush1.bf16.xpose.msra.mxu0 0
    %644 = vmatprep.mubr.bf16.mxu0 0
    %645 = vmatmul.mubr.bf16.gmra.mrb[0].mxu0 %v607
    %v646 = vpop.f32.mrb[0].mxu0
    %v647 = vadd.f32 0.0, %v646
    %v648 = vpop.f32.mrb[0].mxu0
    %v649 = vpop.f32.mrb[0].mxu0
    %v650 = vpop.f32.mrb[0].mxu0
    %651 = vdwg.mxu0
    %v652 = vrot.slane %v500, 4
    %v654 = vsel %vm511, %v500, 0
    %v657 = vsel %vm511, %v652, 0
    %659 = vmatprep.subr.bf16.mxu0 0
    %660 = vmatpush1.bf16.xpose.msra.mxu0 %v657
    %661 = vmatprep.subr.bf16.mxu0 0
    %662 = vmatpush1.bf16.xpose.msra.mxu0 0
    %663 = vmatprep.subr.bf16.mxu0 0
    %664 = vmatpush1.bf16.xpose.msra.mxu0 0
    %665 = vmatprep.subr.bf16.mxu0 0
    %666 = vmatpush1.bf16.xpose.msra.mxu0 0
    %667 = vmatprep.subr.bf16.mxu0 0
    %668 = vmatpush1.bf16.xpose.msra.mxu0 0
    %669 = vmatprep.subr.bf16.mxu0 0
    %670 = vmatpush1.bf16.xpose.msra.mxu0 0
    %671 = vmatprep.subr.bf16.mxu0 0
    %672 = vmatpush1.bf16.xpose.msra.mxu0 0
    %673 = vmatprep.subr.bf16.mxu0 0
    %674 = vmatpush1.bf16.xpose.msra.mxu0 0
    %675 = vmatprep.subr.bf16.mxu0 0
    %676 = vmatpush1.bf16.xpose.msra.mxu0 0
    %677 = vmatprep.subr.bf16.mxu0 0
    %678 = vmatpush1.bf16.xpose.msra.mxu0 0
    %679 = vmatprep.subr.bf16.mxu0 0
    %680 = vmatpush1.bf16.xpose.msra.mxu0 0
    %681 = vmatprep.subr.bf16.mxu0 0
    %682 = vmatpush1.bf16.xpose.msra.mxu0 0
    %683 = vmatprep.subr.bf16.mxu0 0
    %684 = vmatpush1.bf16.xpose.msra.mxu0 0
    %685 = vmatprep.subr.bf16.mxu0 0
    %686 = vmatpush1.bf16.xpose.msra.mxu0 0
    %687 = vmatprep.subr.bf16.mxu0 0
    %688 = vmatpush1.bf16.xpose.msra.mxu0 0
    %689 = vmatprep.subr.bf16.mxu0 0
    %690 = vmatpush1.bf16.xpose.msra.mxu0 0
    %691 = vmatprep.mubr.bf16.mxu0 0
    %692 = vmatmul.mubr.bf16.gmra.mrb[0].mxu0 %v654
    %v693 = vpop.f32.mrb[0].mxu0
    %v694 = vadd.f32 0.0, %v693
    %v695 = vpop.f32.mrb[0].mxu0
    %v696 = vpop.f32.mrb[0].mxu0
    %v697 = vpop.f32.mrb[0].mxu0
    %698 = vdwg.mxu0
    %v699 = vrot.slane %v502, 4
    %v701 = vsel %vm511, %v502, 0
    %v704 = vsel %vm511, %v699, 0
    %706 = vmatprep.subr.bf16.mxu0 0
    %707 = vmatpush1.bf16.xpose.msra.mxu0 %v704
    %708 = vmatprep.subr.bf16.mxu0 0
    %709 = vmatpush1.bf16.xpose.msra.mxu0 0
    %710 = vmatprep.subr.bf16.mxu0 0
    %711 = vmatpush1.bf16.xpose.msra.mxu0 0
    %712 = vmatprep.subr.bf16.mxu0 0
    %713 = vmatpush1.bf16.xpose.msra.mxu0 0
    %714 = vmatprep.subr.bf16.mxu0 0
    %715 = vmatpush1.bf16.xpose.msra.mxu0 0
    %716 = vmatprep.subr.bf16.mxu0 0
    %717 = vmatpush1.bf16.xpose.msra.mxu0 0
    %718 = vmatprep.subr.bf16.mxu0 0
    %719 = vmatpush1.bf16.xpose.msra.mxu0 0
    %720 = vmatprep.subr.bf16.mxu0 0
    %721 = vmatpush1.bf16.xpose.msra.mxu0 0
    %722 = vmatprep.subr.bf16.mxu0 0
    %723 = vmatpush1.bf16.xpose.msra.mxu0 0
    %724 = vmatprep.subr.bf16.mxu0 0
    %725 = vmatpush1.bf16.xpose.msra.mxu0 0
    %726 = vmatprep.subr.bf16.mxu0 0
    %727 = vmatpush1.bf16.xpose.msra.mxu0 0
    %728 = vmatprep.subr.bf16.mxu0 0
    %729 = vmatpush1.bf16.xpose.msra.mxu0 0
    %730 = vmatprep.subr.bf16.mxu0 0
    %731 = vmatpush1.bf16.xpose.msra.mxu0 0
    %732 = vmatprep.subr.bf16.mxu0 0
    %733 = vmatpush1.bf16.xpose.msra.mxu0 0
    %734 = vmatprep.subr.bf16.mxu0 0
    %735 = vmatpush1.bf16.xpose.msra.mxu0 0
    %736 = vmatprep.subr.bf16.mxu0 0
    %737 = vmatpush1.bf16.xpose.msra.mxu0 0
    %738 = vmatprep.mubr.bf16.mxu0 0
    %739 = vmatmul.mubr.bf16.gmra.mrb[0].mxu0 %v701
    %v740 = vpop.f32.mrb[0].mxu0
    %v741 = vadd.f32 0.0, %v740
    %v742 = vpop.f32.mrb[0].mxu0
    %v743 = vpop.f32.mrb[0].mxu0
    %v744 = vpop.f32.mrb[0].mxu0
    %745 = vdwg.mxu0
    %v746 = vrot.slane %v504, 4
    %v748 = vsel %vm511, %v504, 0
    %v751 = vsel %vm511, %v746, 0
    %753 = vmatprep.subr.bf16.mxu0 0
    %754 = vmatpush1.bf16.xpose.msra.mxu0 %v751
    %755 = vmatprep.subr.bf16.mxu0 0
    %756 = vmatpush1.bf16.xpose.msra.mxu0 0
    %757 = vmatprep.subr.bf16.mxu0 0
    %758 = vmatpush1.bf16.xpose.msra.mxu0 0
    %759 = vmatprep.subr.bf16.mxu0 0
    %760 = vmatpush1.bf16.xpose.msra.mxu0 0
    %761 = vmatprep.subr.bf16.mxu0 0
    %762 = vmatpush1.bf16.xpose.msra.mxu0 0
    %763 = vmatprep.subr.bf16.mxu0 0
    %764 = vmatpush1.bf16.xpose.msra.mxu0 0
    %765 = vmatprep.subr.bf16.mxu0 0
    %766 = vmatpush1.bf16.xpose.msra.mxu0 0
    %767 = vmatprep.subr.bf16.mxu0 0
    %768 = vmatpush1.bf16.xpose.msra.mxu0 0
    %769 = vmatprep.subr.bf16.mxu0 0
    %770 = vmatpush1.bf16.xpose.msra.mxu0 0
    %771 = vmatprep.subr.bf16.mxu0 0
    %772 = vmatpush1.bf16.xpose.msra.mxu0 0
    %773 = vmatprep.subr.bf16.mxu0 0
    %774 = vmatpush1.bf16.xpose.msra.mxu0 0
    %775 = vmatprep.subr.bf16.mxu0 0
    %776 = vmatpush1.bf16.xpose.msra.mxu0 0
    %777 = vmatprep.subr.bf16.mxu0 0
    %778 = vmatpush1.bf16.xpose.msra.mxu0 0
    %779 = vmatprep.subr.bf16.mxu0 0
    %780 = vmatpush1.bf16.xpose.msra.mxu0 0
    %781 = vmatprep.subr.bf16.mxu0 0
    %782 = vmatpush1.bf16.xpose.msra.mxu0 0
    %783 = vmatprep.subr.bf16.mxu0 0
    %784 = vmatpush1.bf16.xpose.msra.mxu0 0
    %785 = vmatprep.mubr.bf16.mxu0 0
    %786 = vmatmul.mubr.bf16.gmra.mrb[0].mxu0 %v748
    %v787 = vpop.f32.mrb[0].mxu0
    %v788 = vadd.f32 0.0, %v787
    %v789 = vpop.f32.mrb[0].mxu0
    %v790 = vpop.f32.mrb[0].mxu0
    %v791 = vpop.f32.mrb[0].mxu0
    %792 = vdwg.mxu0
    %v793 = vrot.slane %v506, 4
    %v795 = vsel %vm511, %v506, 0
    %v798 = vsel %vm511, %v793, 0
    %800 = vmatprep.subr.bf16.mxu0 0
    %801 = vmatpush1.bf16.xpose.msra.mxu0 %v798
    %802 = vmatprep.subr.bf16.mxu0 0
    %803 = vmatpush1.bf16.xpose.msra.mxu0 0
    %804 = vmatprep.subr.bf16.mxu0 0
    %805 = vmatpush1.bf16.xpose.msra.mxu0 0
    %806 = vmatprep.subr.bf16.mxu0 0
    %807 = vmatpush1.bf16.xpose.msra.mxu0 0
    %808 = vmatprep.subr.bf16.mxu0 0
    %809 = vmatpush1.bf16.xpose.msra.mxu0 0
    %810 = vmatprep.subr.bf16.mxu0 0
    %811 = vmatpush1.bf16.xpose.msra.mxu0 0
    %812 = vmatprep.subr.bf16.mxu0 0
    %813 = vmatpush1.bf16.xpose.msra.mxu0 0
    %814 = vmatprep.subr.bf16.mxu0 0
    %815 = vmatpush1.bf16.xpose.msra.mxu0 0
    %816 = vmatprep.subr.bf16.mxu0 0
    %817 = vmatpush1.bf16.xpose.msra.mxu0 0
    %818 = vmatprep.subr.bf16.mxu0 0
    %819 = vmatpush1.bf16.xpose.msra.mxu0 0
    %820 = vmatprep.subr.bf16.mxu0 0
    %821 = vmatpush1.bf16.xpose.msra.mxu0 0
    %822 = vmatprep.subr.bf16.mxu0 0
    %823 = vmatpush1.bf16.xpose.msra.mxu0 0
    %824 = vmatprep.subr.bf16.mxu0 0
    %825 = vmatpush1.bf16.xpose.msra.mxu0 0
    %826 = vmatprep.subr.bf16.mxu0 0
    %827 = vmatpush1.bf16.xpose.msra.mxu0 0
    %828 = vmatprep.subr.bf16.mxu0 0
    %829 = vmatpush1.bf16.xpose.msra.mxu0 0
    %830 = vmatprep.subr.bf16.mxu0 0
    %831 = vmatpush1.bf16.xpose.msra.mxu0 0
    %832 = vmatprep.mubr.bf16.mxu0 0
    %833 = vmatmul.mubr.bf16.gmra.mrb[0].mxu0 %v795
    %v834 = vpop.f32.mrb[0].mxu0
    %v835 = vadd.f32 0.0, %v834
    %v836 = vpop.f32.mrb[0].mxu0
    %v837 = vpop.f32.mrb[0].mxu0
    %v838 = vpop.f32.mrb[0].mxu0
    %839 = vdwg.mxu0
    %v840 = vrot.slane %v508, 4
    %v842 = vsel %vm511, %v508, 0
    %v845 = vsel %vm511, %v840, 0
    %847 = vmatprep.subr.bf16.mxu0 0
    %848 = vmatpush1.bf16.xpose.msra.mxu0 %v845
    %849 = vmatprep.subr.bf16.mxu0 0
    %850 = vmatpush1.bf16.xpose.msra.mxu0 0
    %851 = vmatprep.subr.bf16.mxu0 0
    %852 = vmatpush1.bf16.xpose.msra.mxu0 0
    %853 = vmatprep.subr.bf16.mxu0 0
    %854 = vmatpush1.bf16.xpose.msra.mxu0 0
    %855 = vmatprep.subr.bf16.mxu0 0
    %856 = vmatpush1.bf16.xpose.msra.mxu0 0
    %857 = vmatprep.subr.bf16.mxu0 0
    %858 = vmatpush1.bf16.xpose.msra.mxu0 0
    %859 = vmatprep.subr.bf16.mxu0 0
    %860 = vmatpush1.bf16.xpose.msra.mxu0 0
    %861 = vmatprep.subr.bf16.mxu0 0
    %862 = vmatpush1.bf16.xpose.msra.mxu0 0
    %863 = vmatprep.subr.bf16.mxu0 0
    %864 = vmatpush1.bf16.xpose.msra.mxu0 0
    %865 = vmatprep.subr.bf16.mxu0 0
    %866 = vmatpush1.bf16.xpose.msra.mxu0 0
    %867 = vmatprep.subr.bf16.mxu0 0
    %868 = vmatpush1.bf16.xpose.msra.mxu0 0
    %869 = vmatprep.subr.bf16.mxu0 0
    %870 = vmatpush1.bf16.xpose.msra.mxu0 0
    %871 = vmatprep.subr.bf16.mxu0 0
    %872 = vmatpush1.bf16.xpose.msra.mxu0 0
    %873 = vmatprep.subr.bf16.mxu0 0
    %874 = vmatpush1.bf16.xpose.msra.mxu0 0
    %875 = vmatprep.subr.bf16.mxu0 0
    %876 = vmatpush1.bf16.xpose.msra.mxu0 0
    %877 = vmatprep.subr.bf16.mxu0 0
    %878 = vmatpush1.bf16.xpose.msra.mxu0 0
    %879 = vmatprep.mubr.bf16.mxu0 0
    %880 = vmatmul.mubr.bf16.gmra.mrb[0].mxu0 %v842
    %v881 = vpop.f32.mrb[0].mxu0
    %v882 = vadd.f32 0.0, %v881
    %v883 = vpop.f32.mrb[0].mxu0
    %v884 = vpop.f32.mrb[0].mxu0
    %v885 = vpop.f32.mrb[0].mxu0
    %886 = vdwg.mxu0
    %v887 = vsel %vm511, %v553, -inf
    %888 = vmax.xlane.f32.xlu0 %v887
    %v889 = vpop.xlane.xlu0 %888
    %v890 = vsel %vm511, %v600, -inf
    %891 = vmax.xlane.f32.xlu0 %v890
    %v892 = vpop.xlane.xlu0 %891
    %v893 = vsel %vm511, %v647, -inf
    %894 = vmax.xlane.f32.xlu0 %v893
    %v895 = vpop.xlane.xlu0 %894
    %v896 = vsel %vm511, %v694, -inf
    %897 = vmax.xlane.f32.xlu0 %v896
    %v898 = vpop.xlane.xlu0 %897
    %v899 = vsel %vm511, %v741, -inf
    %900 = vmax.xlane.f32.xlu0 %v899
    %v901 = vpop.xlane.xlu0 %900
    %v902 = vsel %vm511, %v788, -inf
    %903 = vmax.xlane.f32.xlu0 %v902
    %v904 = vpop.xlane.xlu0 %903
    %v905 = vsel %vm511, %v835, -inf
    %906 = vmax.xlane.f32.xlu0 %v905
    %v907 = vpop.xlane.xlu0 %906
    %v908 = vsel %vm511, %v882, -inf
    %909 = vmax.xlane.f32.xlu0 %v908
    %v910 = vpop.xlane.xlu0 %909
    %v911 = vsub.f32 %v553, %v889
    %v912 = vsub.f32 %v600, %v892
    %v913 = vsub.f32 %v647, %v895
    %v914 = vsub.f32 %v694, %v898
    %v915 = vsub.f32 %v741, %v901
    %v916 = vsub.f32 %v788, %v904
    %v917 = vsub.f32 %v835, %v907
    %v918 = vsub.f32 %v882, %v910
    %v919 = vmul.f32 %v911, 1.442695
    %v920 = vpow.pop %v919
    %v921 = vmul.f32 %v912, 1.442695
    %v922 = vpow.pop %v921
    %v923 = vmul.f32 %v913, 1.442695
    %v924 = vpow.pop %v923
    %v925 = vmul.f32 %v914, 1.442695
    %v926 = vpow.pop %v925
    %v927 = vmul.f32 %v915, 1.442695
    %v928 = vpow.pop %v927
    %v929 = vmul.f32 %v916, 1.442695
    %v930 = vpow.pop %v929
    %v931 = vmul.f32 %v917, 1.442695
    %v932 = vpow.pop %v931
    %v933 = vmul.f32 %v918, 1.442695
    %v934 = vpow.pop %v933
    %v935 = vsel %vm511, %v920, 0.0
    %936 = vadd.xlane.f32.xlu0 %v935
    %v937 = vpop.xlane.xlu0 %936
    %v938 = vsel %vm511, %v922, 0.0
    %939 = vadd.xlane.f32.xlu0 %v938
    %v940 = vpop.xlane.xlu0 %939
    %v941 = vsel %vm511, %v924, 0.0
    %942 = vadd.xlane.f32.xlu0 %v941
    %v943 = vpop.xlane.xlu0 %942
    %v944 = vsel %vm511, %v926, 0.0
    %945 = vadd.xlane.f32.xlu0 %v944
    %v946 = vpop.xlane.xlu0 %945
    %v947 = vsel %vm511, %v928, 0.0
    %948 = vadd.xlane.f32.xlu0 %v947
    %v949 = vpop.xlane.xlu0 %948
    %v950 = vsel %vm511, %v930, 0.0
    %951 = vadd.xlane.f32.xlu0 %v950
    %v952 = vpop.xlane.xlu0 %951
    %v953 = vsel %vm511, %v932, 0.0
    %954 = vadd.xlane.f32.xlu0 %v953
    %v955 = vpop.xlane.xlu0 %954
    %v956 = vsel %vm511, %v934, 0.0
    %957 = vadd.xlane.f32.xlu0 %v956
    %v958 = vpop.xlane.xlu0 %957
    %v959 = vrcp.pop %v937
    %v960 = vrcp.pop %v940
    %v961 = vrcp.pop %v943
    %v962 = vrcp.pop %v946
    %v963 = vrcp.pop %v949
    %v964 = vrcp.pop %v952
    %v965 = vrcp.pop %v955
    %v966 = vrcp.pop %v958
    %v967 = vmul.f32 %v920, %v959
    %v968 = vmul.f32 %v922, %v960
    %v969 = vmul.f32 %v924, %v961
    %v970 = vmul.f32 %v926, %v962
    %v971 = vmul.f32 %v928, %v963
    %v972 = vmul.f32 %v930, %v964
    %v973 = vmul.f32 %v932, %v965
    %v974 = vmul.f32 %v934, %v966
    %v975 = vpack.c.bf16 %v967, %v967
    %v976 = vpack.c.bf16 %v968, %v968
    %v977 = vpack.c.bf16 %v969, %v969
    %v978 = vpack.c.bf16 %v970, %v970
    %v979 = vpack.c.bf16 %v971, %v971
    %v980 = vpack.c.bf16 %v972, %v972
    %v981 = vpack.c.bf16 %v973, %v973
    %v982 = vpack.c.bf16 %v974, %v974
    %v984 = vsel %vm511, %v975, 0
    %vm986 = vcmask 1043456
    %v988 = vsel %vm986, %v495, 0
    %990 = vmatprep.subr.bf16.mxu0 0
    %991 = vmatpush1.bf16.msra.mxu0 %v988
    %992 = vmatprep.subr.bf16.mxu0 0
    %993 = vmatpush1.bf16.msra.mxu0 0
    %994 = vmatprep.subr.bf16.mxu0 0
    %995 = vmatpush1.bf16.msra.mxu0 0
    %996 = vmatprep.subr.bf16.mxu0 0
    %997 = vmatpush1.bf16.msra.mxu0 0
    %998 = vmatprep.subr.bf16.mxu0 0
    %999 = vmatpush1.bf16.msra.mxu0 0
    %1000 = vmatprep.subr.bf16.mxu0 0
    %1001 = vmatpush1.bf16.msra.mxu0 0
    %1002 = vmatprep.subr.bf16.mxu0 0
    %1003 = vmatpush1.bf16.msra.mxu0 0
    %1004 = vmatprep.subr.bf16.mxu0 0
    %1005 = vmatpush1.bf16.msra.mxu0 0
    %1006 = vmatprep.subr.bf16.mxu0 0
    %1007 = vmatpush1.bf16.msra.mxu0 0
    %1008 = vmatprep.subr.bf16.mxu0 0
    %1009 = vmatpush1.bf16.msra.mxu0 0
    %1010 = vmatprep.subr.bf16.mxu0 0
    %1011 = vmatpush1.bf16.msra.mxu0 0
    %1012 = vmatprep.subr.bf16.mxu0 0
    %1013 = vmatpush1.bf16.msra.mxu0 0
    %1014 = vmatprep.subr.bf16.mxu0 0
    %1015 = vmatpush1.bf16.msra.mxu0 0
    %1016 = vmatprep.subr.bf16.mxu0 0
    %1017 = vmatpush1.bf16.msra.mxu0 0
    %1018 = vmatprep.subr.bf16.mxu0 0
    %1019 = vmatpush1.bf16.msra.mxu0 0
    %1020 = vmatprep.subr.bf16.mxu0 0
    %1021 = vmatpush1.bf16.msra.mxu0 0
    %1022 = vmatprep.mubr.bf16.mxu0 0
    %1023 = vmatmul.mubr.bf16.gmra.mrb[0].mxu0 %v984
    %v1024 = vpop.f32.mrb[0].mxu0
    %v1025 = vadd.f32 0.0, %v1024
    %v1026 = vpop.f32.mrb[0].mxu0
    %v1027 = vpop.f32.mrb[0].mxu0
    %v1028 = vpop.f32.mrb[0].mxu0
    %1029 = vdwg.mxu0
    %v1031 = vsel %vm511, %v976, 0
    %v1034 = vsel %vm986, %v497, 0
    %1036 = vmatprep.subr.bf16.mxu0 0
    %1037 = vmatpush1.bf16.msra.mxu0 %v1034
    %1038 = vmatprep.subr.bf16.mxu0 0
    %1039 = vmatpush1.bf16.msra.mxu0 0
    %1040 = vmatprep.subr.bf16.mxu0 0
    %1041 = vmatpush1.bf16.msra.mxu0 0
    %1042 = vmatprep.subr.bf16.mxu0 0
    %1043 = vmatpush1.bf16.msra.mxu0 0
    %1044 = vmatprep.subr.bf16.mxu0 0
    %1045 = vmatpush1.bf16.msra.mxu0 0
    %1046 = vmatprep.subr.bf16.mxu0 0
    %1047 = vmatpush1.bf16.msra.mxu0 0
    %1048 = vmatprep.subr.bf16.mxu0 0
    %1049 = vmatpush1.bf16.msra.mxu0 0
    %1050 = vmatprep.subr.bf16.mxu0 0
    %1051 = vmatpush1.bf16.msra.mxu0 0
    %1052 = vmatprep.subr.bf16.mxu0 0
    %1053 = vmatpush1.bf16.msra.mxu0 0
    %1054 = vmatprep.subr.bf16.mxu0 0
    %1055 = vmatpush1.bf16.msra.mxu0 0
    %1056 = vmatprep.subr.bf16.mxu0 0
    %1057 = vmatpush1.bf16.msra.mxu0 0
    %1058 = vmatprep.subr.bf16.mxu0 0
    %1059 = vmatpush1.bf16.msra.mxu0 0
    %1060 = vmatprep.subr.bf16.mxu0 0
    %1061 = vmatpush1.bf16.msra.mxu0 0
    %1062 = vmatprep.subr.bf16.mxu0 0
    %1063 = vmatpush1.bf16.msra.mxu0 0
    %1064 = vmatprep.subr.bf16.mxu0 0
    %1065 = vmatpush1.bf16.msra.mxu0 0
    %1066 = vmatprep.subr.bf16.mxu0 0
    %1067 = vmatpush1.bf16.msra.mxu0 0
    %1068 = vmatprep.mubr.bf16.mxu0 0
    %1069 = vmatmul.mubr.bf16.gmra.mrb[0].mxu0 %v1031
    %v1070 = vpop.f32.mrb[0].mxu0
    %v1071 = vadd.f32 0.0, %v1070
    %v1072 = vpop.f32.mrb[0].mxu0
    %v1073 = vpop.f32.mrb[0].mxu0
    %v1074 = vpop.f32.mrb[0].mxu0
    %1075 = vdwg.mxu0
    %v1077 = vsel %vm511, %v977, 0
    %v1080 = vsel %vm986, %v499, 0
    %1082 = vmatprep.subr.bf16.mxu0 0
    %1083 = vmatpush1.bf16.msra.mxu0 %v1080
    %1084 = vmatprep.subr.bf16.mxu0 0
    %1085 = vmatpush1.bf16.msra.mxu0 0
    %1086 = vmatprep.subr.bf16.mxu0 0
    %1087 = vmatpush1.bf16.msra.mxu0 0
    %1088 = vmatprep.subr.bf16.mxu0 0
    %1089 = vmatpush1.bf16.msra.mxu0 0
    %1090 = vmatprep.subr.bf16.mxu0 0
    %1091 = vmatpush1.bf16.msra.mxu0 0
    %1092 = vmatprep.subr.bf16.mxu0 0
    %1093 = vmatpush1.bf16.msra.mxu0 0
    %1094 = vmatprep.subr.bf16.mxu0 0
    %1095 = vmatpush1.bf16.msra.mxu0 0
    %1096 = vmatprep.subr.bf16.mxu0 0
    %1097 = vmatpush1.bf16.msra.mxu0 0
    %1098 = vmatprep.subr.bf16.mxu0 0
    %1099 = vmatpush1.bf16.msra.mxu0 0
    %1100 = vmatprep.subr.bf16.mxu0 0
    %1101 = vmatpush1.bf16.msra.mxu0 0
    %1102 = vmatprep.subr.bf16.mxu0 0
    %1103 = vmatpush1.bf16.msra.mxu0 0
    %1104 = vmatprep.subr.bf16.mxu0 0
    %1105 = vmatpush1.bf16.msra.mxu0 0
    %1106 = vmatprep.subr.bf16.mxu0 0
    %1107 = vmatpush1.bf16.msra.mxu0 0
    %1108 = vmatprep.subr.bf16.mxu0 0
    %1109 = vmatpush1.bf16.msra.mxu0 0
    %1110 = vmatprep.subr.bf16.mxu0 0
    %1111 = vmatpush1.bf16.msra.mxu0 0
    %1112 = vmatprep.subr.bf16.mxu0 0
    %1113 = vmatpush1.bf16.msra.mxu0 0
    %1114 = vmatprep.mubr.bf16.mxu0 0
    %1115 = vmatmul.mubr.bf16.gmra.mrb[0].mxu0 %v1077
    %v1116 = vpop.f32.mrb[0].mxu0
    %v1117 = vadd.f32 0.0, %v1116
    %v1118 = vpop.f32.mrb[0].mxu0
    %v1119 = vpop.f32.mrb[0].mxu0
    %v1120 = vpop.f32.mrb[0].mxu0
    %1121 = vdwg.mxu0
    %v1123 = vsel %vm511, %v978, 0
    %v1126 = vsel %vm986, %v501, 0
    %1128 = vmatprep.subr.bf16.mxu0 0
    %1129 = vmatpush1.bf16.msra.mxu0 %v1126
    %1130 = vmatprep.subr.bf16.mxu0 0
    %1131 = vmatpush1.bf16.msra.mxu0 0
    %1132 = vmatprep.subr.bf16.mxu0 0
    %1133 = vmatpush1.bf16.msra.mxu0 0
    %1134 = vmatprep.subr.bf16.mxu0 0
    %1135 = vmatpush1.bf16.msra.mxu0 0
    %1136 = vmatprep.subr.bf16.mxu0 0
    %1137 = vmatpush1.bf16.msra.mxu0 0
    %1138 = vmatprep.subr.bf16.mxu0 0
    %1139 = vmatpush1.bf16.msra.mxu0 0
    %1140 = vmatprep.subr.bf16.mxu0 0
    %1141 = vmatpush1.bf16.msra.mxu0 0
    %1142 = vmatprep.subr.bf16.mxu0 0
    %1143 = vmatpush1.bf16.msra.mxu0 0
    %1144 = vmatprep.subr.bf16.mxu0 0
    %1145 = vmatpush1.bf16.msra.mxu0 0
    %1146 = vmatprep.subr.bf16.mxu0 0
    %1147 = vmatpush1.bf16.msra.mxu0 0
    %1148 = vmatprep.subr.bf16.mxu0 0
    %1149 = vmatpush1.bf16.msra.mxu0 0
    %1150 = vmatprep.subr.bf16.mxu0 0
    %1151 = vmatpush1.bf16.msra.mxu0 0
    %1152 = vmatprep.subr.bf16.mxu0 0
    %1153 = vmatpush1.bf16.msra.mxu0 0
    %1154 = vmatprep.subr.bf16.mxu0 0
    %1155 = vmatpush1.bf16.msra.mxu0 0
    %1156 = vmatprep.subr.bf16.mxu0 0
    %1157 = vmatpush1.bf16.msra.mxu0 0
    %1158 = vmatprep.subr.bf16.mxu0 0
    %1159 = vmatpush1.bf16.msra.mxu0 0
    %1160 = vmatprep.mubr.bf16.mxu0 0
    %1161 = vmatmul.mubr.bf16.gmra.mrb[0].mxu0 %v1123
    %v1162 = vpop.f32.mrb[0].mxu0
    %v1163 = vadd.f32 0.0, %v1162
    %v1164 = vpop.f32.mrb[0].mxu0
    %v1165 = vpop.f32.mrb[0].mxu0
    %v1166 = vpop.f32.mrb[0].mxu0
    %1167 = vdwg.mxu0
    %v1169 = vsel %vm511, %v979, 0
    %v1172 = vsel %vm986, %v503, 0
    %1174 = vmatprep.subr.bf16.mxu0 0
    %1175 = vmatpush1.bf16.msra.mxu0 %v1172
    %1176 = vmatprep.subr.bf16.mxu0 0
    %1177 = vmatpush1.bf16.msra.mxu0 0
    %1178 = vmatprep.subr.bf16.mxu0 0
    %1179 = vmatpush1.bf16.msra.mxu0 0
    %1180 = vmatprep.subr.bf16.mxu0 0
    %1181 = vmatpush1.bf16.msra.mxu0 0
    %1182 = vmatprep.subr.bf16.mxu0 0
    %1183 = vmatpush1.bf16.msra.mxu0 0
    %1184 = vmatprep.subr.bf16.mxu0 0
    %1185 = vmatpush1.bf16.msra.mxu0 0
    %1186 = vmatprep.subr.bf16.mxu0 0
    %1187 = vmatpush1.bf16.msra.mxu0 0
    %1188 = vmatprep.subr.bf16.mxu0 0
    %1189 = vmatpush1.bf16.msra.mxu0 0
    %1190 = vmatprep.subr.bf16.mxu0 0
    %1191 = vmatpush1.bf16.msra.mxu0 0
    %1192 = vmatprep.subr.bf16.mxu0 0
    %1193 = vmatpush1.bf16.msra.mxu0 0
    %1194 = vmatprep.subr.bf16.mxu0 0
    %1195 = vmatpush1.bf16.msra.mxu0 0
    %1196 = vmatprep.subr.bf16.mxu0 0
    %1197 = vmatpush1.bf16.msra.mxu0 0
    %1198 = vmatprep.subr.bf16.mxu0 0
    %1199 = vmatpush1.bf16.msra.mxu0 0
    %1200 = vmatprep.subr.bf16.mxu0 0
    %1201 = vmatpush1.bf16.msra.mxu0 0
    %1202 = vmatprep.subr.bf16.mxu0 0
    %1203 = vmatpush1.bf16.msra.mxu0 0
    %1204 = vmatprep.subr.bf16.mxu0 0
    %1205 = vmatpush1.bf16.msra.mxu0 0
    %1206 = vmatprep.mubr.bf16.mxu0 0
    %1207 = vmatmul.mubr.bf16.gmra.mrb[0].mxu0 %v1169
    %v1208 = vpop.f32.mrb[0].mxu0
    %v1209 = vadd.f32 0.0, %v1208
    %v1210 = vpop.f32.mrb[0].mxu0
    %v1211 = vpop.f32.mrb[0].mxu0
    %v1212 = vpop.f32.mrb[0].mxu0
    %1213 = vdwg.mxu0
    %v1215 = vsel %vm511, %v980, 0
    %v1218 = vsel %vm986, %v505, 0
    %1220 = vmatprep.subr.bf16.mxu0 0
    %1221 = vmatpush1.bf16.msra.mxu0 %v1218
    %1222 = vmatprep.subr.bf16.mxu0 0
    %1223 = vmatpush1.bf16.msra.mxu0 0
    %1224 = vmatprep.subr.bf16.mxu0 0
    %1225 = vmatpush1.bf16.msra.mxu0 0
    %1226 = vmatprep.subr.bf16.mxu0 0
    %1227 = vmatpush1.bf16.msra.mxu0 0
    %1228 = vmatprep.subr.bf16.mxu0 0
    %1229 = vmatpush1.bf16.msra.mxu0 0
    %1230 = vmatprep.subr.bf16.mxu0 0
    %1231 = vmatpush1.bf16.msra.mxu0 0
    %1232 = vmatprep.subr.bf16.mxu0 0
    %1233 = vmatpush1.bf16.msra.mxu0 0
    %1234 = vmatprep.subr.bf16.mxu0 0
    %1235 = vmatpush1.bf16.msra.mxu0 0
    %1236 = vmatprep.subr.bf16.mxu0 0
    %1237 = vmatpush1.bf16.msra.mxu0 0
    %1238 = vmatprep.subr.bf16.mxu0 0
    %1239 = vmatpush1.bf16.msra.mxu0 0
    %1240 = vmatprep.subr.bf16.mxu0 0
    %1241 = vmatpush1.bf16.msra.mxu0 0
    %1242 = vmatprep.subr.bf16.mxu0 0
    %1243 = vmatpush1.bf16.msra.mxu0 0
    %1244 = vmatprep.subr.bf16.mxu0 0
    %1245 = vmatpush1.bf16.msra.mxu0 0
    %1246 = vmatprep.subr.bf16.mxu0 0
    %1247 = vmatpush1.bf16.msra.mxu0 0
    %1248 = vmatprep.subr.bf16.mxu0 0
    %1249 = vmatpush1.bf16.msra.mxu0 0
    %1250 = vmatprep.subr.bf16.mxu0 0
    %1251 = vmatpush1.bf16.msra.mxu0 0
    %1252 = vmatprep.mubr.bf16.mxu0 0
    %1253 = vmatmul.mubr.bf16.gmra.mrb[0].mxu0 %v1215
    %v1254 = vpop.f32.mrb[0].mxu0
    %v1255 = vadd.f32 0.0, %v1254
    %v1256 = vpop.f32.mrb[0].mxu0
    %v1257 = vpop.f32.mrb[0].mxu0
    %v1258 = vpop.f32.mrb[0].mxu0
    %1259 = vdwg.mxu0
    %v1261 = vsel %vm511, %v981, 0
    %v1264 = vsel %vm986, %v507, 0
    %1266 = vmatprep.subr.bf16.mxu0 0
    %1267 = vmatpush1.bf16.msra.mxu0 %v1264
    %1268 = vmatprep.subr.bf16.mxu0 0
    %1269 = vmatpush1.bf16.msra.mxu0 0
    %1270 = vmatprep.subr.bf16.mxu0 0
    %1271 = vmatpush1.bf16.msra.mxu0 0
    %1272 = vmatprep.subr.bf16.mxu0 0
    %1273 = vmatpush1.bf16.msra.mxu0 0
    %1274 = vmatprep.subr.bf16.mxu0 0
    %1275 = vmatpush1.bf16.msra.mxu0 0
    %1276 = vmatprep.subr.bf16.mxu0 0
    %1277 = vmatpush1.bf16.msra.mxu0 0
    %1278 = vmatprep.subr.bf16.mxu0 0
    %1279 = vmatpush1.bf16.msra.mxu0 0
    %1280 = vmatprep.subr.bf16.mxu0 0
    %1281 = vmatpush1.bf16.msra.mxu0 0
    %1282 = vmatprep.subr.bf16.mxu0 0
    %1283 = vmatpush1.bf16.msra.mxu0 0
    %1284 = vmatprep.subr.bf16.mxu0 0
    %1285 = vmatpush1.bf16.msra.mxu0 0
    %1286 = vmatprep.subr.bf16.mxu0 0
    %1287 = vmatpush1.bf16.msra.mxu0 0
    %1288 = vmatprep.subr.bf16.mxu0 0
    %1289 = vmatpush1.bf16.msra.mxu0 0
    %1290 = vmatprep.subr.bf16.mxu0 0
    %1291 = vmatpush1.bf16.msra.mxu0 0
    %1292 = vmatprep.subr.bf16.mxu0 0
    %1293 = vmatpush1.bf16.msra.mxu0 0
    %1294 = vmatprep.subr.bf16.mxu0 0
    %1295 = vmatpush1.bf16.msra.mxu0 0
    %1296 = vmatprep.subr.bf16.mxu0 0
    %1297 = vmatpush1.bf16.msra.mxu0 0
    %1298 = vmatprep.mubr.bf16.mxu0 0
    %1299 = vmatmul.mubr.bf16.gmra.mrb[0].mxu0 %v1261
    %v1300 = vpop.f32.mrb[0].mxu0
    %v1301 = vadd.f32 0.0, %v1300
    %v1302 = vpop.f32.mrb[0].mxu0
    %v1303 = vpop.f32.mrb[0].mxu0
    %v1304 = vpop.f32.mrb[0].mxu0
    %1305 = vdwg.mxu0
    %v1307 = vsel %vm511, %v982, 0
    %v1310 = vsel %vm986, %v509, 0
    %1312 = vmatprep.subr.bf16.mxu0 0
    %1313 = vmatpush1.bf16.msra.mxu0 %v1310
    %1314 = vmatprep.subr.bf16.mxu0 0
    %1315 = vmatpush1.bf16.msra.mxu0 0
    %1316 = vmatprep.subr.bf16.mxu0 0
    %1317 = vmatpush1.bf16.msra.mxu0 0
    %1318 = vmatprep.subr.bf16.mxu0 0
    %1319 = vmatpush1.bf16.msra.mxu0 0
    %1320 = vmatprep.subr.bf16.mxu0 0
    %1321 = vmatpush1.bf16.msra.mxu0 0
    %1322 = vmatprep.subr.bf16.mxu0 0
    %1323 = vmatpush1.bf16.msra.mxu0 0
    %1324 = vmatprep.subr.bf16.mxu0 0
    %1325 = vmatpush1.bf16.msra.mxu0 0
    %1326 = vmatprep.subr.bf16.mxu0 0
    %1327 = vmatpush1.bf16.msra.mxu0 0
    %1328 = vmatprep.subr.bf16.mxu0 0
    %1329 = vmatpush1.bf16.msra.mxu0 0
    %1330 = vmatprep.subr.bf16.mxu0 0
    %1331 = vmatpush1.bf16.msra.mxu0 0
    %1332 = vmatprep.subr.bf16.mxu0 0
    %1333 = vmatpush1.bf16.msra.mxu0 0
    %1334 = vmatprep.subr.bf16.mxu0 0
    %1335 = vmatpush1.bf16.msra.mxu0 0
    %1336 = vmatprep.subr.bf16.mxu0 0
    %1337 = vmatpush1.bf16.msra.mxu0 0
    %1338 = vmatprep.subr.bf16.mxu0 0
    %1339 = vmatpush1.bf16.msra.mxu0 0
    %1340 = vmatprep.subr.bf16.mxu0 0
    %1341 = vmatpush1.bf16.msra.mxu0 0
    %1342 = vmatprep.subr.bf16.mxu0 0
    %1343 = vmatpush1.bf16.msra.mxu0 0
    %1344 = vmatprep.mubr.bf16.mxu0 0
    %1345 = vmatmul.mubr.bf16.gmra.mrb[0].mxu0 %v1307
    %v1346 = vpop.f32.mrb[0].mxu0
    %v1347 = vadd.f32 0.0, %v1346
    %v1348 = vpop.f32.mrb[0].mxu0
    %v1349 = vpop.f32.mrb[0].mxu0
    %v1350 = vpop.f32.mrb[0].mxu0
    %1351 = vdwg.mxu0
    %v1352 = vsel %vm511, %v1025, 0.0
    %v1353 = vrot.slane %v1352, 4
    %v1354 = vadd.f32 %v1352, %v1353
    %v1355 = vrot.slane %v1354, 2
    %v1356 = vadd.f32 %v1354, %v1355
    %v1357 = vrot.slane %v1356, 1
    %v1358 = vadd.f32 %v1356, %v1357
    %v1359 = vsel %vm511, %v1071, 0.0
    %v1360 = vrot.slane %v1359, 4
    %v1361 = vadd.f32 %v1359, %v1360
    %v1362 = vrot.slane %v1361, 2
    %v1363 = vadd.f32 %v1361, %v1362
    %v1364 = vrot.slane %v1363, 1
    %v1365 = vadd.f32 %v1363, %v1364
    %v1366 = vsel %vm511, %v1117, 0.0
    %v1367 = vrot.slane %v1366, 4
    %v1368 = vadd.f32 %v1366, %v1367
    %v1369 = vrot.slane %v1368, 2
    %v1370 = vadd.f32 %v1368, %v1369
    %v1371 = vrot.slane %v1370, 1
    %v1372 = vadd.f32 %v1370, %v1371
    %v1373 = vsel %vm511, %v1163, 0.0
    %v1374 = vrot.slane %v1373, 4
    %v1375 = vadd.f32 %v1373, %v1374
    %v1376 = vrot.slane %v1375, 2
    %v1377 = vadd.f32 %v1375, %v1376
    %v1378 = vrot.slane %v1377, 1
    %v1379 = vadd.f32 %v1377, %v1378
    %v1380 = vsel %vm511, %v1209, 0.0
    %v1381 = vrot.slane %v1380, 4
    %v1382 = vadd.f32 %v1380, %v1381
    %v1383 = vrot.slane %v1382, 2
    %v1384 = vadd.f32 %v1382, %v1383
    %v1385 = vrot.slane %v1384, 1
    %v1386 = vadd.f32 %v1384, %v1385
    %v1387 = vsel %vm511, %v1255, 0.0
    %v1388 = vrot.slane %v1387, 4
    %v1389 = vadd.f32 %v1387, %v1388
    %v1390 = vrot.slane %v1389, 2
    %v1391 = vadd.f32 %v1389, %v1390
    %v1392 = vrot.slane %v1391, 1
    %v1393 = vadd.f32 %v1391, %v1392
    %v1394 = vsel %vm511, %v1301, 0.0
    %v1395 = vrot.slane %v1394, 4
    %v1396 = vadd.f32 %v1394, %v1395
    %v1397 = vrot.slane %v1396, 2
    %v1398 = vadd.f32 %v1396, %v1397
    %v1399 = vrot.slane %v1398, 1
    %v1400 = vadd.f32 %v1398, %v1399
    %v1401 = vsel %vm511, %v1347, 0.0
    %v1402 = vrot.slane %v1401, 4
    %v1403 = vadd.f32 %v1401, %v1402
    %v1404 = vrot.slane %v1403, 2
    %v1405 = vadd.f32 %v1403, %v1404
    %v1406 = vrot.slane %v1405, 1
    %v1407 = vadd.f32 %v1405, %v1406
    %v1408 = vpack.c.bf16 %v1071, %v1025
    %v1409 = vpack.c.bf16 %v1163, %v1117
    %v1410 = vpack.c.bf16 %v1255, %v1209
    %v1411 = vpack.c.bf16 %v1347, %v1301
    %v1412 = vld [vmem:[#allocation7] sm:$0xf]
    %1413 = vrot.lane.b32.xlu0 %v494, 120
    %v1414 = vpop.permute.xlu0 %1413
    %v1415 = vrot.slane %v1414, 4
    %v1416 = vpack.c.b16 %v470, %v470
    %1417 = vrot.lane.b32.xlu0 %v1416, 120
    %v1418 = vpop.permute.xlu0 %1417
    %v1420 = vsel %vm511, %v1418, 0
    %v1423 = vsel %vm511, %v1415, 0
    %1425 = vmatprep.subr.bf16.mxu0 0
    %1426 = vmatpush1.bf16.xpose.msra.mxu0 %v1423
    %1427 = vmatprep.subr.bf16.mxu0 0
    %1428 = vmatpush1.bf16.xpose.msra.mxu0 0
    %1429 = vmatprep.subr.bf16.mxu0 0
    %1430 = vmatpush1.bf16.xpose.msra.mxu0 0
    %1431 = vmatprep.subr.bf16.mxu0 0
    %1432 = vmatpush1.bf16.xpose.msra.mxu0 0
    %1433 = vmatprep.subr.bf16.mxu0 0
    %1434 = vmatpush1.bf16.xpose.msra.mxu0 0
    %1435 = vmatprep.subr.bf16.mxu0 0
    %1436 = vmatpush1.bf16.xpose.msra.mxu0 0
    %1437 = vmatprep.subr.bf16.mxu0 0
    %1438 = vmatpush1.bf16.xpose.msra.mxu0 0
    %1439 = vmatprep.subr.bf16.mxu0 0
    %1440 = vmatpush1.bf16.xpose.msra.mxu0 0
    %1441 = vmatprep.subr.bf16.mxu0 0
    %1442 = vmatpush1.bf16.xpose.msra.mxu0 0
    %1443 = vmatprep.subr.bf16.mxu0 0
    %1444 = vmatpush1.bf16.xpose.msra.mxu0 0
    %1445 = vmatprep.subr.bf16.mxu0 0
    %1446 = vmatpush1.bf16.xpose.msra.mxu0 0
    %1447 = vmatprep.subr.bf16.mxu0 0
    %1448 = vmatpush1.bf16.xpose.msra.mxu0 0
    %1449 = vmatprep.subr.bf16.mxu0 0
    %1450 = vmatpush1.bf16.xpose.msra.mxu0 0
    %1451 = vmatprep.subr.bf16.mxu0 0
    %1452 = vmatpush1.bf16.xpose.msra.mxu0 0
    %1453 = vmatprep.subr.bf16.mxu0 0
    %1454 = vmatpush1.bf16.xpose.msra.mxu0 0
    %1455 = vmatprep.subr.bf16.mxu0 0
    %1456 = vmatpush1.bf16.xpose.msra.mxu0 0
    %1457 = vmatprep.mubr.bf16.mxu0 0
    %1458 = vmatmul.mubr.bf16.gmra.mrb[0].mxu0 %v1420
    %v1459 = vpop.f32.mrb[0].mxu0
    %v1460 = vadd.f32 0.0, %v1459
    %v1461 = vpop.f32.mrb[0].mxu0
    %v1462 = vpop.f32.mrb[0].mxu0
    %v1463 = vpop.f32.mrb[0].mxu0
    %1464 = vdwg.mxu0
    %1465 = vrot.lane.b32.xlu0 %v496, 120
    %v1466 = vpop.permute.xlu0 %1465
    %v1467 = vrot.slane %v1466, 4
    %v1468 = vpack.c.b16 %v473, %v473
    %1469 = vrot.lane.b32.xlu0 %v1468, 120
    %v1470 = vpop.permute.xlu0 %1469
    %v1472 = vsel %vm511, %v1470, 0
    %v1475 = vsel %vm511, %v1467, 0
    %1477 = vmatprep.subr.bf16.mxu0 0
    %1478 = vmatpush1.bf16.xpose.msra.mxu0 %v1475
    %1479 = vmatprep.subr.bf16.mxu0 0
    %1480 = vmatpush1.bf16.xpose.msra.mxu0 0
    %1481 = vmatprep.subr.bf16.mxu0 0
    %1482 = vmatpush1.bf16.xpose.msra.mxu0 0
    %1483 = vmatprep.subr.bf16.mxu0 0
    %1484 = vmatpush1.bf16.xpose.msra.mxu0 0
    %1485 = vmatprep.subr.bf16.mxu0 0
    %1486 = vmatpush1.bf16.xpose.msra.mxu0 0
    %1487 = vmatprep.subr.bf16.mxu0 0
    %1488 = vmatpush1.bf16.xpose.msra.mxu0 0
    %1489 = vmatprep.subr.bf16.mxu0 0
    %1490 = vmatpush1.bf16.xpose.msra.mxu0 0
    %1491 = vmatprep.subr.bf16.mxu0 0
    %1492 = vmatpush1.bf16.xpose.msra.mxu0 0
    %1493 = vmatprep.subr.bf16.mxu0 0
    %1494 = vmatpush1.bf16.xpose.msra.mxu0 0
    %1495 = vmatprep.subr.bf16.mxu0 0
    %1496 = vmatpush1.bf16.xpose.msra.mxu0 0
    %1497 = vmatprep.subr.bf16.mxu0 0
    %1498 = vmatpush1.bf16.xpose.msra.mxu0 0
    %1499 = vmatprep.subr.bf16.mxu0 0
    %1500 = vmatpush1.bf16.xpose.msra.mxu0 0
    %1501 = vmatprep.subr.bf16.mxu0 0
    %1502 = vmatpush1.bf16.xpose.msra.mxu0 0
    %1503 = vmatprep.subr.bf16.mxu0 0
    %1504 = vmatpush1.bf16.xpose.msra.mxu0 0
    %1505 = vmatprep.subr.bf16.mxu0 0
    %1506 = vmatpush1.bf16.xpose.msra.mxu0 0
    %1507 = vmatprep.subr.bf16.mxu0 0
    %1508 = vmatpush1.bf16.xpose.msra.mxu0 0
    %1509 = vmatprep.mubr.bf16.mxu0 0
    %1510 = vmatmul.mubr.bf16.gmra.mrb[0].mxu0 %v1472
    %v1511 = vpop.f32.mrb[0].mxu0
    %v1512 = vadd.f32 0.0, %v1511
    %v1513 = vpop.f32.mrb[0].mxu0
    %v1514 = vpop.f32.mrb[0].mxu0
    %v1515 = vpop.f32.mrb[0].mxu0
    %1516 = vdwg.mxu0
    %1517 = vrot.lane.b32.xlu0 %v498, 120
    %v1518 = vpop.permute.xlu0 %1517
    %v1519 = vrot.slane %v1518, 4
    %v1520 = vpack.c.b16 %v476, %v476
    %1521 = vrot.lane.b32.xlu0 %v1520, 120
    %v1522 = vpop.permute.xlu0 %1521
    %v1524 = vsel %vm511, %v1522, 0
    %v1527 = vsel %vm511, %v1519, 0
    %1529 = vmatprep.subr.bf16.mxu0 0
    %1530 = vmatpush1.bf16.xpose.msra.mxu0 %v1527
    %1531 = vmatprep.subr.bf16.mxu0 0
    %1532 = vmatpush1.bf16.xpose.msra.mxu0 0
    %1533 = vmatprep.subr.bf16.mxu0 0
    %1534 = vmatpush1.bf16.xpose.msra.mxu0 0
    %1535 = vmatprep.subr.bf16.mxu0 0
    %1536 = vmatpush1.bf16.xpose.msra.mxu0 0
    %1537 = vmatprep.subr.bf16.mxu0 0
    %1538 = vmatpush1.bf16.xpose.msra.mxu0 0
    %1539 = vmatprep.subr.bf16.mxu0 0
    %1540 = vmatpush1.bf16.xpose.msra.mxu0 0
    %1541 = vmatprep.subr.bf16.mxu0 0
    %1542 = vmatpush1.bf16.xpose.msra.mxu0 0
    %1543 = vmatprep.subr.bf16.mxu0 0
    %1544 = vmatpush1.bf16.xpose.msra.mxu0 0
    %1545 = vmatprep.subr.bf16.mxu0 0
    %1546 = vmatpush1.bf16.xpose.msra.mxu0 0
    %1547 = vmatprep.subr.bf16.mxu0 0
    %1548 = vmatpush1.bf16.xpose.msra.mxu0 0
    %1549 = vmatprep.subr.bf16.mxu0 0
    %1550 = vmatpush1.bf16.xpose.msra.mxu0 0
    %1551 = vmatprep.subr.bf16.mxu0 0
    %1552 = vmatpush1.bf16.xpose.msra.mxu0 0
    %1553 = vmatprep.subr.bf16.mxu0 0
    %1554 = vmatpush1.bf16.xpose.msra.mxu0 0
    %1555 = vmatprep.subr.bf16.mxu0 0
    %1556 = vmatpush1.bf16.xpose.msra.mxu0 0
    %1557 = vmatprep.subr.bf16.mxu0 0
    %1558 = vmatpush1.bf16.xpose.msra.mxu0 0
    %1559 = vmatprep.subr.bf16.mxu0 0
    %1560 = vmatpush1.bf16.xpose.msra.mxu0 0
    %1561 = vmatprep.mubr.bf16.mxu0 0
    %1562 = vmatmul.mubr.bf16.gmra.mrb[0].mxu0 %v1524
    %v1563 = vpop.f32.mrb[0].mxu0
    %v1564 = vadd.f32 0.0, %v1563
    %v1565 = vpop.f32.mrb[0].mxu0
    %v1566 = vpop.f32.mrb[0].mxu0
    %v1567 = vpop.f32.mrb[0].mxu0
    %1568 = vdwg.mxu0
    %1569 = vrot.lane.b32.xlu0 %v500, 120
    %v1570 = vpop.permute.xlu0 %1569
    %v1571 = vrot.slane %v1570, 4
    %v1572 = vpack.c.b16 %v479, %v479
    %1573 = vrot.lane.b32.xlu0 %v1572, 120
    %v1574 = vpop.permute.xlu0 %1573
    %v1576 = vsel %vm511, %v1574, 0
    %v1579 = vsel %vm511, %v1571, 0
    %1581 = vmatprep.subr.bf16.mxu0 0
    %1582 = vmatpush1.bf16.xpose.msra.mxu0 %v1579
    %1583 = vmatprep.subr.bf16.mxu0 0
    %1584 = vmatpush1.bf16.xpose.msra.mxu0 0
    %1585 = vmatprep.subr.bf16.mxu0 0
    %1586 = vmatpush1.bf16.xpose.msra.mxu0 0
    %1587 = vmatprep.subr.bf16.mxu0 0
    %1588 = vmatpush1.bf16.xpose.msra.mxu0 0
    %1589 = vmatprep.subr.bf16.mxu0 0
    %1590 = vmatpush1.bf16.xpose.msra.mxu0 0
    %1591 = vmatprep.subr.bf16.mxu0 0
    %1592 = vmatpush1.bf16.xpose.msra.mxu0 0
    %1593 = vmatprep.subr.bf16.mxu0 0
    %1594 = vmatpush1.bf16.xpose.msra.mxu0 0
    %1595 = vmatprep.subr.bf16.mxu0 0
    %1596 = vmatpush1.bf16.xpose.msra.mxu0 0
    %1597 = vmatprep.subr.bf16.mxu0 0
    %1598 = vmatpush1.bf16.xpose.msra.mxu0 0
    %1599 = vmatprep.subr.bf16.mxu0 0
    %1600 = vmatpush1.bf16.xpose.msra.mxu0 0
    %1601 = vmatprep.subr.bf16.mxu0 0
    %1602 = vmatpush1.bf16.xpose.msra.mxu0 0
    %1603 = vmatprep.subr.bf16.mxu0 0
    %1604 = vmatpush1.bf16.xpose.msra.mxu0 0
    %1605 = vmatprep.subr.bf16.mxu0 0
    %1606 = vmatpush1.bf16.xpose.msra.mxu0 0
    %1607 = vmatprep.subr.bf16.mxu0 0
    %1608 = vmatpush1.bf16.xpose.msra.mxu0 0
    %1609 = vmatprep.subr.bf16.mxu0 0
    %1610 = vmatpush1.bf16.xpose.msra.mxu0 0
    %1611 = vmatprep.subr.bf16.mxu0 0
    %1612 = vmatpush1.bf16.xpose.msra.mxu0 0
    %1613 = vmatprep.mubr.bf16.mxu0 0
    %1614 = vmatmul.mubr.bf16.gmra.mrb[0].mxu0 %v1576
    %v1615 = vpop.f32.mrb[0].mxu0
    %v1616 = vadd.f32 0.0, %v1615
    %v1617 = vpop.f32.mrb[0].mxu0
    %v1618 = vpop.f32.mrb[0].mxu0
    %v1619 = vpop.f32.mrb[0].mxu0
    %1620 = vdwg.mxu0
    %1621 = vrot.lane.b32.xlu0 %v502, 120
    %v1622 = vpop.permute.xlu0 %1621
    %v1623 = vrot.slane %v1622, 4
    %v1624 = vpack.c.b16 %v482, %v482
    %1625 = vrot.lane.b32.xlu0 %v1624, 120
    %v1626 = vpop.permute.xlu0 %1625
    %v1628 = vsel %vm511, %v1626, 0
    %v1631 = vsel %vm511, %v1623, 0
    %1633 = vmatprep.subr.bf16.mxu0 0
    %1634 = vmatpush1.bf16.xpose.msra.mxu0 %v1631
    %1635 = vmatprep.subr.bf16.mxu0 0
    %1636 = vmatpush1.bf16.xpose.msra.mxu0 0
    %1637 = vmatprep.subr.bf16.mxu0 0
    %1638 = vmatpush1.bf16.xpose.msra.mxu0 0
    %1639 = vmatprep.subr.bf16.mxu0 0
    %1640 = vmatpush1.bf16.xpose.msra.mxu0 0
    %1641 = vmatprep.subr.bf16.mxu0 0
    %1642 = vmatpush1.bf16.xpose.msra.mxu0 0
    %1643 = vmatprep.subr.bf16.mxu0 0
    %1644 = vmatpush1.bf16.xpose.msra.mxu0 0
    %1645 = vmatprep.subr.bf16.mxu0 0
    %1646 = vmatpush1.bf16.xpose.msra.mxu0 0
    %1647 = vmatprep.subr.bf16.mxu0 0
    %1648 = vmatpush1.bf16.xpose.msra.mxu0 0
    %1649 = vmatprep.subr.bf16.mxu0 0
    %1650 = vmatpush1.bf16.xpose.msra.mxu0 0
    %1651 = vmatprep.subr.bf16.mxu0 0
    %1652 = vmatpush1.bf16.xpose.msra.mxu0 0
    %1653 = vmatprep.subr.bf16.mxu0 0
    %1654 = vmatpush1.bf16.xpose.msra.mxu0 0
    %1655 = vmatprep.subr.bf16.mxu0 0
    %1656 = vmatpush1.bf16.xpose.msra.mxu0 0
    %1657 = vmatprep.subr.bf16.mxu0 0
    %1658 = vmatpush1.bf16.xpose.msra.mxu0 0
    %1659 = vmatprep.subr.bf16.mxu0 0
    %1660 = vmatpush1.bf16.xpose.msra.mxu0 0
    %1661 = vmatprep.subr.bf16.mxu0 0
    %1662 = vmatpush1.bf16.xpose.msra.mxu0 0
    %1663 = vmatprep.subr.bf16.mxu0 0
    %1664 = vmatpush1.bf16.xpose.msra.mxu0 0
    %1665 = vmatprep.mubr.bf16.mxu0 0
    %1666 = vmatmul.mubr.bf16.gmra.mrb[0].mxu0 %v1628
    %v1667 = vpop.f32.mrb[0].mxu0
    %v1668 = vadd.f32 0.0, %v1667
    %v1669 = vpop.f32.mrb[0].mxu0
    %v1670 = vpop.f32.mrb[0].mxu0
    %v1671 = vpop.f32.mrb[0].mxu0
    %1672 = vdwg.mxu0
    %1673 = vrot.lane.b32.xlu0 %v504, 120
    %v1674 = vpop.permute.xlu0 %1673
    %v1675 = vrot.slane %v1674, 4
    %v1676 = vpack.c.b16 %v485, %v485
    %1677 = vrot.lane.b32.xlu0 %v1676, 120
    %v1678 = vpop.permute.xlu0 %1677
    %v1680 = vsel %vm511, %v1678, 0
    %v1683 = vsel %vm511, %v1675, 0
    %1685 = vmatprep.subr.bf16.mxu0 0
    %1686 = vmatpush1.bf16.xpose.msra.mxu0 %v1683
    %1687 = vmatprep.subr.bf16.mxu0 0
    %1688 = vmatpush1.bf16.xpose.msra.mxu0 0
    %1689 = vmatprep.subr.bf16.mxu0 0
    %1690 = vmatpush1.bf16.xpose.msra.mxu0 0
    %1691 = vmatprep.subr.bf16.mxu0 0
    %1692 = vmatpush1.bf16.xpose.msra.mxu0 0
    %1693 = vmatprep.subr.bf16.mxu0 0
    %1694 = vmatpush1.bf16.xpose.msra.mxu0 0
    %1695 = vmatprep.subr.bf16.mxu0 0
    %1696 = vmatpush1.bf16.xpose.msra.mxu0 0
    %1697 = vmatprep.subr.bf16.mxu0 0
    %1698 = vmatpush1.bf16.xpose.msra.mxu0 0
    %1699 = vmatprep.subr.bf16.mxu0 0
    %1700 = vmatpush1.bf16.xpose.msra.mxu0 0
    %1701 = vmatprep.subr.bf16.mxu0 0
    %1702 = vmatpush1.bf16.xpose.msra.mxu0 0
    %1703 = vmatprep.subr.bf16.mxu0 0
    %1704 = vmatpush1.bf16.xpose.msra.mxu0 0
    %1705 = vmatprep.subr.bf16.mxu0 0
    %1706 = vmatpush1.bf16.xpose.msra.mxu0 0
    %1707 = vmatprep.subr.bf16.mxu0 0
    %1708 = vmatpush1.bf16.xpose.msra.mxu0 0
    %1709 = vmatprep.subr.bf16.mxu0 0
    %1710 = vmatpush1.bf16.xpose.msra.mxu0 0
    %1711 = vmatprep.subr.bf16.mxu0 0
    %1712 = vmatpush1.bf16.xpose.msra.mxu0 0
    %1713 = vmatprep.subr.bf16.mxu0 0
    %1714 = vmatpush1.bf16.xpose.msra.mxu0 0
    %1715 = vmatprep.subr.bf16.mxu0 0
    %1716 = vmatpush1.bf16.xpose.msra.mxu0 0
    %1717 = vmatprep.mubr.bf16.mxu0 0
    %1718 = vmatmul.mubr.bf16.gmra.mrb[0].mxu0 %v1680
    %v1719 = vpop.f32.mrb[0].mxu0
    %v1720 = vadd.f32 0.0, %v1719
    %v1721 = vpop.f32.mrb[0].mxu0
    %v1722 = vpop.f32.mrb[0].mxu0
    %v1723 = vpop.f32.mrb[0].mxu0
    %1724 = vdwg.mxu0
    %1725 = vrot.lane.b32.xlu0 %v506, 120
    %v1726 = vpop.permute.xlu0 %1725
    %v1727 = vrot.slane %v1726, 4
    %v1728 = vpack.c.b16 %v488, %v488
    %1729 = vrot.lane.b32.xlu0 %v1728, 120
    %v1730 = vpop.permute.xlu0 %1729
    %v1732 = vsel %vm511, %v1730, 0
    %v1735 = vsel %vm511, %v1727, 0
    %1737 = vmatprep.subr.bf16.mxu0 0
    %1738 = vmatpush1.bf16.xpose.msra.mxu0 %v1735
    %1739 = vmatprep.subr.bf16.mxu0 0
    %1740 = vmatpush1.bf16.xpose.msra.mxu0 0
    %1741 = vmatprep.subr.bf16.mxu0 0
    %1742 = vmatpush1.bf16.xpose.msra.mxu0 0
    %1743 = vmatprep.subr.bf16.mxu0 0
    %1744 = vmatpush1.bf16.xpose.msra.mxu0 0
    %1745 = vmatprep.subr.bf16.mxu0 0
    %1746 = vmatpush1.bf16.xpose.msra.mxu0 0
    %1747 = vmatprep.subr.bf16.mxu0 0
    %1748 = vmatpush1.bf16.xpose.msra.mxu0 0
    %1749 = vmatprep.subr.bf16.mxu0 0
    %1750 = vmatpush1.bf16.xpose.msra.mxu0 0
    %1751 = vmatprep.subr.bf16.mxu0 0
    %1752 = vmatpush1.bf16.xpose.msra.mxu0 0
    %1753 = vmatprep.subr.bf16.mxu0 0
    %1754 = vmatpush1.bf16.xpose.msra.mxu0 0
    %1755 = vmatprep.subr.bf16.mxu0 0
    %1756 = vmatpush1.bf16.xpose.msra.mxu0 0
    %1757 = vmatprep.subr.bf16.mxu0 0
    %1758 = vmatpush1.bf16.xpose.msra.mxu0 0
    %1759 = vmatprep.subr.bf16.mxu0 0
    %1760 = vmatpush1.bf16.xpose.msra.mxu0 0
    %1761 = vmatprep.subr.bf16.mxu0 0
    %1762 = vmatpush1.bf16.xpose.msra.mxu0 0
    %1763 = vmatprep.subr.bf16.mxu0 0
    %1764 = vmatpush1.bf16.xpose.msra.mxu0 0
    %1765 = vmatprep.subr.bf16.mxu0 0
    %1766 = vmatpush1.bf16.xpose.msra.mxu0 0
    %1767 = vmatprep.subr.bf16.mxu0 0
    %1768 = vmatpush1.bf16.xpose.msra.mxu0 0
    %1769 = vmatprep.mubr.bf16.mxu0 0
    %1770 = vmatmul.mubr.bf16.gmra.mrb[0].mxu0 %v1732
    %v1771 = vpop.f32.mrb[0].mxu0
    %v1772 = vadd.f32 0.0, %v1771
    %v1773 = vpop.f32.mrb[0].mxu0
    %v1774 = vpop.f32.mrb[0].mxu0
    %v1775 = vpop.f32.mrb[0].mxu0
    %1776 = vdwg.mxu0
    %1777 = vrot.lane.b32.xlu0 %v508, 120
    %v1778 = vpop.permute.xlu0 %1777
    %v1779 = vrot.slane %v1778, 4
    %v1780 = vpack.c.b16 %v491, %v491
    %1781 = vrot.lane.b32.xlu0 %v1780, 120
    %v1782 = vpop.permute.xlu0 %1781
    %v1784 = vsel %vm511, %v1782, 0
    %v1787 = vsel %vm511, %v1779, 0
    %1789 = vmatprep.subr.bf16.mxu0 0
    %1790 = vmatpush1.bf16.xpose.msra.mxu0 %v1787
    %1791 = vmatprep.subr.bf16.mxu0 0
    %1792 = vmatpush1.bf16.xpose.msra.mxu0 0
    %1793 = vmatprep.subr.bf16.mxu0 0
    %1794 = vmatpush1.bf16.xpose.msra.mxu0 0
    %1795 = vmatprep.subr.bf16.mxu0 0
    %1796 = vmatpush1.bf16.xpose.msra.mxu0 0
    %1797 = vmatprep.subr.bf16.mxu0 0
    %1798 = vmatpush1.bf16.xpose.msra.mxu0 0
    %1799 = vmatprep.subr.bf16.mxu0 0
    %1800 = vmatpush1.bf16.xpose.msra.mxu0 0
    %1801 = vmatprep.subr.bf16.mxu0 0
    %1802 = vmatpush1.bf16.xpose.msra.mxu0 0
    %1803 = vmatprep.subr.bf16.mxu0 0
    %1804 = vmatpush1.bf16.xpose.msra.mxu0 0
    %1805 = vmatprep.subr.bf16.mxu0 0
    %1806 = vmatpush1.bf16.xpose.msra.mxu0 0
    %1807 = vmatprep.subr.bf16.mxu0 0
    %1808 = vmatpush1.bf16.xpose.msra.mxu0 0
    %1809 = vmatprep.subr.bf16.mxu0 0
    %1810 = vmatpush1.bf16.xpose.msra.mxu0 0
    %1811 = vmatprep.subr.bf16.mxu0 0
    %1812 = vmatpush1.bf16.xpose.msra.mxu0 0
    %1813 = vmatprep.subr.bf16.mxu0 0
    %1814 = vmatpush1.bf16.xpose.msra.mxu0 0
    %1815 = vmatprep.subr.bf16.mxu0 0
    %1816 = vmatpush1.bf16.xpose.msra.mxu0 0
    %1817 = vmatprep.subr.bf16.mxu0 0
    %1818 = vmatpush1.bf16.xpose.msra.mxu0 0
    %1819 = vmatprep.subr.bf16.mxu0 0
    %1820 = vmatpush1.bf16.xpose.msra.mxu0 0
    %1821 = vmatprep.mubr.bf16.mxu0 0
    %1822 = vmatmul.mubr.bf16.gmra.mrb[0].mxu0 %v1784
    %v1823 = vpop.f32.mrb[0].mxu0
    %v1824 = vadd.f32 0.0, %v1823
    %v1825 = vpop.f32.mrb[0].mxu0
    %v1826 = vpop.f32.mrb[0].mxu0
    %v1827 = vpop.f32.mrb[0].mxu0
    %1828 = vdwg.mxu0
    %v1829 = vsel %vm511, %v1460, -inf
    %1830 = vmax.xlane.f32.xlu0 %v1829
    %v1831 = vpop.xlane.xlu0 %1830
    %v1832 = vsel %vm511, %v1512, -inf
    %1833 = vmax.xlane.f32.xlu0 %v1832
    %v1834 = vpop.xlane.xlu0 %1833
    %v1835 = vsel %vm511, %v1564, -inf
    %1836 = vmax.xlane.f32.xlu0 %v1835
    %v1837 = vpop.xlane.xlu0 %1836
    %v1838 = vsel %vm511, %v1616, -inf
    %1839 = vmax.xlane.f32.xlu0 %v1838
    %v1840 = vpop.xlane.xlu0 %1839
    %v1841 = vsel %vm511, %v1668, -inf
    %1842 = vmax.xlane.f32.xlu0 %v1841
    %v1843 = vpop.xlane.xlu0 %1842
    %v1844 = vsel %vm511, %v1720, -inf
    %1845 = vmax.xlane.f32.xlu0 %v1844
    %v1846 = vpop.xlane.xlu0 %1845
    %v1847 = vsel %vm511, %v1772, -inf
    %1848 = vmax.xlane.f32.xlu0 %v1847
    %v1849 = vpop.xlane.xlu0 %1848
    %v1850 = vsel %vm511, %v1824, -inf
    %1851 = vmax.xlane.f32.xlu0 %v1850
    %v1852 = vpop.xlane.xlu0 %1851
    %v1853 = vsub.f32 %v1460, %v1831
    %v1854 = vsub.f32 %v1512, %v1834
    %v1855 = vsub.f32 %v1564, %v1837
    %v1856 = vsub.f32 %v1616, %v1840
    %v1857 = vsub.f32 %v1668, %v1843
    %v1858 = vsub.f32 %v1720, %v1846
    %v1859 = vsub.f32 %v1772, %v1849
    %v1860 = vsub.f32 %v1824, %v1852
    %v1861 = vmul.f32 %v1853, 1.442695
    %v1862 = vpow.pop %v1861
    %v1863 = vmul.f32 %v1854, 1.442695
    %v1864 = vpow.pop %v1863
    %v1865 = vmul.f32 %v1855, 1.442695
    %v1866 = vpow.pop %v1865
    %v1867 = vmul.f32 %v1856, 1.442695
    %v1868 = vpow.pop %v1867
    %v1869 = vmul.f32 %v1857, 1.442695
    %v1870 = vpow.pop %v1869
    %v1871 = vmul.f32 %v1858, 1.442695
    %v1872 = vpow.pop %v1871
    %v1873 = vmul.f32 %v1859, 1.442695
    %v1874 = vpow.pop %v1873
    %v1875 = vmul.f32 %v1860, 1.442695
    %v1876 = vpow.pop %v1875
    %v1877 = vsel %vm511, %v1862, 0.0
    %1878 = vadd.xlane.f32.xlu0 %v1877
    %v1879 = vpop.xlane.xlu0 %1878
    %v1880 = vsel %vm511, %v1864, 0.0
    %1881 = vadd.xlane.f32.xlu0 %v1880
    %v1882 = vpop.xlane.xlu0 %1881
    %v1883 = vsel %vm511, %v1866, 0.0
    %1884 = vadd.xlane.f32.xlu0 %v1883
    %v1885 = vpop.xlane.xlu0 %1884
    %v1886 = vsel %vm511, %v1868, 0.0
    %1887 = vadd.xlane.f32.xlu0 %v1886
    %v1888 = vpop.xlane.xlu0 %1887
    %v1889 = vsel %vm511, %v1870, 0.0
    %1890 = vadd.xlane.f32.xlu0 %v1889
    %v1891 = vpop.xlane.xlu0 %1890
    %v1892 = vsel %vm511, %v1872, 0.0
    %1893 = vadd.xlane.f32.xlu0 %v1892
    %v1894 = vpop.xlane.xlu0 %1893
    %v1895 = vsel %vm511, %v1874, 0.0
    %1896 = vadd.xlane.f32.xlu0 %v1895
    %v1897 = vpop.xlane.xlu0 %1896
    %v1898 = vsel %vm511, %v1876, 0.0
    %1899 = vadd.xlane.f32.xlu0 %v1898
    %v1900 = vpop.xlane.xlu0 %1899
    %v1901 = vrcp.pop %v1879
    %v1902 = vrcp.pop %v1882
    %v1903 = vrcp.pop %v1885
    %v1904 = vrcp.pop %v1888
    %v1905 = vrcp.pop %v1891
    %v1906 = vrcp.pop %v1894
    %v1907 = vrcp.pop %v1897
    %v1908 = vrcp.pop %v1900
    %v1909 = vmul.f32 %v1862, %v1901
    %v1910 = vmul.f32 %v1864, %v1902
    %v1911 = vmul.f32 %v1866, %v1903
    %v1912 = vmul.f32 %v1868, %v1904
    %v1913 = vmul.f32 %v1870, %v1905
    %v1914 = vmul.f32 %v1872, %v1906
    %v1915 = vmul.f32 %v1874, %v1907
    %v1916 = vmul.f32 %v1876, %v1908
    %v1917 = vpack.c.bf16 %v1909, %v1909
    %v1918 = vpack.c.bf16 %v1910, %v1910
    %v1919 = vpack.c.bf16 %v1911, %v1911
    %v1920 = vpack.c.bf16 %v1912, %v1912
    %v1921 = vpack.c.bf16 %v1913, %v1913
    %v1922 = vpack.c.bf16 %v1914, %v1914
    %v1923 = vpack.c.bf16 %v1915, %v1915
    %v1924 = vpack.c.bf16 %v1916, %v1916
    %1925 = vrot.lane.b32.xlu0 %v495, 120
    %v1926 = vpop.permute.xlu0 %1925
    %v1928 = vsel %vm511, %v1917, 0
    %v1931 = vsel %vm986, %v1926, 0
    %1933 = vmatprep.subr.bf16.mxu0 0
    %1934 = vmatpush1.bf16.msra.mxu0 %v1931
    %1935 = vmatprep.subr.bf16.mxu0 0
    %1936 = vmatpush1.bf16.msra.mxu0 0
    %1937 = vmatprep.subr.bf16.mxu0 0
    %1938 = vmatpush1.bf16.msra.mxu0 0
    %1939 = vmatprep.subr.bf16.mxu0 0
    %1940 = vmatpush1.bf16.msra.mxu0 0
    %1941 = vmatprep.subr.bf16.mxu0 0
    %1942 = vmatpush1.bf16.msra.mxu0 0
    %1943 = vmatprep.subr.bf16.mxu0 0
    %1944 = vmatpush1.bf16.msra.mxu0 0
    %1945 = vmatprep.subr.bf16.mxu0 0
    %1946 = vmatpush1.bf16.msra.mxu0 0
    %1947 = vmatprep.subr.bf16.mxu0 0
    %1948 = vmatpush1.bf16.msra.mxu0 0
    %1949 = vmatprep.subr.bf16.mxu0 0
    %1950 = vmatpush1.bf16.msra.mxu0 0
    %1951 = vmatprep.subr.bf16.mxu0 0
    %1952 = vmatpush1.bf16.msra.mxu0 0
    %1953 = vmatprep.subr.bf16.mxu0 0
    %1954 = vmatpush1.bf16.msra.mxu0 0
    %1955 = vmatprep.subr.bf16.mxu0 0
    %1956 = vmatpush1.bf16.msra.mxu0 0
    %1957 = vmatprep.subr.bf16.mxu0 0
    %1958 = vmatpush1.bf16.msra.mxu0 0
    %1959 = vmatprep.subr.bf16.mxu0 0
    %1960 = vmatpush1.bf16.msra.mxu0 0
    %1961 = vmatprep.subr.bf16.mxu0 0
    %1962 = vmatpush1.bf16.msra.mxu0 0
    %1963 = vmatprep.subr.bf16.mxu0 0
    %1964 = vmatpush1.bf16.msra.mxu0 0
    %1965 = vmatprep.mubr.bf16.mxu0 0
    %1966 = vmatmul.mubr.bf16.gmra.mrb[0].mxu0 %v1928
    %v1967 = vpop.f32.mrb[0].mxu0
    %v1968 = vadd.f32 0.0, %v1967
    %v1969 = vpop.f32.mrb[0].mxu0
    %v1970 = vpop.f32.mrb[0].mxu0
    %v1971 = vpop.f32.mrb[0].mxu0
    %1972 = vdwg.mxu0
    %1973 = vrot.lane.b32.xlu0 %v497, 120
    %v1974 = vpop.permute.xlu0 %1973
    %v1976 = vsel %vm511, %v1918, 0
    %v1979 = vsel %vm986, %v1974, 0
    %1981 = vmatprep.subr.bf16.mxu0 0
    %1982 = vmatpush1.bf16.msra.mxu0 %v1979
    %1983 = vmatprep.subr.bf16.mxu0 0
    %1984 = vmatpush1.bf16.msra.mxu0 0
    %1985 = vmatprep.subr.bf16.mxu0 0
    %1986 = vmatpush1.bf16.msra.mxu0 0
    %1987 = vmatprep.subr.bf16.mxu0 0
    %1988 = vmatpush1.bf16.msra.mxu0 0
    %1989 = vmatprep.subr.bf16.mxu0 0
    %1990 = vmatpush1.bf16.msra.mxu0 0
    %1991 = vmatprep.subr.bf16.mxu0 0
    %1992 = vmatpush1.bf16.msra.mxu0 0
    %1993 = vmatprep.subr.bf16.mxu0 0
    %1994 = vmatpush1.bf16.msra.mxu0 0
    %1995 = vmatprep.subr.bf16.mxu0 0
    %1996 = vmatpush1.bf16.msra.mxu0 0
    %1997 = vmatprep.subr.bf16.mxu0 0
    %1998 = vmatpush1.bf16.msra.mxu0 0
    %1999 = vmatprep.subr.bf16.mxu0 0
    %2000 = vmatpush1.bf16.msra.mxu0 0
    %2001 = vmatprep.subr.bf16.mxu0 0
    %2002 = vmatpush1.bf16.msra.mxu0 0
    %2003 = vmatprep.subr.bf16.mxu0 0
    %2004 = vmatpush1.bf16.msra.mxu0 0
    %2005 = vmatprep.subr.bf16.mxu0 0
    %2006 = vmatpush1.bf16.msra.mxu0 0
    %2007 = vmatprep.subr.bf16.mxu0 0
    %2008 = vmatpush1.bf16.msra.mxu0 0
    %2009 = vmatprep.subr.bf16.mxu0 0
    %2010 = vmatpush1.bf16.msra.mxu0 0
    %2011 = vmatprep.subr.bf16.mxu0 0
    %2012 = vmatpush1.bf16.msra.mxu0 0
    %2013 = vmatprep.mubr.bf16.mxu0 0
    %2014 = vmatmul.mubr.bf16.gmra.mrb[0].mxu0 %v1976
    %v2015 = vpop.f32.mrb[0].mxu0
    %v2016 = vadd.f32 0.0, %v2015
    %v2017 = vpop.f32.mrb[0].mxu0
    %v2018 = vpop.f32.mrb[0].mxu0
    %v2019 = vpop.f32.mrb[0].mxu0
    %2020 = vdwg.mxu0
    %2021 = vrot.lane.b32.xlu0 %v499, 120
    %v2022 = vpop.permute.xlu0 %2021
    %v2024 = vsel %vm511, %v1919, 0
    %v2027 = vsel %vm986, %v2022, 0
    %2029 = vmatprep.subr.bf16.mxu0 0
    %2030 = vmatpush1.bf16.msra.mxu0 %v2027
    %2031 = vmatprep.subr.bf16.mxu0 0
    %2032 = vmatpush1.bf16.msra.mxu0 0
    %2033 = vmatprep.subr.bf16.mxu0 0
    %2034 = vmatpush1.bf16.msra.mxu0 0
    %2035 = vmatprep.subr.bf16.mxu0 0
    %2036 = vmatpush1.bf16.msra.mxu0 0
    %2037 = vmatprep.subr.bf16.mxu0 0
    %2038 = vmatpush1.bf16.msra.mxu0 0
    %2039 = vmatprep.subr.bf16.mxu0 0
    %2040 = vmatpush1.bf16.msra.mxu0 0
    %2041 = vmatprep.subr.bf16.mxu0 0
    %2042 = vmatpush1.bf16.msra.mxu0 0
    %2043 = vmatprep.subr.bf16.mxu0 0
    %2044 = vmatpush1.bf16.msra.mxu0 0
    %2045 = vmatprep.subr.bf16.mxu0 0
    %2046 = vmatpush1.bf16.msra.mxu0 0
    %2047 = vmatprep.subr.bf16.mxu0 0
    %2048 = vmatpush1.bf16.msra.mxu0 0
    %2049 = vmatprep.subr.bf16.mxu0 0
    %2050 = vmatpush1.bf16.msra.mxu0 0
    %2051 = vmatprep.subr.bf16.mxu0 0
    %2052 = vmatpush1.bf16.msra.mxu0 0
    %2053 = vmatprep.subr.bf16.mxu0 0
    %2054 = vmatpush1.bf16.msra.mxu0 0
    %2055 = vmatprep.subr.bf16.mxu0 0
    %2056 = vmatpush1.bf16.msra.mxu0 0
    %2057 = vmatprep.subr.bf16.mxu0 0
    %2058 = vmatpush1.bf16.msra.mxu0 0
    %2059 = vmatprep.subr.bf16.mxu0 0
    %2060 = vmatpush1.bf16.msra.mxu0 0
    %2061 = vmatprep.mubr.bf16.mxu0 0
    %2062 = vmatmul.mubr.bf16.gmra.mrb[0].mxu0 %v2024
    %v2063 = vpop.f32.mrb[0].mxu0
    %v2064 = vadd.f32 0.0, %v2063
    %v2065 = vpop.f32.mrb[0].mxu0
    %v2066 = vpop.f32.mrb[0].mxu0
    %v2067 = vpop.f32.mrb[0].mxu0
    %2068 = vdwg.mxu0
    %2069 = vrot.lane.b32.xlu0 %v501, 120
    %v2070 = vpop.permute.xlu0 %2069
    %v2072 = vsel %vm511, %v1920, 0
    %v2075 = vsel %vm986, %v2070, 0
    %2077 = vmatprep.subr.bf16.mxu0 0
    %2078 = vmatpush1.bf16.msra.mxu0 %v2075
    %2079 = vmatprep.subr.bf16.mxu0 0
    %2080 = vmatpush1.bf16.msra.mxu0 0
    %2081 = vmatprep.subr.bf16.mxu0 0
    %2082 = vmatpush1.bf16.msra.mxu0 0
    %2083 = vmatprep.subr.bf16.mxu0 0
    %2084 = vmatpush1.bf16.msra.mxu0 0
    %2085 = vmatprep.subr.bf16.mxu0 0
    %2086 = vmatpush1.bf16.msra.mxu0 0
    %2087 = vmatprep.subr.bf16.mxu0 0
    %2088 = vmatpush1.bf16.msra.mxu0 0
    %2089 = vmatprep.subr.bf16.mxu0 0
    %2090 = vmatpush1.bf16.msra.mxu0 0
    %2091 = vmatprep.subr.bf16.mxu0 0
    %2092 = vmatpush1.bf16.msra.mxu0 0
    %2093 = vmatprep.subr.bf16.mxu0 0
    %2094 = vmatpush1.bf16.msra.mxu0 0
    %2095 = vmatprep.subr.bf16.mxu0 0
    %2096 = vmatpush1.bf16.msra.mxu0 0
    %2097 = vmatprep.subr.bf16.mxu0 0
    %2098 = vmatpush1.bf16.msra.mxu0 0
    %2099 = vmatprep.subr.bf16.mxu0 0
    %2100 = vmatpush1.bf16.msra.mxu0 0
    %2101 = vmatprep.subr.bf16.mxu0 0
    %2102 = vmatpush1.bf16.msra.mxu0 0
    %2103 = vmatprep.subr.bf16.mxu0 0
    %2104 = vmatpush1.bf16.msra.mxu0 0
    %2105 = vmatprep.subr.bf16.mxu0 0
    %2106 = vmatpush1.bf16.msra.mxu0 0
    %2107 = vmatprep.subr.bf16.mxu0 0
    %2108 = vmatpush1.bf16.msra.mxu0 0
    %2109 = vmatprep.mubr.bf16.mxu0 0
    %2110 = vmatmul.mubr.bf16.gmra.mrb[0].mxu0 %v2072
    %v2111 = vpop.f32.mrb[0].mxu0
    %v2112 = vadd.f32 0.0, %v2111
    %v2113 = vpop.f32.mrb[0].mxu0
    %v2114 = vpop.f32.mrb[0].mxu0
    %v2115 = vpop.f32.mrb[0].mxu0
    %2116 = vdwg.mxu0
    %2117 = vrot.lane.b32.xlu0 %v503, 120
    %v2118 = vpop.permute.xlu0 %2117
    %v2120 = vsel %vm511, %v1921, 0
    %v2123 = vsel %vm986, %v2118, 0
    %2125 = vmatprep.subr.bf16.mxu0 0
    %2126 = vmatpush1.bf16.msra.mxu0 %v2123
    %2127 = vmatprep.subr.bf16.mxu0 0
    %2128 = vmatpush1.bf16.msra.mxu0 0
    %2129 = vmatprep.subr.bf16.mxu0 0
    %2130 = vmatpush1.bf16.msra.mxu0 0
    %2131 = vmatprep.subr.bf16.mxu0 0
    %2132 = vmatpush1.bf16.msra.mxu0 0
    %2133 = vmatprep.subr.bf16.mxu0 0
    %2134 = vmatpush1.bf16.msra.mxu0 0
    %2135 = vmatprep.subr.bf16.mxu0 0
    %2136 = vmatpush1.bf16.msra.mxu0 0
    %2137 = vmatprep.subr.bf16.mxu0 0
    %2138 = vmatpush1.bf16.msra.mxu0 0
    %2139 = vmatprep.subr.bf16.mxu0 0
    %2140 = vmatpush1.bf16.msra.mxu0 0
    %2141 = vmatprep.subr.bf16.mxu0 0
    %2142 = vmatpush1.bf16.msra.mxu0 0
    %2143 = vmatprep.subr.bf16.mxu0 0
    %2144 = vmatpush1.bf16.msra.mxu0 0
    %2145 = vmatprep.subr.bf16.mxu0 0
    %2146 = vmatpush1.bf16.msra.mxu0 0
    %2147 = vmatprep.subr.bf16.mxu0 0
    %2148 = vmatpush1.bf16.msra.mxu0 0
    %2149 = vmatprep.subr.bf16.mxu0 0
    %2150 = vmatpush1.bf16.msra.mxu0 0
    %2151 = vmatprep.subr.bf16.mxu0 0
    %2152 = vmatpush1.bf16.msra.mxu0 0
    %2153 = vmatprep.subr.bf16.mxu0 0
    %2154 = vmatpush1.bf16.msra.mxu0 0
    %2155 = vmatprep.subr.bf16.mxu0 0
    %2156 = vmatpush1.bf16.msra.mxu0 0
    %2157 = vmatprep.mubr.bf16.mxu0 0
    %2158 = vmatmul.mubr.bf16.gmra.mrb[0].mxu0 %v2120
    %v2159 = vpop.f32.mrb[0].mxu0
    %v2160 = vadd.f32 0.0, %v2159
    %v2161 = vpop.f32.mrb[0].mxu0
    %v2162 = vpop.f32.mrb[0].mxu0
    %v2163 = vpop.f32.mrb[0].mxu0
    %2164 = vdwg.mxu0
    %2165 = vrot.lane.b32.xlu0 %v505, 120
    %v2166 = vpop.permute.xlu0 %2165
    %v2168 = vsel %vm511, %v1922, 0
    %v2171 = vsel %vm986, %v2166, 0
    %2173 = vmatprep.subr.bf16.mxu0 0
    %2174 = vmatpush1.bf16.msra.mxu0 %v2171
    %2175 = vmatprep.subr.bf16.mxu0 0
    %2176 = vmatpush1.bf16.msra.mxu0 0
    %2177 = vmatprep.subr.bf16.mxu0 0
    %2178 = vmatpush1.bf16.msra.mxu0 0
    %2179 = vmatprep.subr.bf16.mxu0 0
    %2180 = vmatpush1.bf16.msra.mxu0 0
    %2181 = vmatprep.subr.bf16.mxu0 0
    %2182 = vmatpush1.bf16.msra.mxu0 0
    %2183 = vmatprep.subr.bf16.mxu0 0
    %2184 = vmatpush1.bf16.msra.mxu0 0
    %2185 = vmatprep.subr.bf16.mxu0 0
    %2186 = vmatpush1.bf16.msra.mxu0 0
    %2187 = vmatprep.subr.bf16.mxu0 0
    %2188 = vmatpush1.bf16.msra.mxu0 0
    %2189 = vmatprep.subr.bf16.mxu0 0
    %2190 = vmatpush1.bf16.msra.mxu0 0
    %2191 = vmatprep.subr.bf16.mxu0 0
    %2192 = vmatpush1.bf16.msra.mxu0 0
    %2193 = vmatprep.subr.bf16.mxu0 0
    %2194 = vmatpush1.bf16.msra.mxu0 0
    %2195 = vmatprep.subr.bf16.mxu0 0
    %2196 = vmatpush1.bf16.msra.mxu0 0
    %2197 = vmatprep.subr.bf16.mxu0 0
    %2198 = vmatpush1.bf16.msra.mxu0 0
    %2199 = vmatprep.subr.bf16.mxu0 0
    %2200 = vmatpush1.bf16.msra.mxu0 0
    %2201 = vmatprep.subr.bf16.mxu0 0
    %2202 = vmatpush1.bf16.msra.mxu0 0
    %2203 = vmatprep.subr.bf16.mxu0 0
    %2204 = vmatpush1.bf16.msra.mxu0 0
    %2205 = vmatprep.mubr.bf16.mxu0 0
    %2206 = vmatmul.mubr.bf16.gmra.mrb[0].mxu0 %v2168
    %v2207 = vpop.f32.mrb[0].mxu0
    %v2208 = vadd.f32 0.0, %v2207
    %v2209 = vpop.f32.mrb[0].mxu0
    %v2210 = vpop.f32.mrb[0].mxu0
    %v2211 = vpop.f32.mrb[0].mxu0
    %2212 = vdwg.mxu0
    %2213 = vrot.lane.b32.xlu0 %v507, 120
    %v2214 = vpop.permute.xlu0 %2213
    %v2216 = vsel %vm511, %v1923, 0
    %v2219 = vsel %vm986, %v2214, 0
    %2221 = vmatprep.subr.bf16.mxu0 0
    %2222 = vmatpush1.bf16.msra.mxu0 %v2219
    %2223 = vmatprep.subr.bf16.mxu0 0
    %2224 = vmatpush1.bf16.msra.mxu0 0
    %2225 = vmatprep.subr.bf16.mxu0 0
    %2226 = vmatpush1.bf16.msra.mxu0 0
    %2227 = vmatprep.subr.bf16.mxu0 0
    %2228 = vmatpush1.bf16.msra.mxu0 0
    %2229 = vmatprep.subr.bf16.mxu0 0
    %2230 = vmatpush1.bf16.msra.mxu0 0
    %2231 = vmatprep.subr.bf16.mxu0 0
    %2232 = vmatpush1.bf16.msra.mxu0 0
    %2233 = vmatprep.subr.bf16.mxu0 0
    %2234 = vmatpush1.bf16.msra.mxu0 0
    %2235 = vmatprep.subr.bf16.mxu0 0
    %2236 = vmatpush1.bf16.msra.mxu0 0
    %2237 = vmatprep.subr.bf16.mxu0 0
    %2238 = vmatpush1.bf16.msra.mxu0 0
    %2239 = vmatprep.subr.bf16.mxu0 0
    %2240 = vmatpush1.bf16.msra.mxu0 0
    %2241 = vmatprep.subr.bf16.mxu0 0
    %2242 = vmatpush1.bf16.msra.mxu0 0
    %2243 = vmatprep.subr.bf16.mxu0 0
    %2244 = vmatpush1.bf16.msra.mxu0 0
    %2245 = vmatprep.subr.bf16.mxu0 0
    %2246 = vmatpush1.bf16.msra.mxu0 0
    %2247 = vmatprep.subr.bf16.mxu0 0
    %2248 = vmatpush1.bf16.msra.mxu0 0
    %2249 = vmatprep.subr.bf16.mxu0 0
    %2250 = vmatpush1.bf16.msra.mxu0 0
    %2251 = vmatprep.subr.bf16.mxu0 0
    %2252 = vmatpush1.bf16.msra.mxu0 0
    %2253 = vmatprep.mubr.bf16.mxu0 0
    %2254 = vmatmul.mubr.bf16.gmra.mrb[0].mxu0 %v2216
    %v2255 = vpop.f32.mrb[0].mxu0
    %v2256 = vadd.f32 0.0, %v2255
    %v2257 = vpop.f32.mrb[0].mxu0
    %v2258 = vpop.f32.mrb[0].mxu0
    %v2259 = vpop.f32.mrb[0].mxu0
    %2260 = vdwg.mxu0
    %2261 = vrot.lane.b32.xlu0 %v509, 120
    %v2262 = vpop.permute.xlu0 %2261
    %v2264 = vsel %vm511, %v1924, 0
    %v2267 = vsel %vm986, %v2262, 0
    %2269 = vmatprep.subr.bf16.mxu0 0
    %2270 = vmatpush1.bf16.msra.mxu0 %v2267
    %2271 = vmatprep.subr.bf16.mxu0 0
    %2272 = vmatpush1.bf16.msra.mxu0 0
    %2273 = vmatprep.subr.bf16.mxu0 0
    %2274 = vmatpush1.bf16.msra.mxu0 0
    %2275 = vmatprep.subr.bf16.mxu0 0
    %2276 = vmatpush1.bf16.msra.mxu0 0
    %2277 = vmatprep.subr.bf16.mxu0 0
    %2278 = vmatpush1.bf16.msra.mxu0 0
    %2279 = vmatprep.subr.bf16.mxu0 0
    %2280 = vmatpush1.bf16.msra.mxu0 0
    %2281 = vmatprep.subr.bf16.mxu0 0
    %2282 = vmatpush1.bf16.msra.mxu0 0
    %2283 = vmatprep.subr.bf16.mxu0 0
    %2284 = vmatpush1.bf16.msra.mxu0 0
    %2285 = vmatprep.subr.bf16.mxu0 0
    %2286 = vmatpush1.bf16.msra.mxu0 0
    %2287 = vmatprep.subr.bf16.mxu0 0
    %2288 = vmatpush1.bf16.msra.mxu0 0
    %2289 = vmatprep.subr.bf16.mxu0 0
    %2290 = vmatpush1.bf16.msra.mxu0 0
    %2291 = vmatprep.subr.bf16.mxu0 0
    %2292 = vmatpush1.bf16.msra.mxu0 0
    %2293 = vmatprep.subr.bf16.mxu0 0
    %2294 = vmatpush1.bf16.msra.mxu0 0
    %2295 = vmatprep.subr.bf16.mxu0 0
    %2296 = vmatpush1.bf16.msra.mxu0 0
    %2297 = vmatprep.subr.bf16.mxu0 0
    %2298 = vmatpush1.bf16.msra.mxu0 0
    %2299 = vmatprep.subr.bf16.mxu0 0
    %2300 = vmatpush1.bf16.msra.mxu0 0
    %2301 = vmatprep.mubr.bf16.mxu0 0
    %2302 = vmatmul.mubr.bf16.gmra.mrb[0].mxu0 %v2264
    %v2303 = vpop.f32.mrb[0].mxu0
    %v2304 = vadd.f32 0.0, %v2303
    %v2305 = vpop.f32.mrb[0].mxu0
    %v2306 = vpop.f32.mrb[0].mxu0
    %v2307 = vpop.f32.mrb[0].mxu0
    %2308 = vdwg.mxu0
    %v2309 = vsel %vm511, %v1968, 0.0
    %v2310 = vrot.slane %v2309, 4
    %v2311 = vadd.f32 %v2309, %v2310
    %v2312 = vrot.slane %v2311, 2
    %v2313 = vadd.f32 %v2311, %v2312
    %v2314 = vrot.slane %v2313, 1
    %v2315 = vadd.f32 %v2313, %v2314
    %v2316 = vsel %vm511, %v2016, 0.0
    %v2317 = vrot.slane %v2316, 4
    %v2318 = vadd.f32 %v2316, %v2317
    %v2319 = vrot.slane %v2318, 2
    %v2320 = vadd.f32 %v2318, %v2319
    %v2321 = vrot.slane %v2320, 1
    %v2322 = vadd.f32 %v2320, %v2321
    %v2323 = vsel %vm511, %v2064, 0.0
    %v2324 = vrot.slane %v2323, 4
    %v2325 = vadd.f32 %v2323, %v2324
    %v2326 = vrot.slane %v2325, 2
    %v2327 = vadd.f32 %v2325, %v2326
    %v2328 = vrot.slane %v2327, 1
    %v2329 = vadd.f32 %v2327, %v2328
    %v2330 = vsel %vm511, %v2112, 0.0
    %v2331 = vrot.slane %v2330, 4
    %v2332 = vadd.f32 %v2330, %v2331
    %v2333 = vrot.slane %v2332, 2
    %v2334 = vadd.f32 %v2332, %v2333
    %v2335 = vrot.slane %v2334, 1
    %v2336 = vadd.f32 %v2334, %v2335
    %v2337 = vsel %vm511, %v2160, 0.0
    %v2338 = vrot.slane %v2337, 4
    %v2339 = vadd.f32 %v2337, %v2338
    %v2340 = vrot.slane %v2339, 2
    %v2341 = vadd.f32 %v2339, %v2340
    %v2342 = vrot.slane %v2341, 1
    %v2343 = vadd.f32 %v2341, %v2342
    %v2344 = vsel %vm511, %v2208, 0.0
    %v2345 = vrot.slane %v2344, 4
    %v2346 = vadd.f32 %v2344, %v2345
    %v2347 = vrot.slane %v2346, 2
    %v2348 = vadd.f32 %v2346, %v2347
    %v2349 = vrot.slane %v2348, 1
    %v2350 = vadd.f32 %v2348, %v2349
    %v2351 = vsel %vm511, %v2256, 0.0
    %v2352 = vrot.slane %v2351, 4
    %v2353 = vadd.f32 %v2351, %v2352
    %v2354 = vrot.slane %v2353, 2
    %v2355 = vadd.f32 %v2353, %v2354
    %v2356 = vrot.slane %v2355, 1
    %v2357 = vadd.f32 %v2355, %v2356
    %v2358 = vsel %vm511, %v2304, 0.0
    %v2359 = vrot.slane %v2358, 4
    %v2360 = vadd.f32 %v2358, %v2359
    %v2361 = vrot.slane %v2360, 2
    %v2362 = vadd.f32 %v2360, %v2361
    %v2363 = vrot.slane %v2362, 1
    %v2364 = vadd.f32 %v2362, %v2363
    %v2365 = vpack.c.bf16 %v2016, %v1968
    %v2366 = vpack.c.bf16 %v2112, %v2064
    %v2367 = vpack.c.bf16 %v2208, %v2160
    %v2368 = vpack.c.bf16 %v2304, %v2256
    %v2369 = vld [vmem:[#allocation7 + $0x4] sm:$0xf]
    %v2371 = vsel %vm511, %v2365, 0
    %v2374 = vsel %vm511, %v2366, 0
    %v2377 = vsel %vm511, %v2367, 0
    %v2380 = vsel %vm511, %v2368, 0
    %v2383 = vsel %vm986, %v2369, 0
    %2385 = vmatprep.subr.bf16.mxu0 0
    %2386 = vmatpush1.bf16.msra.mxu0 %v2383
    %2387 = vmatprep.subr.bf16.mxu0 0
    %2388 = vmatpush1.bf16.msra.mxu0 0
    %2389 = vmatprep.subr.bf16.mxu0 0
    %2390 = vmatpush1.bf16.msra.mxu0 0
    %2391 = vmatprep.subr.bf16.mxu0 0
    %2392 = vmatpush1.bf16.msra.mxu0 0
    %2393 = vmatprep.subr.bf16.mxu0 0
    %2394 = vmatpush1.bf16.msra.mxu0 0
    %2395 = vmatprep.subr.bf16.mxu0 0
    %2396 = vmatpush1.bf16.msra.mxu0 0
    %2397 = vmatprep.subr.bf16.mxu0 0
    %2398 = vmatpush1.bf16.msra.mxu0 0
    %2399 = vmatprep.subr.bf16.mxu0 0
    %2400 = vmatpush1.bf16.msra.mxu0 0
    %2401 = vmatprep.subr.bf16.mxu0 0
    %2402 = vmatpush1.bf16.msra.mxu0 0
    %2403 = vmatprep.subr.bf16.mxu0 0
    %2404 = vmatpush1.bf16.msra.mxu0 0
    %2405 = vmatprep.subr.bf16.mxu0 0
    %2406 = vmatpush1.bf16.msra.mxu0 0
    %2407 = vmatprep.subr.bf16.mxu0 0
    %2408 = vmatpush1.bf16.msra.mxu0 0
    %2409 = vmatprep.subr.bf16.mxu0 0
    %2410 = vmatpush1.bf16.msra.mxu0 0
    %2411 = vmatprep.subr.bf16.mxu0 0
    %2412 = vmatpush1.bf16.msra.mxu0 0
    %2413 = vmatprep.subr.bf16.mxu0 0
    %2414 = vmatpush1.bf16.msra.mxu0 0
    %2415 = vmatprep.subr.bf16.mxu0 0
    %2416 = vmatpush1.bf16.msra.mxu0 0
    %2417 = vmatprep.mubr.bf16.mxu0 0
    %2418 = vmatmul.mubr.bf16.gmra.mrb[0].mxu0 %v2371
    %v2419 = vpop.f32.mrb[0].mxu0
    %v2420 = vadd.f32 0.0, %v2419
    %v2421 = vpop.f32.mrb[0].mxu0
    %v2422 = vpop.f32.mrb[0].mxu0
    %v2423 = vadd.f32 0.0, %v2422
    %v2424 = vpop.f32.mrb[0].mxu0
    %2425 = vmatprep.mubr.bf16.mxu0 0
    %2426 = vmatmul.mubr.bf16.gmra.mrb[0].mxu0 %v2374
    %v2427 = vpop.f32.mrb[0].mxu0
    %v2428 = vadd.f32 0.0, %v2427
    %v2429 = vpop.f32.mrb[0].mxu0
    %v2430 = vpop.f32.mrb[0].mxu0
    %v2431 = vadd.f32 0.0, %v2430
    %v2432 = vpop.f32.mrb[0].mxu0
    %2433 = vmatprep.mubr.bf16.mxu0 0
    %2434 = vmatmul.mubr.bf16.gmra.mrb[0].mxu0 %v2377
    %v2435 = vpop.f32.mrb[0].mxu0
    %v2436 = vadd.f32 0.0, %v2435
    %v2437 = vpop.f32.mrb[0].mxu0
    %v2438 = vpop.f32.mrb[0].mxu0
    %v2439 = vadd.f32 0.0, %v2438
    %v2440 = vpop.f32.mrb[0].mxu0
    %2441 = vmatprep.mubr.bf16.mxu0 0
    %2442 = vmatmul.mubr.bf16.gmra.mrb[0].mxu0 %v2380
    %v2443 = vpop.f32.mrb[0].mxu0
    %v2444 = vadd.f32 0.0, %v2443
    %v2445 = vpop.f32.mrb[0].mxu0
    %v2446 = vpop.f32.mrb[0].mxu0
    %v2447 = vadd.f32 0.0, %v2446
    %v2448 = vpop.f32.mrb[0].mxu0
    %2449 = vdwg.mxu0
    %v2451 = vsel %vm511, %v1408, 0
    %v2454 = vsel %vm511, %v1409, 0
    %v2457 = vsel %vm511, %v1410, 0
    %v2460 = vsel %vm511, %v1411, 0
    %v2463 = vsel %vm986, %v1412, 0
    %2465 = vmatprep.subr.bf16.mxu0 0
    %2466 = vmatpush1.bf16.msra.mxu0 %v2463
    %2467 = vmatprep.subr.bf16.mxu0 0
    %2468 = vmatpush1.bf16.msra.mxu0 0
    %2469 = vmatprep.subr.bf16.mxu0 0
    %2470 = vmatpush1.bf16.msra.mxu0 0
    %2471 = vmatprep.subr.bf16.mxu0 0
    %2472 = vmatpush1.bf16.msra.mxu0 0
    %2473 = vmatprep.subr.bf16.mxu0 0
    %2474 = vmatpush1.bf16.msra.mxu0 0
    %2475 = vmatprep.subr.bf16.mxu0 0
    %2476 = vmatpush1.bf16.msra.mxu0 0
    %2477 = vmatprep.subr.bf16.mxu0 0
    %2478 = vmatpush1.bf16.msra.mxu0 0
    %2479 = vmatprep.subr.bf16.mxu0 0
    %2480 = vmatpush1.bf16.msra.mxu0 0
    %2481 = vmatprep.subr.bf16.mxu0 0
    %2482 = vmatpush1.bf16.msra.mxu0 0
    %2483 = vmatprep.subr.bf16.mxu0 0
    %2484 = vmatpush1.bf16.msra.mxu0 0
    %2485 = vmatprep.subr.bf16.mxu0 0
    %2486 = vmatpush1.bf16.msra.mxu0 0
    %2487 = vmatprep.subr.bf16.mxu0 0
    %2488 = vmatpush1.bf16.msra.mxu0 0
    %2489 = vmatprep.subr.bf16.mxu0 0
    %2490 = vmatpush1.bf16.msra.mxu0 0
    %2491 = vmatprep.subr.bf16.mxu0 0
    %2492 = vmatpush1.bf16.msra.mxu0 0
    %2493 = vmatprep.subr.bf16.mxu0 0
    %2494 = vmatpush1.bf16.msra.mxu0 0
    %2495 = vmatprep.subr.bf16.mxu0 0
    %2496 = vmatpush1.bf16.msra.mxu0 0
    %2497 = vmatprep.mubr.bf16.mxu0 0
    %2498 = vmatmul.mubr.bf16.gmra.mrb[0].mxu0 %v2451
    %v2499 = vpop.f32.mrb[0].mxu0
    %v2500 = vadd.f32 %v2420, %v2499
    %v2501 = vpop.f32.mrb[0].mxu0
    %v2502 = vpop.f32.mrb[0].mxu0
    %v2503 = vadd.f32 %v2423, %v2502
    %v2504 = vpop.f32.mrb[0].mxu0
    %2505 = vmatprep.mubr.bf16.mxu0 0
    %2506 = vmatmul.mubr.bf16.gmra.mrb[0].mxu0 %v2454
    %v2507 = vpop.f32.mrb[0].mxu0
    %v2508 = vadd.f32 %v2428, %v2507
    %v2509 = vpop.f32.mrb[0].mxu0
    %v2510 = vpop.f32.mrb[0].mxu0
    %v2511 = vadd.f32 %v2431, %v2510
    %v2512 = vpop.f32.mrb[0].mxu0
    %2513 = vmatprep.mubr.bf16.mxu0 0
    %2514 = vmatmul.mubr.bf16.gmra.mrb[0].mxu0 %v2457
    %v2515 = vpop.f32.mrb[0].mxu0
    %v2516 = vadd.f32 %v2436, %v2515
    %v2517 = vpop.f32.mrb[0].mxu0
    %v2518 = vpop.f32.mrb[0].mxu0
    %v2519 = vadd.f32 %v2439, %v2518
    %v2520 = vpop.f32.mrb[0].mxu0
    %2521 = vmatprep.mubr.bf16.mxu0 0
    %2522 = vmatmul.mubr.bf16.gmra.mrb[0].mxu0 %v2460
    %v2523 = vpop.f32.mrb[0].mxu0
    %v2524 = vadd.f32 %v2444, %v2523
    %v2525 = vpop.f32.mrb[0].mxu0
    %v2526 = vpop.f32.mrb[0].mxu0
    %v2527 = vadd.f32 %v2447, %v2526
    %v2528 = vpop.f32.mrb[0].mxu0
    %2529 = vdwg.mxu0
    %2530 = vrot.lane.b32.xlu0 %v494, 112
    %v2531 = vpop.permute.xlu0 %2530
    %v2532 = vrot.slane %v2531, 4
    %2533 = vrot.lane.b32.xlu0 %v1416, 112
    %v2534 = vpop.permute.xlu0 %2533
    %v2536 = vsel %vm511, %v2534, 0
    %v2539 = vsel %vm511, %v2532, 0
    %2541 = vmatprep.subr.bf16.mxu0 0
    %2542 = vmatpush1.bf16.xpose.msra.mxu0 %v2539
    %2543 = vmatprep.subr.bf16.mxu0 0
    %2544 = vmatpush1.bf16.xpose.msra.mxu0 0
    %2545 = vmatprep.subr.bf16.mxu0 0
    %2546 = vmatpush1.bf16.xpose.msra.mxu0 0
    %2547 = vmatprep.subr.bf16.mxu0 0
    %2548 = vmatpush1.bf16.xpose.msra.mxu0 0
    %2549 = vmatprep.subr.bf16.mxu0 0
    %2550 = vmatpush1.bf16.xpose.msra.mxu0 0
    %2551 = vmatprep.subr.bf16.mxu0 0
    %2552 = vmatpush1.bf16.xpose.msra.mxu0 0
    %2553 = vmatprep.subr.bf16.mxu0 0
    %2554 = vmatpush1.bf16.xpose.msra.mxu0 0
    %2555 = vmatprep.subr.bf16.mxu0 0
    %2556 = vmatpush1.bf16.xpose.msra.mxu0 0
    %2557 = vmatprep.subr.bf16.mxu0 0
    %2558 = vmatpush1.bf16.xpose.msra.mxu0 0
    %2559 = vmatprep.subr.bf16.mxu0 0
    %2560 = vmatpush1.bf16.xpose.msra.mxu0 0
    %2561 = vmatprep.subr.bf16.mxu0 0
    %2562 = vmatpush1.bf16.xpose.msra.mxu0 0
    %2563 = vmatprep.subr.bf16.mxu0 0
    %2564 = vmatpush1.bf16.xpose.msra.mxu0 0
    %2565 = vmatprep.subr.bf16.mxu0 0
    %2566 = vmatpush1.bf16.xpose.msra.mxu0 0
    %2567 = vmatprep.subr.bf16.mxu0 0
    %2568 = vmatpush1.bf16.xpose.msra.mxu0 0
    %2569 = vmatprep.subr.bf16.mxu0 0
    %2570 = vmatpush1.bf16.xpose.msra.mxu0 0
    %2571 = vmatprep.subr.bf16.mxu0 0
    %2572 = vmatpush1.bf16.xpose.msra.mxu0 0
    %2573 = vmatprep.mubr.bf16.mxu0 0
    %2574 = vmatmul.mubr.bf16.gmra.mrb[0].mxu0 %v2536
    %v2575 = vpop.f32.mrb[0].mxu0
    %v2576 = vadd.f32 0.0, %v2575
    %v2577 = vpop.f32.mrb[0].mxu0
    %v2578 = vpop.f32.mrb[0].mxu0
    %v2579 = vpop.f32.mrb[0].mxu0
    %2580 = vdwg.mxu0
    %2581 = vrot.lane.b32.xlu0 %v496, 112
    %v2582 = vpop.permute.xlu0 %2581
    %v2583 = vrot.slane %v2582, 4
    %2584 = vrot.lane.b32.xlu0 %v1468, 112
    %v2585 = vpop.permute.xlu0 %2584
    %v2587 = vsel %vm511, %v2585, 0
    %v2590 = vsel %vm511, %v2583, 0
    %2592 = vmatprep.subr.bf16.mxu0 0
    %2593 = vmatpush1.bf16.xpose.msra.mxu0 %v2590
    %2594 = vmatprep.subr.bf16.mxu0 0
    %2595 = vmatpush1.bf16.xpose.msra.mxu0 0
    %2596 = vmatprep.subr.bf16.mxu0 0
    %2597 = vmatpush1.bf16.xpose.msra.mxu0 0
    %2598 = vmatprep.subr.bf16.mxu0 0
    %2599 = vmatpush1.bf16.xpose.msra.mxu0 0
    %2600 = vmatprep.subr.bf16.mxu0 0
    %2601 = vmatpush1.bf16.xpose.msra.mxu0 0
    %2602 = vmatprep.subr.bf16.mxu0 0
    %2603 = vmatpush1.bf16.xpose.msra.mxu0 0
    %2604 = vmatprep.subr.bf16.mxu0 0
    %2605 = vmatpush1.bf16.xpose.msra.mxu0 0
    %2606 = vmatprep.subr.bf16.mxu0 0
    %2607 = vmatpush1.bf16.xpose.msra.mxu0 0
    %2608 = vmatprep.subr.bf16.mxu0 0
    %2609 = vmatpush1.bf16.xpose.msra.mxu0 0
    %2610 = vmatprep.subr.bf16.mxu0 0
    %2611 = vmatpush1.bf16.xpose.msra.mxu0 0
    %2612 = vmatprep.subr.bf16.mxu0 0
    %2613 = vmatpush1.bf16.xpose.msra.mxu0 0
    %2614 = vmatprep.subr.bf16.mxu0 0
    %2615 = vmatpush1.bf16.xpose.msra.mxu0 0
    %2616 = vmatprep.subr.bf16.mxu0 0
    %2617 = vmatpush1.bf16.xpose.msra.mxu0 0
    %2618 = vmatprep.subr.bf16.mxu0 0
    %2619 = vmatpush1.bf16.xpose.msra.mxu0 0
    %2620 = vmatprep.subr.bf16.mxu0 0
    %2621 = vmatpush1.bf16.xpose.msra.mxu0 0
    %2622 = vmatprep.subr.bf16.mxu0 0
    %2623 = vmatpush1.bf16.xpose.msra.mxu0 0
    %2624 = vmatprep.mubr.bf16.mxu0 0
    %2625 = vmatmul.mubr.bf16.gmra.mrb[0].mxu0 %v2587
    %v2626 = vpop.f32.mrb[0].mxu0
    %v2627 = vadd.f32 0.0, %v2626
    %v2628 = vpop.f32.mrb[0].mxu0
    %v2629 = vpop.f32.mrb[0].mxu0
    %v2630 = vpop.f32.mrb[0].mxu0
    %2631 = vdwg.mxu0
    %2632 = vrot.lane.b32.xlu0 %v498, 112
    %v2633 = vpop.permute.xlu0 %2632
    %v2634 = vrot.slane %v2633, 4
    %2635 = vrot.lane.b32.xlu0 %v1520, 112
    %v2636 = vpop.permute.xlu0 %2635
    %v2638 = vsel %vm511, %v2636, 0
    %v2641 = vsel %vm511, %v2634, 0
    %2643 = vmatprep.subr.bf16.mxu0 0
    %2644 = vmatpush1.bf16.xpose.msra.mxu0 %v2641
    %2645 = vmatprep.subr.bf16.mxu0 0
    %2646 = vmatpush1.bf16.xpose.msra.mxu0 0
    %2647 = vmatprep.subr.bf16.mxu0 0
    %2648 = vmatpush1.bf16.xpose.msra.mxu0 0
    %2649 = vmatprep.subr.bf16.mxu0 0
    %2650 = vmatpush1.bf16.xpose.msra.mxu0 0
    %2651 = vmatprep.subr.bf16.mxu0 0
    %2652 = vmatpush1.bf16.xpose.msra.mxu0 0
    %2653 = vmatprep.subr.bf16.mxu0 0
    %2654 = vmatpush1.bf16.xpose.msra.mxu0 0
    %2655 = vmatprep.subr.bf16.mxu0 0
    %2656 = vmatpush1.bf16.xpose.msra.mxu0 0
    %2657 = vmatprep.subr.bf16.mxu0 0
    %2658 = vmatpush1.bf16.xpose.msra.mxu0 0
    %2659 = vmatprep.subr.bf16.mxu0 0
    %2660 = vmatpush1.bf16.xpose.msra.mxu0 0
    %2661 = vmatprep.subr.bf16.mxu0 0
    %2662 = vmatpush1.bf16.xpose.msra.mxu0 0
    %2663 = vmatprep.subr.bf16.mxu0 0
    %2664 = vmatpush1.bf16.xpose.msra.mxu0 0
    %2665 = vmatprep.subr.bf16.mxu0 0
    %2666 = vmatpush1.bf16.xpose.msra.mxu0 0
    %2667 = vmatprep.subr.bf16.mxu0 0
    %2668 = vmatpush1.bf16.xpose.msra.mxu0 0
    %2669 = vmatprep.subr.bf16.mxu0 0
    %2670 = vmatpush1.bf16.xpose.msra.mxu0 0
    %2671 = vmatprep.subr.bf16.mxu0 0
    %2672 = vmatpush1.bf16.xpose.msra.mxu0 0
    %2673 = vmatprep.subr.bf16.mxu0 0
    %2674 = vmatpush1.bf16.xpose.msra.mxu0 0
    %2675 = vmatprep.mubr.bf16.mxu0 0
    %2676 = vmatmul.mubr.bf16.gmra.mrb[0].mxu0 %v2638
    %v2677 = vpop.f32.mrb[0].mxu0
    %v2678 = vadd.f32 0.0, %v2677
    %v2679 = vpop.f32.mrb[0].mxu0
    %v2680 = vpop.f32.mrb[0].mxu0
    %v2681 = vpop.f32.mrb[0].mxu0
    %2682 = vdwg.mxu0
    %2683 = vrot.lane.b32.xlu0 %v500, 112
    %v2684 = vpop.permute.xlu0 %2683
    %v2685 = vrot.slane %v2684, 4
    %2686 = vrot.lane.b32.xlu0 %v1572, 112
    %v2687 = vpop.permute.xlu0 %2686
    %v2689 = vsel %vm511, %v2687, 0
    %v2692 = vsel %vm511, %v2685, 0
    %2694 = vmatprep.subr.bf16.mxu0 0
    %2695 = vmatpush1.bf16.xpose.msra.mxu0 %v2692
    %2696 = vmatprep.subr.bf16.mxu0 0
    %2697 = vmatpush1.bf16.xpose.msra.mxu0 0
    %2698 = vmatprep.subr.bf16.mxu0 0
    %2699 = vmatpush1.bf16.xpose.msra.mxu0 0
    %2700 = vmatprep.subr.bf16.mxu0 0
    %2701 = vmatpush1.bf16.xpose.msra.mxu0 0
    %2702 = vmatprep.subr.bf16.mxu0 0
    %2703 = vmatpush1.bf16.xpose.msra.mxu0 0
    %2704 = vmatprep.subr.bf16.mxu0 0
    %2705 = vmatpush1.bf16.xpose.msra.mxu0 0
    %2706 = vmatprep.subr.bf16.mxu0 0
    %2707 = vmatpush1.bf16.xpose.msra.mxu0 0
    %2708 = vmatprep.subr.bf16.mxu0 0
    %2709 = vmatpush1.bf16.xpose.msra.mxu0 0
    %2710 = vmatprep.subr.bf16.mxu0 0
    %2711 = vmatpush1.bf16.xpose.msra.mxu0 0
    %2712 = vmatprep.subr.bf16.mxu0 0
    %2713 = vmatpush1.bf16.xpose.msra.mxu0 0
    %2714 = vmatprep.subr.bf16.mxu0 0
    %2715 = vmatpush1.bf16.xpose.msra.mxu0 0
    %2716 = vmatprep.subr.bf16.mxu0 0
    %2717 = vmatpush1.bf16.xpose.msra.mxu0 0
    %2718 = vmatprep.subr.bf16.mxu0 0
    %2719 = vmatpush1.bf16.xpose.msra.mxu0 0
    %2720 = vmatprep.subr.bf16.mxu0 0
    %2721 = vmatpush1.bf16.xpose.msra.mxu0 0
    %2722 = vmatprep.subr.bf16.mxu0 0
    %2723 = vmatpush1.bf16.xpose.msra.mxu0 0
    %2724 = vmatprep.subr.bf16.mxu0 0
    %2725 = vmatpush1.bf16.xpose.msra.mxu0 0
    %2726 = vmatprep.mubr.bf16.mxu0 0
    %2727 = vmatmul.mubr.bf16.gmra.mrb[0].mxu0 %v2689
    %v2728 = vpop.f32.mrb[0].mxu0
    %v2729 = vadd.f32 0.0, %v2728
    %v2730 = vpop.f32.mrb[0].mxu0
    %v2731 = vpop.f32.mrb[0].mxu0
    %v2732 = vpop.f32.mrb[0].mxu0
    %2733 = vdwg.mxu0
    %2734 = vrot.lane.b32.xlu0 %v502, 112
    %v2735 = vpop.permute.xlu0 %2734
    %v2736 = vrot.slane %v2735, 4
    %2737 = vrot.lane.b32.xlu0 %v1624, 112
    %v2738 = vpop.permute.xlu0 %2737
    %v2740 = vsel %vm511, %v2738, 0
    %v2743 = vsel %vm511, %v2736, 0
    %2745 = vmatprep.subr.bf16.mxu0 0
    %2746 = vmatpush1.bf16.xpose.msra.mxu0 %v2743
    %2747 = vmatprep.subr.bf16.mxu0 0
    %2748 = vmatpush1.bf16.xpose.msra.mxu0 0
    %2749 = vmatprep.subr.bf16.mxu0 0
    %2750 = vmatpush1.bf16.xpose.msra.mxu0 0
    %2751 = vmatprep.subr.bf16.mxu0 0
    %2752 = vmatpush1.bf16.xpose.msra.mxu0 0
    %2753 = vmatprep.subr.bf16.mxu0 0
    %2754 = vmatpush1.bf16.xpose.msra.mxu0 0
    %2755 = vmatprep.subr.bf16.mxu0 0
    %2756 = vmatpush1.bf16.xpose.msra.mxu0 0
    %2757 = vmatprep.subr.bf16.mxu0 0
    %2758 = vmatpush1.bf16.xpose.msra.mxu0 0
    %2759 = vmatprep.subr.bf16.mxu0 0
    %2760 = vmatpush1.bf16.xpose.msra.mxu0 0
    %2761 = vmatprep.subr.bf16.mxu0 0
    %2762 = vmatpush1.bf16.xpose.msra.mxu0 0
    %2763 = vmatprep.subr.bf16.mxu0 0
    %2764 = vmatpush1.bf16.xpose.msra.mxu0 0
    %2765 = vmatprep.subr.bf16.mxu0 0
    %2766 = vmatpush1.bf16.xpose.msra.mxu0 0
    %2767 = vmatprep.subr.bf16.mxu0 0
    %2768 = vmatpush1.bf16.xpose.msra.mxu0 0
    %2769 = vmatprep.subr.bf16.mxu0 0
    %2770 = vmatpush1.bf16.xpose.msra.mxu0 0
    %2771 = vmatprep.subr.bf16.mxu0 0
    %2772 = vmatpush1.bf16.xpose.msra.mxu0 0
    %2773 = vmatprep.subr.bf16.mxu0 0
    %2774 = vmatpush1.bf16.xpose.msra.mxu0 0
    %2775 = vmatprep.subr.bf16.mxu0 0
    %2776 = vmatpush1.bf16.xpose.msra.mxu0 0
    %2777 = vmatprep.mubr.bf16.mxu0 0
    %2778 = vmatmul.mubr.bf16.gmra.mrb[0].mxu0 %v2740
    %v2779 = vpop.f32.mrb[0].mxu0
    %v2780 = vadd.f32 0.0, %v2779
    %v2781 = vpop.f32.mrb[0].mxu0
    %v2782 = vpop.f32.mrb[0].mxu0
    %v2783 = vpop.f32.mrb[0].mxu0
    %2784 = vdwg.mxu0
    %2785 = vrot.lane.b32.xlu0 %v504, 112
    %v2786 = vpop.permute.xlu0 %2785
    %v2787 = vrot.slane %v2786, 4
    %2788 = vrot.lane.b32.xlu0 %v1676, 112
    %v2789 = vpop.permute.xlu0 %2788
    %v2791 = vsel %vm511, %v2789, 0
    %v2794 = vsel %vm511, %v2787, 0
    %2796 = vmatprep.subr.bf16.mxu0 0
    %2797 = vmatpush1.bf16.xpose.msra.mxu0 %v2794
    %2798 = vmatprep.subr.bf16.mxu0 0
    %2799 = vmatpush1.bf16.xpose.msra.mxu0 0
    %2800 = vmatprep.subr.bf16.mxu0 0
    %2801 = vmatpush1.bf16.xpose.msra.mxu0 0
    %2802 = vmatprep.subr.bf16.mxu0 0
    %2803 = vmatpush1.bf16.xpose.msra.mxu0 0
    %2804 = vmatprep.subr.bf16.mxu0 0
    %2805 = vmatpush1.bf16.xpose.msra.mxu0 0
    %2806 = vmatprep.subr.bf16.mxu0 0
    %2807 = vmatpush1.bf16.xpose.msra.mxu0 0
    %2808 = vmatprep.subr.bf16.mxu0 0
    %2809 = vmatpush1.bf16.xpose.msra.mxu0 0
    %2810 = vmatprep.subr.bf16.mxu0 0
    %2811 = vmatpush1.bf16.xpose.msra.mxu0 0
    %2812 = vmatprep.subr.bf16.mxu0 0
    %2813 = vmatpush1.bf16.xpose.msra.mxu0 0
    %2814 = vmatprep.subr.bf16.mxu0 0
    %2815 = vmatpush1.bf16.xpose.msra.mxu0 0
    %2816 = vmatprep.subr.bf16.mxu0 0
    %2817 = vmatpush1.bf16.xpose.msra.mxu0 0
    %2818 = vmatprep.subr.bf16.mxu0 0
    %2819 = vmatpush1.bf16.xpose.msra.mxu0 0
    %2820 = vmatprep.subr.bf16.mxu0 0
    %2821 = vmatpush1.bf16.xpose.msra.mxu0 0
    %2822 = vmatprep.subr.bf16.mxu0 0
    %2823 = vmatpush1.bf16.xpose.msra.mxu0 0
    %2824 = vmatprep.subr.bf16.mxu0 0
    %2825 = vmatpush1.bf16.xpose.msra.mxu0 0
    %2826 = vmatprep.subr.bf16.mxu0 0
    %2827 = vmatpush1.bf16.xpose.msra.mxu0 0
    %2828 = vmatprep.mubr.bf16.mxu0 0
    %2829 = vmatmul.mubr.bf16.gmra.mrb[0].mxu0 %v2791
    %v2830 = vpop.f32.mrb[0].mxu0
    %v2831 = vadd.f32 0.0, %v2830
    %v2832 = vpop.f32.mrb[0].mxu0
    %v2833 = vpop.f32.mrb[0].mxu0
    %v2834 = vpop.f32.mrb[0].mxu0
    %2835 = vdwg.mxu0
    %2836 = vrot.lane.b32.xlu0 %v506, 112
    %v2837 = vpop.permute.xlu0 %2836
    %v2838 = vrot.slane %v2837, 4
    %2839 = vrot.lane.b32.xlu0 %v1728, 112
    %v2840 = vpop.permute.xlu0 %2839
    %v2842 = vsel %vm511, %v2840, 0
    %v2845 = vsel %vm511, %v2838, 0
    %2847 = vmatprep.subr.bf16.mxu0 0
    %2848 = vmatpush1.bf16.xpose.msra.mxu0 %v2845
    %2849 = vmatprep.subr.bf16.mxu0 0
    %2850 = vmatpush1.bf16.xpose.msra.mxu0 0
    %2851 = vmatprep.subr.bf16.mxu0 0
    %2852 = vmatpush1.bf16.xpose.msra.mxu0 0
    %2853 = vmatprep.subr.bf16.mxu0 0
    %2854 = vmatpush1.bf16.xpose.msra.mxu0 0
    %2855 = vmatprep.subr.bf16.mxu0 0
    %2856 = vmatpush1.bf16.xpose.msra.mxu0 0
    %2857 = vmatprep.subr.bf16.mxu0 0
    %2858 = vmatpush1.bf16.xpose.msra.mxu0 0
    %2859 = vmatprep.subr.bf16.mxu0 0
    %2860 = vmatpush1.bf16.xpose.msra.mxu0 0
    %2861 = vmatprep.subr.bf16.mxu0 0
    %2862 = vmatpush1.bf16.xpose.msra.mxu0 0
    %2863 = vmatprep.subr.bf16.mxu0 0
    %2864 = vmatpush1.bf16.xpose.msra.mxu0 0
    %2865 = vmatprep.subr.bf16.mxu0 0
    %2866 = vmatpush1.bf16.xpose.msra.mxu0 0
    %2867 = vmatprep.subr.bf16.mxu0 0
    %2868 = vmatpush1.bf16.xpose.msra.mxu0 0
    %2869 = vmatprep.subr.bf16.mxu0 0
    %2870 = vmatpush1.bf16.xpose.msra.mxu0 0
    %2871 = vmatprep.subr.bf16.mxu0 0
    %2872 = vmatpush1.bf16.xpose.msra.mxu0 0
    %2873 = vmatprep.subr.bf16.mxu0 0
    %2874 = vmatpush1.bf16.xpose.msra.mxu0 0
    %2875 = vmatprep.subr.bf16.mxu0 0
    %2876 = vmatpush1.bf16.xpose.msra.mxu0 0
    %2877 = vmatprep.subr.bf16.mxu0 0
    %2878 = vmatpush1.bf16.xpose.msra.mxu0 0
    %2879 = vmatprep.mubr.bf16.mxu0 0
    %2880 = vmatmul.mubr.bf16.gmra.mrb[0].mxu0 %v2842
    %v2881 = vpop.f32.mrb[0].mxu0
    %v2882 = vadd.f32 0.0, %v2881
    %v2883 = vpop.f32.mrb[0].mxu0
    %v2884 = vpop.f32.mrb[0].mxu0
    %v2885 = vpop.f32.mrb[0].mxu0
    %2886 = vdwg.mxu0
    %2887 = vrot.lane.b32.xlu0 %v508, 112
    %v2888 = vpop.permute.xlu0 %2887
    %v2889 = vrot.slane %v2888, 4
    %2890 = vrot.lane.b32.xlu0 %v1780, 112
    %v2891 = vpop.permute.xlu0 %2890
    %v2893 = vsel %vm511, %v2891, 0
    %v2896 = vsel %vm511, %v2889, 0
    %2898 = vmatprep.subr.bf16.mxu0 0
    %2899 = vmatpush1.bf16.xpose.msra.mxu0 %v2896
    %2900 = vmatprep.subr.bf16.mxu0 0
    %2901 = vmatpush1.bf16.xpose.msra.mxu0 0
    %2902 = vmatprep.subr.bf16.mxu0 0
    %2903 = vmatpush1.bf16.xpose.msra.mxu0 0
    %2904 = vmatprep.subr.bf16.mxu0 0
    %2905 = vmatpush1.bf16.xpose.msra.mxu0 0
    %2906 = vmatprep.subr.bf16.mxu0 0
    %2907 = vmatpush1.bf16.xpose.msra.mxu0 0
    %2908 = vmatprep.subr.bf16.mxu0 0
    %2909 = vmatpush1.bf16.xpose.msra.mxu0 0
    %2910 = vmatprep.subr.bf16.mxu0 0
    %2911 = vmatpush1.bf16.xpose.msra.mxu0 0
    %2912 = vmatprep.subr.bf16.mxu0 0
    %2913 = vmatpush1.bf16.xpose.msra.mxu0 0
    %2914 = vmatprep.subr.bf16.mxu0 0
    %2915 = vmatpush1.bf16.xpose.msra.mxu0 0
    %2916 = vmatprep.subr.bf16.mxu0 0
    %2917 = vmatpush1.bf16.xpose.msra.mxu0 0
    %2918 = vmatprep.subr.bf16.mxu0 0
    %2919 = vmatpush1.bf16.xpose.msra.mxu0 0
    %2920 = vmatprep.subr.bf16.mxu0 0
    %2921 = vmatpush1.bf16.xpose.msra.mxu0 0
    %2922 = vmatprep.subr.bf16.mxu0 0
    %2923 = vmatpush1.bf16.xpose.msra.mxu0 0
    %2924 = vmatprep.subr.bf16.mxu0 0
    %2925 = vmatpush1.bf16.xpose.msra.mxu0 0
    %2926 = vmatprep.subr.bf16.mxu0 0
    %2927 = vmatpush1.bf16.xpose.msra.mxu0 0
    %2928 = vmatprep.subr.bf16.mxu0 0
    %2929 = vmatpush1.bf16.xpose.msra.mxu0 0
    %2930 = vmatprep.mubr.bf16.mxu0 0
    %2931 = vmatmul.mubr.bf16.gmra.mrb[0].mxu0 %v2893
    %v2932 = vpop.f32.mrb[0].mxu0
    %v2933 = vadd.f32 0.0, %v2932
    %v2934 = vpop.f32.mrb[0].mxu0
    %v2935 = vpop.f32.mrb[0].mxu0
    %v2936 = vpop.f32.mrb[0].mxu0
    %2937 = vdwg.mxu0
    %v2938 = vsel %vm511, %v2576, -inf
    %2939 = vmax.xlane.f32.xlu0 %v2938
    %v2940 = vpop.xlane.xlu0 %2939
    %v2941 = vsel %vm511, %v2627, -inf
    %2942 = vmax.xlane.f32.xlu0 %v2941
    %v2943 = vpop.xlane.xlu0 %2942
    %v2944 = vsel %vm511, %v2678, -inf
    %2945 = vmax.xlane.f32.xlu0 %v2944
    %v2946 = vpop.xlane.xlu0 %2945
    %v2947 = vsel %vm511, %v2729, -inf
    %2948 = vmax.xlane.f32.xlu0 %v2947
    %v2949 = vpop.xlane.xlu0 %2948
    %v2950 = vsel %vm511, %v2780, -inf
    %2951 = vmax.xlane.f32.xlu0 %v2950
    %v2952 = vpop.xlane.xlu0 %2951
    %v2953 = vsel %vm511, %v2831, -inf
    %2954 = vmax.xlane.f32.xlu0 %v2953
    %v2955 = vpop.xlane.xlu0 %2954
    %v2956 = vsel %vm511, %v2882, -inf
    %2957 = vmax.xlane.f32.xlu0 %v2956
    %v2958 = vpop.xlane.xlu0 %2957
    %v2959 = vsel %vm511, %v2933, -inf
    %2960 = vmax.xlane.f32.xlu0 %v2959
    %v2961 = vpop.xlane.xlu0 %2960
    %v2962 = vsub.f32 %v2576, %v2940
    %v2963 = vsub.f32 %v2627, %v2943
    %v2964 = vsub.f32 %v2678, %v2946
    %v2965 = vsub.f32 %v2729, %v2949
    %v2966 = vsub.f32 %v2780, %v2952
    %v2967 = vsub.f32 %v2831, %v2955
    %v2968 = vsub.f32 %v2882, %v2958
    %v2969 = vsub.f32 %v2933, %v2961
    %v2970 = vmul.f32 %v2962, 1.442695
    %v2971 = vpow.pop %v2970
    %v2972 = vmul.f32 %v2963, 1.442695
    %v2973 = vpow.pop %v2972
    %v2974 = vmul.f32 %v2964, 1.442695
    %v2975 = vpow.pop %v2974
    %v2976 = vmul.f32 %v2965, 1.442695
    %v2977 = vpow.pop %v2976
    %v2978 = vmul.f32 %v2966, 1.442695
    %v2979 = vpow.pop %v2978
    %v2980 = vmul.f32 %v2967, 1.442695
    %v2981 = vpow.pop %v2980
    %v2982 = vmul.f32 %v2968, 1.442695
    %v2983 = vpow.pop %v2982
    %v2984 = vmul.f32 %v2969, 1.442695
    %v2985 = vpow.pop %v2984
    %v2986 = vsel %vm511, %v2971, 0.0
    %2987 = vadd.xlane.f32.xlu0 %v2986
    %v2988 = vpop.xlane.xlu0 %2987
    %v2989 = vsel %vm511, %v2973, 0.0
    %2990 = vadd.xlane.f32.xlu0 %v2989
    %v2991 = vpop.xlane.xlu0 %2990
    %v2992 = vsel %vm511, %v2975, 0.0
    %2993 = vadd.xlane.f32.xlu0 %v2992
    %v2994 = vpop.xlane.xlu0 %2993
    %v2995 = vsel %vm511, %v2977, 0.0
    %2996 = vadd.xlane.f32.xlu0 %v2995
    %v2997 = vpop.xlane.xlu0 %2996
    %v2998 = vsel %vm511, %v2979, 0.0
    %2999 = vadd.xlane.f32.xlu0 %v2998
    %v3000 = vpop.xlane.xlu0 %2999
    %v3001 = vsel %vm511, %v2981, 0.0
    %3002 = vadd.xlane.f32.xlu0 %v3001
    %v3003 = vpop.xlane.xlu0 %3002
    %v3004 = vsel %vm511, %v2983, 0.0
    %3005 = vadd.xlane.f32.xlu0 %v3004
    %v3006 = vpop.xlane.xlu0 %3005
    %v3007 = vsel %vm511, %v2985, 0.0
    %3008 = vadd.xlane.f32.xlu0 %v3007
    %v3009 = vpop.xlane.xlu0 %3008
    %v3010 = vrcp.pop %v2988
    %v3011 = vrcp.pop %v2991
    %v3012 = vrcp.pop %v2994
    %v3013 = vrcp.pop %v2997
    %v3014 = vrcp.pop %v3000
    %v3015 = vrcp.pop %v3003
    %v3016 = vrcp.pop %v3006
    %v3017 = vrcp.pop %v3009
    %v3018 = vmul.f32 %v2971, %v3010
    %v3019 = vmul.f32 %v2973, %v3011
    %v3020 = vmul.f32 %v2975, %v3012
    %v3021 = vmul.f32 %v2977, %v3013
    %v3022 = vmul.f32 %v2979, %v3014
    %v3023 = vmul.f32 %v2981, %v3015
    %v3024 = vmul.f32 %v2983, %v3016
    %v3025 = vmul.f32 %v2985, %v3017
    %v3026 = vpack.c.bf16 %v3018, %v3018
    %v3027 = vpack.c.bf16 %v3019, %v3019
    %v3028 = vpack.c.bf16 %v3020, %v3020
    %v3029 = vpack.c.bf16 %v3021, %v3021
    %v3030 = vpack.c.bf16 %v3022, %v3022
    %v3031 = vpack.c.bf16 %v3023, %v3023
    %v3032 = vpack.c.bf16 %v3024, %v3024
    %v3033 = vpack.c.bf16 %v3025, %v3025
    %3034 = vrot.lane.b32.xlu0 %v495, 112
    %v3035 = vpop.permute.xlu0 %3034
    %v3037 = vsel %vm511, %v3026, 0
    %v3040 = vsel %vm986, %v3035, 0
    %3042 = vmatprep.subr.bf16.mxu0 0
    %3043 = vmatpush1.bf16.msra.mxu0 %v3040
    %3044 = vmatprep.subr.bf16.mxu0 0
    %3045 = vmatpush1.bf16.msra.mxu0 0
    %3046 = vmatprep.subr.bf16.mxu0 0
    %3047 = vmatpush1.bf16.msra.mxu0 0
    %3048 = vmatprep.subr.bf16.mxu0 0
    %3049 = vmatpush1.bf16.msra.mxu0 0
    %3050 = vmatprep.subr.bf16.mxu0 0
    %3051 = vmatpush1.bf16.msra.mxu0 0
    %3052 = vmatprep.subr.bf16.mxu0 0
    %3053 = vmatpush1.bf16.msra.mxu0 0
    %3054 = vmatprep.subr.bf16.mxu0 0
    %3055 = vmatpush1.bf16.msra.mxu0 0
    %3056 = vmatprep.subr.bf16.mxu0 0
    %3057 = vmatpush1.bf16.msra.mxu0 0
    %3058 = vmatprep.subr.bf16.mxu0 0
    %3059 = vmatpush1.bf16.msra.mxu0 0
    %3060 = vmatprep.subr.bf16.mxu0 0
    %3061 = vmatpush1.bf16.msra.mxu0 0
    %3062 = vmatprep.subr.bf16.mxu0 0
    %3063 = vmatpush1.bf16.msra.mxu0 0
    %3064 = vmatprep.subr.bf16.mxu0 0
    %3065 = vmatpush1.bf16.msra.mxu0 0
    %3066 = vmatprep.subr.bf16.mxu0 0
    %3067 = vmatpush1.bf16.msra.mxu0 0
    %3068 = vmatprep.subr.bf16.mxu0 0
    %3069 = vmatpush1.bf16.msra.mxu0 0
    %3070 = vmatprep.subr.bf16.mxu0 0
    %3071 = vmatpush1.bf16.msra.mxu0 0
    %3072 = vmatprep.subr.bf16.mxu0 0
    %3073 = vmatpush1.bf16.msra.mxu0 0
    %3074 = vmatprep.mubr.bf16.mxu0 0
    %3075 = vmatmul.mubr.bf16.gmra.mrb[0].mxu0 %v3037
    %v3076 = vpop.f32.mrb[0].mxu0
    %v3077 = vadd.f32 0.0, %v3076
    %v3078 = vpop.f32.mrb[0].mxu0
    %v3079 = vpop.f32.mrb[0].mxu0
    %v3080 = vpop.f32.mrb[0].mxu0
    %3081 = vdwg.mxu0
    %3082 = vrot.lane.b32.xlu0 %v497, 112
    %v3083 = vpop.permute.xlu0 %3082
    %v3085 = vsel %vm511, %v3027, 0
    %v3088 = vsel %vm986, %v3083, 0
    %3090 = vmatprep.subr.bf16.mxu0 0
    %3091 = vmatpush1.bf16.msra.mxu0 %v3088
    %3092 = vmatprep.subr.bf16.mxu0 0
    %3093 = vmatpush1.bf16.msra.mxu0 0
    %3094 = vmatprep.subr.bf16.mxu0 0
    %3095 = vmatpush1.bf16.msra.mxu0 0
    %3096 = vmatprep.subr.bf16.mxu0 0
    %3097 = vmatpush1.bf16.msra.mxu0 0
    %3098 = vmatprep.subr.bf16.mxu0 0
    %3099 = vmatpush1.bf16.msra.mxu0 0
    %3100 = vmatprep.subr.bf16.mxu0 0
    %3101 = vmatpush1.bf16.msra.mxu0 0
    %3102 = vmatprep.subr.bf16.mxu0 0
    %3103 = vmatpush1.bf16.msra.mxu0 0
    %3104 = vmatprep.subr.bf16.mxu0 0
    %3105 = vmatpush1.bf16.msra.mxu0 0
    %3106 = vmatprep.subr.bf16.mxu0 0
    %3107 = vmatpush1.bf16.msra.mxu0 0
    %3108 = vmatprep.subr.bf16.mxu0 0
    %3109 = vmatpush1.bf16.msra.mxu0 0
    %3110 = vmatprep.subr.bf16.mxu0 0
    %3111 = vmatpush1.bf16.msra.mxu0 0
    %3112 = vmatprep.subr.bf16.mxu0 0
    %3113 = vmatpush1.bf16.msra.mxu0 0
    %3114 = vmatprep.subr.bf16.mxu0 0
    %3115 = vmatpush1.bf16.msra.mxu0 0
    %3116 = vmatprep.subr.bf16.mxu0 0
    %3117 = vmatpush1.bf16.msra.mxu0 0
    %3118 = vmatprep.subr.bf16.mxu0 0
    %3119 = vmatpush1.bf16.msra.mxu0 0
    %3120 = vmatprep.subr.bf16.mxu0 0
    %3121 = vmatpush1.bf16.msra.mxu0 0
    %3122 = vmatprep.mubr.bf16.mxu0 0
    %3123 = vmatmul.mubr.bf16.gmra.mrb[0].mxu0 %v3085
    %v3124 = vpop.f32.mrb[0].mxu0
    %v3125 = vadd.f32 0.0, %v3124
    %v3126 = vpop.f32.mrb[0].mxu0
    %v3127 = vpop.f32.mrb[0].mxu0
    %v3128 = vpop.f32.mrb[0].mxu0
    %3129 = vdwg.mxu0
    %3130 = vrot.lane.b32.xlu0 %v499, 112
    %v3131 = vpop.permute.xlu0 %3130
    %v3133 = vsel %vm511, %v3028, 0
    %v3136 = vsel %vm986, %v3131, 0
    %3138 = vmatprep.subr.bf16.mxu0 0
    %3139 = vmatpush1.bf16.msra.mxu0 %v3136
    %3140 = vmatprep.subr.bf16.mxu0 0
    %3141 = vmatpush1.bf16.msra.mxu0 0
    %3142 = vmatprep.subr.bf16.mxu0 0
    %3143 = vmatpush1.bf16.msra.mxu0 0
    %3144 = vmatprep.subr.bf16.mxu0 0
    %3145 = vmatpush1.bf16.msra.mxu0 0
    %3146 = vmatprep.subr.bf16.mxu0 0
    %3147 = vmatpush1.bf16.msra.mxu0 0
    %3148 = vmatprep.subr.bf16.mxu0 0
    %3149 = vmatpush1.bf16.msra.mxu0 0
    %3150 = vmatprep.subr.bf16.mxu0 0
    %3151 = vmatpush1.bf16.msra.mxu0 0
    %3152 = vmatprep.subr.bf16.mxu0 0
    %3153 = vmatpush1.bf16.msra.mxu0 0
    %3154 = vmatprep.subr.bf16.mxu0 0
    %3155 = vmatpush1.bf16.msra.mxu0 0
    %3156 = vmatprep.subr.bf16.mxu0 0
    %3157 = vmatpush1.bf16.msra.mxu0 0
    %3158 = vmatprep.subr.bf16.mxu0 0
    %3159 = vmatpush1.bf16.msra.mxu0 0
    %3160 = vmatprep.subr.bf16.mxu0 0
    %3161 = vmatpush1.bf16.msra.mxu0 0
    %3162 = vmatprep.subr.bf16.mxu0 0
    %3163 = vmatpush1.bf16.msra.mxu0 0
    %3164 = vmatprep.subr.bf16.mxu0 0
    %3165 = vmatpush1.bf16.msra.mxu0 0
    %3166 = vmatprep.subr.bf16.mxu0 0
    %3167 = vmatpush1.bf16.msra.mxu0 0
    %3168 = vmatprep.subr.bf16.mxu0 0
    %3169 = vmatpush1.bf16.msra.mxu0 0
    %3170 = vmatprep.mubr.bf16.mxu0 0
    %3171 = vmatmul.mubr.bf16.gmra.mrb[0].mxu0 %v3133
    %v3172 = vpop.f32.mrb[0].mxu0
    %v3173 = vadd.f32 0.0, %v3172
    %v3174 = vpop.f32.mrb[0].mxu0
    %v3175 = vpop.f32.mrb[0].mxu0
    %v3176 = vpop.f32.mrb[0].mxu0
    %3177 = vdwg.mxu0
    %3178 = vrot.lane.b32.xlu0 %v501, 112
    %v3179 = vpop.permute.xlu0 %3178
    %v3181 = vsel %vm511, %v3029, 0
    %v3184 = vsel %vm986, %v3179, 0
    %3186 = vmatprep.subr.bf16.mxu0 0
    %3187 = vmatpush1.bf16.msra.mxu0 %v3184
    %3188 = vmatprep.subr.bf16.mxu0 0
    %3189 = vmatpush1.bf16.msra.mxu0 0
    %3190 = vmatprep.subr.bf16.mxu0 0
    %3191 = vmatpush1.bf16.msra.mxu0 0
    %3192 = vmatprep.subr.bf16.mxu0 0
    %3193 = vmatpush1.bf16.msra.mxu0 0
    %3194 = vmatprep.subr.bf16.mxu0 0
    %3195 = vmatpush1.bf16.msra.mxu0 0
    %3196 = vmatprep.subr.bf16.mxu0 0
    %3197 = vmatpush1.bf16.msra.mxu0 0
    %3198 = vmatprep.subr.bf16.mxu0 0
    %3199 = vmatpush1.bf16.msra.mxu0 0
    %3200 = vmatprep.subr.bf16.mxu0 0
    %3201 = vmatpush1.bf16.msra.mxu0 0
    %3202 = vmatprep.subr.bf16.mxu0 0
    %3203 = vmatpush1.bf16.msra.mxu0 0
    %3204 = vmatprep.subr.bf16.mxu0 0
    %3205 = vmatpush1.bf16.msra.mxu0 0
    %3206 = vmatprep.subr.bf16.mxu0 0
    %3207 = vmatpush1.bf16.msra.mxu0 0
    %3208 = vmatprep.subr.bf16.mxu0 0
    %3209 = vmatpush1.bf16.msra.mxu0 0
    %3210 = vmatprep.subr.bf16.mxu0 0
    %3211 = vmatpush1.bf16.msra.mxu0 0
    %3212 = vmatprep.subr.bf16.mxu0 0
    %3213 = vmatpush1.bf16.msra.mxu0 0
    %3214 = vmatprep.subr.bf16.mxu0 0
    %3215 = vmatpush1.bf16.msra.mxu0 0
    %3216 = vmatprep.subr.bf16.mxu0 0
    %3217 = vmatpush1.bf16.msra.mxu0 0
    %3218 = vmatprep.mubr.bf16.mxu0 0
    %3219 = vmatmul.mubr.bf16.gmra.mrb[0].mxu0 %v3181
    %v3220 = vpop.f32.mrb[0].mxu0
    %v3221 = vadd.f32 0.0, %v3220
    %v3222 = vpop.f32.mrb[0].mxu0
    %v3223 = vpop.f32.mrb[0].mxu0
    %v3224 = vpop.f32.mrb[0].mxu0
    %3225 = vdwg.mxu0
    %3226 = vrot.lane.b32.xlu0 %v503, 112
    %v3227 = vpop.permute.xlu0 %3226
    %v3229 = vsel %vm511, %v3030, 0
    %v3232 = vsel %vm986, %v3227, 0
    %3234 = vmatprep.subr.bf16.mxu0 0
    %3235 = vmatpush1.bf16.msra.mxu0 %v3232
    %3236 = vmatprep.subr.bf16.mxu0 0
    %3237 = vmatpush1.bf16.msra.mxu0 0
    %3238 = vmatprep.subr.bf16.mxu0 0
    %3239 = vmatpush1.bf16.msra.mxu0 0
    %3240 = vmatprep.subr.bf16.mxu0 0
    %3241 = vmatpush1.bf16.msra.mxu0 0
    %3242 = vmatprep.subr.bf16.mxu0 0
    %3243 = vmatpush1.bf16.msra.mxu0 0
    %3244 = vmatprep.subr.bf16.mxu0 0
    %3245 = vmatpush1.bf16.msra.mxu0 0
    %3246 = vmatprep.subr.bf16.mxu0 0
    %3247 = vmatpush1.bf16.msra.mxu0 0
    %3248 = vmatprep.subr.bf16.mxu0 0
    %3249 = vmatpush1.bf16.msra.mxu0 0
    %3250 = vmatprep.subr.bf16.mxu0 0
    %3251 = vmatpush1.bf16.msra.mxu0 0
    %3252 = vmatprep.subr.bf16.mxu0 0
    %3253 = vmatpush1.bf16.msra.mxu0 0
    %3254 = vmatprep.subr.bf16.mxu0 0
    %3255 = vmatpush1.bf16.msra.mxu0 0
    %3256 = vmatprep.subr.bf16.mxu0 0
    %3257 = vmatpush1.bf16.msra.mxu0 0
    %3258 = vmatprep.subr.bf16.mxu0 0
    %3259 = vmatpush1.bf16.msra.mxu0 0
    %3260 = vmatprep.subr.bf16.mxu0 0
    %3261 = vmatpush1.bf16.msra.mxu0 0
    %3262 = vmatprep.subr.bf16.mxu0 0
    %3263 = vmatpush1.bf16.msra.mxu0 0
    %3264 = vmatprep.subr.bf16.mxu0 0
    %3265 = vmatpush1.bf16.msra.mxu0 0
    %3266 = vmatprep.mubr.bf16.mxu0 0
    %3267 = vmatmul.mubr.bf16.gmra.mrb[0].mxu0 %v3229
    %v3268 = vpop.f32.mrb[0].mxu0
    %v3269 = vadd.f32 0.0, %v3268
    %v3270 = vpop.f32.mrb[0].mxu0
    %v3271 = vpop.f32.mrb[0].mxu0
    %v3272 = vpop.f32.mrb[0].mxu0
    %3273 = vdwg.mxu0
    %3274 = vrot.lane.b32.xlu0 %v505, 112
    %v3275 = vpop.permute.xlu0 %3274
    %v3277 = vsel %vm511, %v3031, 0
    %v3280 = vsel %vm986, %v3275, 0
    %3282 = vmatprep.subr.bf16.mxu0 0
    %3283 = vmatpush1.bf16.msra.mxu0 %v3280
    %3284 = vmatprep.subr.bf16.mxu0 0
    %3285 = vmatpush1.bf16.msra.mxu0 0
    %3286 = vmatprep.subr.bf16.mxu0 0
    %3287 = vmatpush1.bf16.msra.mxu0 0
    %3288 = vmatprep.subr.bf16.mxu0 0
    %3289 = vmatpush1.bf16.msra.mxu0 0
    %3290 = vmatprep.subr.bf16.mxu0 0
    %3291 = vmatpush1.bf16.msra.mxu0 0
    %3292 = vmatprep.subr.bf16.mxu0 0
    %3293 = vmatpush1.bf16.msra.mxu0 0
    %3294 = vmatprep.subr.bf16.mxu0 0
    %3295 = vmatpush1.bf16.msra.mxu0 0
    %3296 = vmatprep.subr.bf16.mxu0 0
    %3297 = vmatpush1.bf16.msra.mxu0 0
    %3298 = vmatprep.subr.bf16.mxu0 0
    %3299 = vmatpush1.bf16.msra.mxu0 0
    %3300 = vmatprep.subr.bf16.mxu0 0
    %3301 = vmatpush1.bf16.msra.mxu0 0
    %3302 = vmatprep.subr.bf16.mxu0 0
    %3303 = vmatpush1.bf16.msra.mxu0 0
    %3304 = vmatprep.subr.bf16.mxu0 0
    %3305 = vmatpush1.bf16.msra.mxu0 0
    %3306 = vmatprep.subr.bf16.mxu0 0
    %3307 = vmatpush1.bf16.msra.mxu0 0
    %3308 = vmatprep.subr.bf16.mxu0 0
    %3309 = vmatpush1.bf16.msra.mxu0 0
    %3310 = vmatprep.subr.bf16.mxu0 0
    %3311 = vmatpush1.bf16.msra.mxu0 0
    %3312 = vmatprep.subr.bf16.mxu0 0
    %3313 = vmatpush1.bf16.msra.mxu0 0
    %3314 = vmatprep.mubr.bf16.mxu0 0
    %3315 = vmatmul.mubr.bf16.gmra.mrb[0].mxu0 %v3277
    %v3316 = vpop.f32.mrb[0].mxu0
    %v3317 = vadd.f32 0.0, %v3316
    %v3318 = vpop.f32.mrb[0].mxu0
    %v3319 = vpop.f32.mrb[0].mxu0
    %v3320 = vpop.f32.mrb[0].mxu0
    %3321 = vdwg.mxu0
    %3322 = vrot.lane.b32.xlu0 %v507, 112
    %v3323 = vpop.permute.xlu0 %3322
    %v3325 = vsel %vm511, %v3032, 0
    %v3328 = vsel %vm986, %v3323, 0
    %3330 = vmatprep.subr.bf16.mxu0 0
    %3331 = vmatpush1.bf16.msra.mxu0 %v3328
    %3332 = vmatprep.subr.bf16.mxu0 0
    %3333 = vmatpush1.bf16.msra.mxu0 0
    %3334 = vmatprep.subr.bf16.mxu0 0
    %3335 = vmatpush1.bf16.msra.mxu0 0
    %3336 = vmatprep.subr.bf16.mxu0 0
    %3337 = vmatpush1.bf16.msra.mxu0 0
    %3338 = vmatprep.subr.bf16.mxu0 0
    %3339 = vmatpush1.bf16.msra.mxu0 0
    %3340 = vmatprep.subr.bf16.mxu0 0
    %3341 = vmatpush1.bf16.msra.mxu0 0
    %3342 = vmatprep.subr.bf16.mxu0 0
    %3343 = vmatpush1.bf16.msra.mxu0 0
    %3344 = vmatprep.subr.bf16.mxu0 0
    %3345 = vmatpush1.bf16.msra.mxu0 0
    %3346 = vmatprep.subr.bf16.mxu0 0
    %3347 = vmatpush1.bf16.msra.mxu0 0
    %3348 = vmatprep.subr.bf16.mxu0 0
    %3349 = vmatpush1.bf16.msra.mxu0 0
    %3350 = vmatprep.subr.bf16.mxu0 0
    %3351 = vmatpush1.bf16.msra.mxu0 0
    %3352 = vmatprep.subr.bf16.mxu0 0
    %3353 = vmatpush1.bf16.msra.mxu0 0
    %3354 = vmatprep.subr.bf16.mxu0 0
    %3355 = vmatpush1.bf16.msra.mxu0 0
    %3356 = vmatprep.subr.bf16.mxu0 0
    %3357 = vmatpush1.bf16.msra.mxu0 0
    %3358 = vmatprep.subr.bf16.mxu0 0
    %3359 = vmatpush1.bf16.msra.mxu0 0
    %3360 = vmatprep.subr.bf16.mxu0 0
    %3361 = vmatpush1.bf16.msra.mxu0 0
    %3362 = vmatprep.mubr.bf16.mxu0 0
    %3363 = vmatmul.mubr.bf16.gmra.mrb[0].mxu0 %v3325
    %v3364 = vpop.f32.mrb[0].mxu0
    %v3365 = vadd.f32 0.0, %v3364
    %v3366 = vpop.f32.mrb[0].mxu0
    %v3367 = vpop.f32.mrb[0].mxu0
    %v3368 = vpop.f32.mrb[0].mxu0
    %3369 = vdwg.mxu0
    %3370 = vrot.lane.b32.xlu0 %v509, 112
    %v3371 = vpop.permute.xlu0 %3370
    %v3373 = vsel %vm511, %v3033, 0
    %v3376 = vsel %vm986, %v3371, 0
    %3378 = vmatprep.subr.bf16.mxu0 0
    %3379 = vmatpush1.bf16.msra.mxu0 %v3376
    %3380 = vmatprep.subr.bf16.mxu0 0
    %3381 = vmatpush1.bf16.msra.mxu0 0
    %3382 = vmatprep.subr.bf16.mxu0 0
    %3383 = vmatpush1.bf16.msra.mxu0 0
    %3384 = vmatprep.subr.bf16.mxu0 0
    %3385 = vmatpush1.bf16.msra.mxu0 0
    %3386 = vmatprep.subr.bf16.mxu0 0
    %3387 = vmatpush1.bf16.msra.mxu0 0
    %3388 = vmatprep.subr.bf16.mxu0 0
    %3389 = vmatpush1.bf16.msra.mxu0 0
    %3390 = vmatprep.subr.bf16.mxu0 0
    %3391 = vmatpush1.bf16.msra.mxu0 0
    %3392 = vmatprep.subr.bf16.mxu0 0
    %3393 = vmatpush1.bf16.msra.mxu0 0
    %3394 = vmatprep.subr.bf16.mxu0 0
    %3395 = vmatpush1.bf16.msra.mxu0 0
    %3396 = vmatprep.subr.bf16.mxu0 0
    %3397 = vmatpush1.bf16.msra.mxu0 0
    %3398 = vmatprep.subr.bf16.mxu0 0
    %3399 = vmatpush1.bf16.msra.mxu0 0
    %3400 = vmatprep.subr.bf16.mxu0 0
    %3401 = vmatpush1.bf16.msra.mxu0 0
    %3402 = vmatprep.subr.bf16.mxu0 0
    %3403 = vmatpush1.bf16.msra.mxu0 0
    %3404 = vmatprep.subr.bf16.mxu0 0
    %3405 = vmatpush1.bf16.msra.mxu0 0
    %3406 = vmatprep.subr.bf16.mxu0 0
    %3407 = vmatpush1.bf16.msra.mxu0 0
    %3408 = vmatprep.subr.bf16.mxu0 0
    %3409 = vmatpush1.bf16.msra.mxu0 0
    %3410 = vmatprep.mubr.bf16.mxu0 0
    %3411 = vmatmul.mubr.bf16.gmra.mrb[0].mxu0 %v3373
    %v3412 = vpop.f32.mrb[0].mxu0
    %v3413 = vadd.f32 0.0, %v3412
    %v3414 = vpop.f32.mrb[0].mxu0
    %v3415 = vpop.f32.mrb[0].mxu0
    %v3416 = vpop.f32.mrb[0].mxu0
    %3417 = vdwg.mxu0
    %v3418 = vsel %vm511, %v3077, 0.0
    %v3419 = vrot.slane %v3418, 4
    %v3420 = vadd.f32 %v3418, %v3419
    %v3421 = vrot.slane %v3420, 2
    %v3422 = vadd.f32 %v3420, %v3421
    %v3423 = vrot.slane %v3422, 1
    %v3424 = vadd.f32 %v3422, %v3423
    %v3425 = vsel %vm511, %v3125, 0.0
    %v3426 = vrot.slane %v3425, 4
    %v3427 = vadd.f32 %v3425, %v3426
    %v3428 = vrot.slane %v3427, 2
    %v3429 = vadd.f32 %v3427, %v3428
    %v3430 = vrot.slane %v3429, 1
    %v3431 = vadd.f32 %v3429, %v3430
    %v3432 = vsel %vm511, %v3173, 0.0
    %v3433 = vrot.slane %v3432, 4
    %v3434 = vadd.f32 %v3432, %v3433
    %v3435 = vrot.slane %v3434, 2
    %v3436 = vadd.f32 %v3434, %v3435
    %v3437 = vrot.slane %v3436, 1
    %v3438 = vadd.f32 %v3436, %v3437
    %v3439 = vsel %vm511, %v3221, 0.0
    %v3440 = vrot.slane %v3439, 4
    %v3441 = vadd.f32 %v3439, %v3440
    %v3442 = vrot.slane %v3441, 2
    %v3443 = vadd.f32 %v3441, %v3442
    %v3444 = vrot.slane %v3443, 1
    %v3445 = vadd.f32 %v3443, %v3444
    %v3446 = vsel %vm511, %v3269, 0.0
    %v3447 = vrot.slane %v3446, 4
    %v3448 = vadd.f32 %v3446, %v3447
    %v3449 = vrot.slane %v3448, 2
    %v3450 = vadd.f32 %v3448, %v3449
    %v3451 = vrot.slane %v3450, 1
    %v3452 = vadd.f32 %v3450, %v3451
    %v3453 = vsel %vm511, %v3317, 0.0
    %v3454 = vrot.slane %v3453, 4
    %v3455 = vadd.f32 %v3453, %v3454
    %v3456 = vrot.slane %v3455, 2
    %v3457 = vadd.f32 %v3455, %v3456
    %v3458 = vrot.slane %v3457, 1
    %v3459 = vadd.f32 %v3457, %v3458
    %v3460 = vsel %vm511, %v3365, 0.0
    %v3461 = vrot.slane %v3460, 4
    %v3462 = vadd.f32 %v3460, %v3461
    %v3463 = vrot.slane %v3462, 2
    %v3464 = vadd.f32 %v3462, %v3463
    %v3465 = vrot.slane %v3464, 1
    %v3466 = vadd.f32 %v3464, %v3465
    %v3467 = vsel %vm511, %v3413, 0.0
    %v3468 = vrot.slane %v3467, 4
    %v3469 = vadd.f32 %v3467, %v3468
    %v3470 = vrot.slane %v3469, 2
    %v3471 = vadd.f32 %v3469, %v3470
    %v3472 = vrot.slane %v3471, 1
    %v3473 = vadd.f32 %v3471, %v3472
    %v3474 = vpack.c.bf16 %v3125, %v3077
    %v3475 = vpack.c.bf16 %v3221, %v3173
    %v3476 = vpack.c.bf16 %v3317, %v3269
    %v3477 = vpack.c.bf16 %v3413, %v3365
    %v3478 = vld [vmem:[#allocation7 + $0x8] sm:$0xf]
    %v3480 = vsel %vm511, %v3474, 0
    %v3483 = vsel %vm511, %v3475, 0
    %v3486 = vsel %vm511, %v3476, 0
    %v3489 = vsel %vm511, %v3477, 0
    %v3492 = vsel %vm986, %v3478, 0
    %3494 = vmatprep.subr.bf16.mxu0 0
    %3495 = vmatpush1.bf16.msra.mxu0 %v3492
    %3496 = vmatprep.subr.bf16.mxu0 0
    %3497 = vmatpush1.bf16.msra.mxu0 0
    %3498 = vmatprep.subr.bf16.mxu0 0
    %3499 = vmatpush1.bf16.msra.mxu0 0
    %3500 = vmatprep.subr.bf16.mxu0 0
    %3501 = vmatpush1.bf16.msra.mxu0 0
    %3502 = vmatprep.subr.bf16.mxu0 0
    %3503 = vmatpush1.bf16.msra.mxu0 0
    %3504 = vmatprep.subr.bf16.mxu0 0
    %3505 = vmatpush1.bf16.msra.mxu0 0
    %3506 = vmatprep.subr.bf16.mxu0 0
    %3507 = vmatpush1.bf16.msra.mxu0 0
    %3508 = vmatprep.subr.bf16.mxu0 0
    %3509 = vmatpush1.bf16.msra.mxu0 0
    %3510 = vmatprep.subr.bf16.mxu0 0
    %3511 = vmatpush1.bf16.msra.mxu0 0
    %3512 = vmatprep.subr.bf16.mxu0 0
    %3513 = vmatpush1.bf16.msra.mxu0 0
    %3514 = vmatprep.subr.bf16.mxu0 0
    %3515 = vmatpush1.bf16.msra.mxu0 0
    %3516 = vmatprep.subr.bf16.mxu0 0
    %3517 = vmatpush1.bf16.msra.mxu0 0
    %3518 = vmatprep.subr.bf16.mxu0 0
    %3519 = vmatpush1.bf16.msra.mxu0 0
    %3520 = vmatprep.subr.bf16.mxu0 0
    %3521 = vmatpush1.bf16.msra.mxu0 0
    %3522 = vmatprep.subr.bf16.mxu0 0
    %3523 = vmatpush1.bf16.msra.mxu0 0
    %3524 = vmatprep.subr.bf16.mxu0 0
    %3525 = vmatpush1.bf16.msra.mxu0 0
    %3526 = vmatprep.mubr.bf16.mxu0 0
    %3527 = vmatmul.mubr.bf16.gmra.mrb[0].mxu0 %v3480
    %v3528 = vpop.f32.mrb[0].mxu0
    %v3529 = vadd.f32 0.0, %v3528
    %v3530 = vpop.f32.mrb[0].mxu0
    %v3531 = vpop.f32.mrb[0].mxu0
    %v3532 = vadd.f32 0.0, %v3531
    %v3533 = vpop.f32.mrb[0].mxu0
    %3534 = vmatprep.mubr.bf16.mxu0 0
    %3535 = vmatmul.mubr.bf16.gmra.mrb[0].mxu0 %v3483
    %v3536 = vpop.f32.mrb[0].mxu0
    %v3537 = vadd.f32 0.0, %v3536
    %v3538 = vpop.f32.mrb[0].mxu0
    %v3539 = vpop.f32.mrb[0].mxu0
    %v3540 = vadd.f32 0.0, %v3539
    %v3541 = vpop.f32.mrb[0].mxu0
    %3542 = vmatprep.mubr.bf16.mxu0 0
    %3543 = vmatmul.mubr.bf16.gmra.mrb[0].mxu0 %v3486
    %v3544 = vpop.f32.mrb[0].mxu0
    %v3545 = vadd.f32 0.0, %v3544
    %v3546 = vpop.f32.mrb[0].mxu0
    %v3547 = vpop.f32.mrb[0].mxu0
    %v3548 = vadd.f32 0.0, %v3547
    %v3549 = vpop.f32.mrb[0].mxu0
    %3550 = vmatprep.mubr.bf16.mxu0 0
    %3551 = vmatmul.mubr.bf16.gmra.mrb[0].mxu0 %v3489
    %v3552 = vpop.f32.mrb[0].mxu0
    %v3553 = vadd.f32 0.0, %v3552
    %v3554 = vpop.f32.mrb[0].mxu0
    %v3555 = vpop.f32.mrb[0].mxu0
    %v3556 = vadd.f32 0.0, %v3555
    %v3557 = vpop.f32.mrb[0].mxu0
    %3558 = vdwg.mxu0
    %v3559 = vadd.f32 %v2500, %v3529
    %v3560 = vadd.f32 %v2503, %v3532
    %v3561 = vadd.f32 %v2508, %v3537
    %v3562 = vadd.f32 %v2511, %v3540
    %v3563 = vadd.f32 %v2516, %v3545
    %v3564 = vadd.f32 %v2519, %v3548
    %v3565 = vadd.f32 %v2524, %v3553
    %v3566 = vadd.f32 %v2527, %v3556
    %3567 = vrot.lane.b32.xlu0 %v494, 104
    %v3568 = vpop.permute.xlu0 %3567
    %v3569 = vrot.slane %v3568, 4
    %3570 = vrot.lane.b32.xlu0 %v1416, 104
    %v3571 = vpop.permute.xlu0 %3570
    %v3573 = vsel %vm511, %v3571, 0
    %v3576 = vsel %vm511, %v3569, 0
    %3578 = vmatprep.subr.bf16.mxu0 0
    %3579 = vmatpush1.bf16.xpose.msra.mxu0 %v3576
    %3580 = vmatprep.subr.bf16.mxu0 0
    %3581 = vmatpush1.bf16.xpose.msra.mxu0 0
    %3582 = vmatprep.subr.bf16.mxu0 0
    %3583 = vmatpush1.bf16.xpose.msra.mxu0 0
    %3584 = vmatprep.subr.bf16.mxu0 0
    %3585 = vmatpush1.bf16.xpose.msra.mxu0 0
    %3586 = vmatprep.subr.bf16.mxu0 0
    %3587 = vmatpush1.bf16.xpose.msra.mxu0 0
    %3588 = vmatprep.subr.bf16.mxu0 0
    %3589 = vmatpush1.bf16.xpose.msra.mxu0 0
    %3590 = vmatprep.subr.bf16.mxu0 0
    %3591 = vmatpush1.bf16.xpose.msra.mxu0 0
    %3592 = vmatprep.subr.bf16.mxu0 0
    %3593 = vmatpush1.bf16.xpose.msra.mxu0 0
    %3594 = vmatprep.subr.bf16.mxu0 0
    %3595 = vmatpush1.bf16.xpose.msra.mxu0 0
    %3596 = vmatprep.subr.bf16.mxu0 0
    %3597 = vmatpush1.bf16.xpose.msra.mxu0 0
    %3598 = vmatprep.subr.bf16.mxu0 0
    %3599 = vmatpush1.bf16.xpose.msra.mxu0 0
    %3600 = vmatprep.subr.bf16.mxu0 0
    %3601 = vmatpush1.bf16.xpose.msra.mxu0 0
    %3602 = vmatprep.subr.bf16.mxu0 0
    %3603 = vmatpush1.bf16.xpose.msra.mxu0 0
    %3604 = vmatprep.subr.bf16.mxu0 0
    %3605 = vmatpush1.bf16.xpose.msra.mxu0 0
    %3606 = vmatprep.subr.bf16.mxu0 0
    %3607 = vmatpush1.bf16.xpose.msra.mxu0 0
    %3608 = vmatprep.subr.bf16.mxu0 0
    %3609 = vmatpush1.bf16.xpose.msra.mxu0 0
    %3610 = vmatprep.mubr.bf16.mxu0 0
    %3611 = vmatmul.mubr.bf16.gmra.mrb[0].mxu0 %v3573
    %v3612 = vpop.f32.mrb[0].mxu0
    %v3613 = vadd.f32 0.0, %v3612
    %v3614 = vpop.f32.mrb[0].mxu0
    %v3615 = vpop.f32.mrb[0].mxu0
    %v3616 = vpop.f32.mrb[0].mxu0
    %3617 = vdwg.mxu0
    %3618 = vrot.lane.b32.xlu0 %v496, 104
    %v3619 = vpop.permute.xlu0 %3618
    %v3620 = vrot.slane %v3619, 4
    %3621 = vrot.lane.b32.xlu0 %v1468, 104
    %v3622 = vpop.permute.xlu0 %3621
    %v3624 = vsel %vm511, %v3622, 0
    %v3627 = vsel %vm511, %v3620, 0
    %3629 = vmatprep.subr.bf16.mxu0 0
    %3630 = vmatpush1.bf16.xpose.msra.mxu0 %v3627
    %3631 = vmatprep.subr.bf16.mxu0 0
    %3632 = vmatpush1.bf16.xpose.msra.mxu0 0
    %3633 = vmatprep.subr.bf16.mxu0 0
    %3634 = vmatpush1.bf16.xpose.msra.mxu0 0
    %3635 = vmatprep.subr.bf16.mxu0 0
    %3636 = vmatpush1.bf16.xpose.msra.mxu0 0
    %3637 = vmatprep.subr.bf16.mxu0 0
    %3638 = vmatpush1.bf16.xpose.msra.mxu0 0
    %3639 = vmatprep.subr.bf16.mxu0 0
    %3640 = vmatpush1.bf16.xpose.msra.mxu0 0
    %3641 = vmatprep.subr.bf16.mxu0 0
    %3642 = vmatpush1.bf16.xpose.msra.mxu0 0
    %3643 = vmatprep.subr.bf16.mxu0 0
    %3644 = vmatpush1.bf16.xpose.msra.mxu0 0
    %3645 = vmatprep.subr.bf16.mxu0 0
    %3646 = vmatpush1.bf16.xpose.msra.mxu0 0
    %3647 = vmatprep.subr.bf16.mxu0 0
    %3648 = vmatpush1.bf16.xpose.msra.mxu0 0
    %3649 = vmatprep.subr.bf16.mxu0 0
    %3650 = vmatpush1.bf16.xpose.msra.mxu0 0
    %3651 = vmatprep.subr.bf16.mxu0 0
    %3652 = vmatpush1.bf16.xpose.msra.mxu0 0
    %3653 = vmatprep.subr.bf16.mxu0 0
    %3654 = vmatpush1.bf16.xpose.msra.mxu0 0
    %3655 = vmatprep.subr.bf16.mxu0 0
    %3656 = vmatpush1.bf16.xpose.msra.mxu0 0
    %3657 = vmatprep.subr.bf16.mxu0 0
    %3658 = vmatpush1.bf16.xpose.msra.mxu0 0
    %3659 = vmatprep.subr.bf16.mxu0 0
    %3660 = vmatpush1.bf16.xpose.msra.mxu0 0
    %3661 = vmatprep.mubr.bf16.mxu0 0
    %3662 = vmatmul.mubr.bf16.gmra.mrb[0].mxu0 %v3624
    %v3663 = vpop.f32.mrb[0].mxu0
    %v3664 = vadd.f32 0.0, %v3663
    %v3665 = vpop.f32.mrb[0].mxu0
    %v3666 = vpop.f32.mrb[0].mxu0
    %v3667 = vpop.f32.mrb[0].mxu0
    %3668 = vdwg.mxu0
    %3669 = vrot.lane.b32.xlu0 %v498, 104
    %v3670 = vpop.permute.xlu0 %3669
    %v3671 = vrot.slane %v3670, 4
    %3672 = vrot.lane.b32.xlu0 %v1520, 104
    %v3673 = vpop.permute.xlu0 %3672
    %v3675 = vsel %vm511, %v3673, 0
    %v3678 = vsel %vm511, %v3671, 0
    %3680 = vmatprep.subr.bf16.mxu0 0
    %3681 = vmatpush1.bf16.xpose.msra.mxu0 %v3678
    %3682 = vmatprep.subr.bf16.mxu0 0
    %3683 = vmatpush1.bf16.xpose.msra.mxu0 0
    %3684 = vmatprep.subr.bf16.mxu0 0
    %3685 = vmatpush1.bf16.xpose.msra.mxu0 0
    %3686 = vmatprep.subr.bf16.mxu0 0
    %3687 = vmatpush1.bf16.xpose.msra.mxu0 0
    %3688 = vmatprep.subr.bf16.mxu0 0
    %3689 = vmatpush1.bf16.xpose.msra.mxu0 0
    %3690 = vmatprep.subr.bf16.mxu0 0
    %3691 = vmatpush1.bf16.xpose.msra.mxu0 0
    %3692 = vmatprep.subr.bf16.mxu0 0
    %3693 = vmatpush1.bf16.xpose.msra.mxu0 0
    %3694 = vmatprep.subr.bf16.mxu0 0
    %3695 = vmatpush1.bf16.xpose.msra.mxu0 0
    %3696 = vmatprep.subr.bf16.mxu0 0
    %3697 = vmatpush1.bf16.xpose.msra.mxu0 0
    %3698 = vmatprep.subr.bf16.mxu0 0
    %3699 = vmatpush1.bf16.xpose.msra.mxu0 0
    %3700 = vmatprep.subr.bf16.mxu0 0
    %3701 = vmatpush1.bf16.xpose.msra.mxu0 0
    %3702 = vmatprep.subr.bf16.mxu0 0
    %3703 = vmatpush1.bf16.xpose.msra.mxu0 0
    %3704 = vmatprep.subr.bf16.mxu0 0
    %3705 = vmatpush1.bf16.xpose.msra.mxu0 0
    %3706 = vmatprep.subr.bf16.mxu0 0
    %3707 = vmatpush1.bf16.xpose.msra.mxu0 0
    %3708 = vmatprep.subr.bf16.mxu0 0
    %3709 = vmatpush1.bf16.xpose.msra.mxu0 0
    %3710 = vmatprep.subr.bf16.mxu0 0
    %3711 = vmatpush1.bf16.xpose.msra.mxu0 0
    %3712 = vmatprep.mubr.bf16.mxu0 0
    %3713 = vmatmul.mubr.bf16.gmra.mrb[0].mxu0 %v3675
    %v3714 = vpop.f32.mrb[0].mxu0
    %v3715 = vadd.f32 0.0, %v3714
    %v3716 = vpop.f32.mrb[0].mxu0
    %v3717 = vpop.f32.mrb[0].mxu0
    %v3718 = vpop.f32.mrb[0].mxu0
    %3719 = vdwg.mxu0
    %3720 = vrot.lane.b32.xlu0 %v500, 104
    %v3721 = vpop.permute.xlu0 %3720
    %v3722 = vrot.slane %v3721, 4
    %3723 = vrot.lane.b32.xlu0 %v1572, 104
    %v3724 = vpop.permute.xlu0 %3723
    %v3726 = vsel %vm511, %v3724, 0
    %v3729 = vsel %vm511, %v3722, 0
    %3731 = vmatprep.subr.bf16.mxu0 0
    %3732 = vmatpush1.bf16.xpose.msra.mxu0 %v3729
    %3733 = vmatprep.subr.bf16.mxu0 0
    %3734 = vmatpush1.bf16.xpose.msra.mxu0 0
    %3735 = vmatprep.subr.bf16.mxu0 0
    %3736 = vmatpush1.bf16.xpose.msra.mxu0 0
    %3737 = vmatprep.subr.bf16.mxu0 0
    %3738 = vmatpush1.bf16.xpose.msra.mxu0 0
    %3739 = vmatprep.subr.bf16.mxu0 0
    %3740 = vmatpush1.bf16.xpose.msra.mxu0 0
    %3741 = vmatprep.subr.bf16.mxu0 0
    %3742 = vmatpush1.bf16.xpose.msra.mxu0 0
    %3743 = vmatprep.subr.bf16.mxu0 0
    %3744 = vmatpush1.bf16.xpose.msra.mxu0 0
    %3745 = vmatprep.subr.bf16.mxu0 0
    %3746 = vmatpush1.bf16.xpose.msra.mxu0 0
    %3747 = vmatprep.subr.bf16.mxu0 0
    %3748 = vmatpush1.bf16.xpose.msra.mxu0 0
    %3749 = vmatprep.subr.bf16.mxu0 0
    %3750 = vmatpush1.bf16.xpose.msra.mxu0 0
    %3751 = vmatprep.subr.bf16.mxu0 0
    %3752 = vmatpush1.bf16.xpose.msra.mxu0 0
    %3753 = vmatprep.subr.bf16.mxu0 0
    %3754 = vmatpush1.bf16.xpose.msra.mxu0 0
    %3755 = vmatprep.subr.bf16.mxu0 0
    %3756 = vmatpush1.bf16.xpose.msra.mxu0 0
    %3757 = vmatprep.subr.bf16.mxu0 0
    %3758 = vmatpush1.bf16.xpose.msra.mxu0 0
    %3759 = vmatprep.subr.bf16.mxu0 0
    %3760 = vmatpush1.bf16.xpose.msra.mxu0 0
    %3761 = vmatprep.subr.bf16.mxu0 0
    %3762 = vmatpush1.bf16.xpose.msra.mxu0 0
    %3763 = vmatprep.mubr.bf16.mxu0 0
    %3764 = vmatmul.mubr.bf16.gmra.mrb[0].mxu0 %v3726
    %v3765 = vpop.f32.mrb[0].mxu0
    %v3766 = vadd.f32 0.0, %v3765
    %v3767 = vpop.f32.mrb[0].mxu0
    %v3768 = vpop.f32.mrb[0].mxu0
    %v3769 = vpop.f32.mrb[0].mxu0
    %3770 = vdwg.mxu0
    %3771 = vrot.lane.b32.xlu0 %v502, 104
    %v3772 = vpop.permute.xlu0 %3771
    %v3773 = vrot.slane %v3772, 4
    %3774 = vrot.lane.b32.xlu0 %v1624, 104
    %v3775 = vpop.permute.xlu0 %3774
    %v3777 = vsel %vm511, %v3775, 0
    %v3780 = vsel %vm511, %v3773, 0
    %3782 = vmatprep.subr.bf16.mxu0 0
    %3783 = vmatpush1.bf16.xpose.msra.mxu0 %v3780
    %3784 = vmatprep.subr.bf16.mxu0 0
    %3785 = vmatpush1.bf16.xpose.msra.mxu0 0
    %3786 = vmatprep.subr.bf16.mxu0 0
    %3787 = vmatpush1.bf16.xpose.msra.mxu0 0
    %3788 = vmatprep.subr.bf16.mxu0 0
    %3789 = vmatpush1.bf16.xpose.msra.mxu0 0
    %3790 = vmatprep.subr.bf16.mxu0 0
    %3791 = vmatpush1.bf16.xpose.msra.mxu0 0
    %3792 = vmatprep.subr.bf16.mxu0 0
    %3793 = vmatpush1.bf16.xpose.msra.mxu0 0
    %3794 = vmatprep.subr.bf16.mxu0 0
    %3795 = vmatpush1.bf16.xpose.msra.mxu0 0
    %3796 = vmatprep.subr.bf16.mxu0 0
    %3797 = vmatpush1.bf16.xpose.msra.mxu0 0
    %3798 = vmatprep.subr.bf16.mxu0 0
    %3799 = vmatpush1.bf16.xpose.msra.mxu0 0
    %3800 = vmatprep.subr.bf16.mxu0 0
    %3801 = vmatpush1.bf16.xpose.msra.mxu0 0
    %3802 = vmatprep.subr.bf16.mxu0 0
    %3803 = vmatpush1.bf16.xpose.msra.mxu0 0
    %3804 = vmatprep.subr.bf16.mxu0 0
    %3805 = vmatpush1.bf16.xpose.msra.mxu0 0
    %3806 = vmatprep.subr.bf16.mxu0 0
    %3807 = vmatpush1.bf16.xpose.msra.mxu0 0
    %3808 = vmatprep.subr.bf16.mxu0 0
    %3809 = vmatpush1.bf16.xpose.msra.mxu0 0
    %3810 = vmatprep.subr.bf16.mxu0 0
    %3811 = vmatpush1.bf16.xpose.msra.mxu0 0
    %3812 = vmatprep.subr.bf16.mxu0 0
    %3813 = vmatpush1.bf16.xpose.msra.mxu0 0
    %3814 = vmatprep.mubr.bf16.mxu0 0
    %3815 = vmatmul.mubr.bf16.gmra.mrb[0].mxu0 %v3777
    %v3816 = vpop.f32.mrb[0].mxu0
    %v3817 = vadd.f32 0.0, %v3816
    %v3818 = vpop.f32.mrb[0].mxu0
    %v3819 = vpop.f32.mrb[0].mxu0
    %v3820 = vpop.f32.mrb[0].mxu0
    %3821 = vdwg.mxu0
    %3822 = vrot.lane.b32.xlu0 %v504, 104
    %v3823 = vpop.permute.xlu0 %3822
    %v3824 = vrot.slane %v3823, 4
    %3825 = vrot.lane.b32.xlu0 %v1676, 104
    %v3826 = vpop.permute.xlu0 %3825
    %v3828 = vsel %vm511, %v3826, 0
    %v3831 = vsel %vm511, %v3824, 0
    %3833 = vmatprep.subr.bf16.mxu0 0
    %3834 = vmatpush1.bf16.xpose.msra.mxu0 %v3831
    %3835 = vmatprep.subr.bf16.mxu0 0
    %3836 = vmatpush1.bf16.xpose.msra.mxu0 0
    %3837 = vmatprep.subr.bf16.mxu0 0
    %3838 = vmatpush1.bf16.xpose.msra.mxu0 0
    %3839 = vmatprep.subr.bf16.mxu0 0
    %3840 = vmatpush1.bf16.xpose.msra.mxu0 0
    %3841 = vmatprep.subr.bf16.mxu0 0
    %3842 = vmatpush1.bf16.xpose.msra.mxu0 0
    %3843 = vmatprep.subr.bf16.mxu0 0
    %3844 = vmatpush1.bf16.xpose.msra.mxu0 0
    %3845 = vmatprep.subr.bf16.mxu0 0
    %3846 = vmatpush1.bf16.xpose.msra.mxu0 0
    %3847 = vmatprep.subr.bf16.mxu0 0
    %3848 = vmatpush1.bf16.xpose.msra.mxu0 0
    %3849 = vmatprep.subr.bf16.mxu0 0
    %3850 = vmatpush1.bf16.xpose.msra.mxu0 0
    %3851 = vmatprep.subr.bf16.mxu0 0
    %3852 = vmatpush1.bf16.xpose.msra.mxu0 0
    %3853 = vmatprep.subr.bf16.mxu0 0
    %3854 = vmatpush1.bf16.xpose.msra.mxu0 0
    %3855 = vmatprep.subr.bf16.mxu0 0
    %3856 = vmatpush1.bf16.xpose.msra.mxu0 0
    %3857 = vmatprep.subr.bf16.mxu0 0
    %3858 = vmatpush1.bf16.xpose.msra.mxu0 0
    %3859 = vmatprep.subr.bf16.mxu0 0
    %3860 = vmatpush1.bf16.xpose.msra.mxu0 0
    %3861 = vmatprep.subr.bf16.mxu0 0
    %3862 = vmatpush1.bf16.xpose.msra.mxu0 0
    %3863 = vmatprep.subr.bf16.mxu0 0
    %3864 = vmatpush1.bf16.xpose.msra.mxu0 0
    %3865 = vmatprep.mubr.bf16.mxu0 0
    %3866 = vmatmul.mubr.bf16.gmra.mrb[0].mxu0 %v3828
    %v3867 = vpop.f32.mrb[0].mxu0
    %v3868 = vadd.f32 0.0, %v3867
    %v3869 = vpop.f32.mrb[0].mxu0
    %v3870 = vpop.f32.mrb[0].mxu0
    %v3871 = vpop.f32.mrb[0].mxu0
    %3872 = vdwg.mxu0
    %3873 = vrot.lane.b32.xlu0 %v506, 104
    %v3874 = vpop.permute.xlu0 %3873
    %v3875 = vrot.slane %v3874, 4
    %3876 = vrot.lane.b32.xlu0 %v1728, 104
    %v3877 = vpop.permute.xlu0 %3876
    %v3879 = vsel %vm511, %v3877, 0
    %v3882 = vsel %vm511, %v3875, 0
    %3884 = vmatprep.subr.bf16.mxu0 0
    %3885 = vmatpush1.bf16.xpose.msra.mxu0 %v3882
    %3886 = vmatprep.subr.bf16.mxu0 0
    %3887 = vmatpush1.bf16.xpose.msra.mxu0 0
    %3888 = vmatprep.subr.bf16.mxu0 0
    %3889 = vmatpush1.bf16.xpose.msra.mxu0 0
    %3890 = vmatprep.subr.bf16.mxu0 0
    %3891 = vmatpush1.bf16.xpose.msra.mxu0 0
    %3892 = vmatprep.subr.bf16.mxu0 0
    %3893 = vmatpush1.bf16.xpose.msra.mxu0 0
    %3894 = vmatprep.subr.bf16.mxu0 0
    %3895 = vmatpush1.bf16.xpose.msra.mxu0 0
    %3896 = vmatprep.subr.bf16.mxu0 0
    %3897 = vmatpush1.bf16.xpose.msra.mxu0 0
    %3898 = vmatprep.subr.bf16.mxu0 0
    %3899 = vmatpush1.bf16.xpose.msra.mxu0 0
    %3900 = vmatprep.subr.bf16.mxu0 0
    %3901 = vmatpush1.bf16.xpose.msra.mxu0 0
    %3902 = vmatprep.subr.bf16.mxu0 0
    %3903 = vmatpush1.bf16.xpose.msra.mxu0 0
    %3904 = vmatprep.subr.bf16.mxu0 0
    %3905 = vmatpush1.bf16.xpose.msra.mxu0 0
    %3906 = vmatprep.subr.bf16.mxu0 0
    %3907 = vmatpush1.bf16.xpose.msra.mxu0 0
    %3908 = vmatprep.subr.bf16.mxu0 0
    %3909 = vmatpush1.bf16.xpose.msra.mxu0 0
    %3910 = vmatprep.subr.bf16.mxu0 0
    %3911 = vmatpush1.bf16.xpose.msra.mxu0 0
    %3912 = vmatprep.subr.bf16.mxu0 0
    %3913 = vmatpush1.bf16.xpose.msra.mxu0 0
    %3914 = vmatprep.subr.bf16.mxu0 0
    %3915 = vmatpush1.bf16.xpose.msra.mxu0 0
    %3916 = vmatprep.mubr.bf16.mxu0 0
    %3917 = vmatmul.mubr.bf16.gmra.mrb[0].mxu0 %v3879
    %v3918 = vpop.f32.mrb[0].mxu0
    %v3919 = vadd.f32 0.0, %v3918
    %v3920 = vpop.f32.mrb[0].mxu0
    %v3921 = vpop.f32.mrb[0].mxu0
    %v3922 = vpop.f32.mrb[0].mxu0
    %3923 = vdwg.mxu0
    %3924 = vrot.lane.b32.xlu0 %v508, 104
    %v3925 = vpop.permute.xlu0 %3924
    %v3926 = vrot.slane %v3925, 4
    %3927 = vrot.lane.b32.xlu0 %v1780, 104
    %v3928 = vpop.permute.xlu0 %3927
    %v3930 = vsel %vm511, %v3928, 0
    %v3933 = vsel %vm511, %v3926, 0
    %3935 = vmatprep.subr.bf16.mxu0 0
    %3936 = vmatpush1.bf16.xpose.msra.mxu0 %v3933
    %3937 = vmatprep.subr.bf16.mxu0 0
    %3938 = vmatpush1.bf16.xpose.msra.mxu0 0
    %3939 = vmatprep.subr.bf16.mxu0 0
    %3940 = vmatpush1.bf16.xpose.msra.mxu0 0
    %3941 = vmatprep.subr.bf16.mxu0 0
    %3942 = vmatpush1.bf16.xpose.msra.mxu0 0
    %3943 = vmatprep.subr.bf16.mxu0 0
    %3944 = vmatpush1.bf16.xpose.msra.mxu0 0
    %3945 = vmatprep.subr.bf16.mxu0 0
    %3946 = vmatpush1.bf16.xpose.msra.mxu0 0
    %3947 = vmatprep.subr.bf16.mxu0 0
    %3948 = vmatpush1.bf16.xpose.msra.mxu0 0
    %3949 = vmatprep.subr.bf16.mxu0 0
    %3950 = vmatpush1.bf16.xpose.msra.mxu0 0
    %3951 = vmatprep.subr.bf16.mxu0 0
    %3952 = vmatpush1.bf16.xpose.msra.mxu0 0
    %3953 = vmatprep.subr.bf16.mxu0 0
    %3954 = vmatpush1.bf16.xpose.msra.mxu0 0
    %3955 = vmatprep.subr.bf16.mxu0 0
    %3956 = vmatpush1.bf16.xpose.msra.mxu0 0
    %3957 = vmatprep.subr.bf16.mxu0 0
    %3958 = vmatpush1.bf16.xpose.msra.mxu0 0
    %3959 = vmatprep.subr.bf16.mxu0 0
    %3960 = vmatpush1.bf16.xpose.msra.mxu0 0
    %3961 = vmatprep.subr.bf16.mxu0 0
    %3962 = vmatpush1.bf16.xpose.msra.mxu0 0
    %3963 = vmatprep.subr.bf16.mxu0 0
    %3964 = vmatpush1.bf16.xpose.msra.mxu0 0
    %3965 = vmatprep.subr.bf16.mxu0 0
    %3966 = vmatpush1.bf16.xpose.msra.mxu0 0
    %3967 = vmatprep.mubr.bf16.mxu0 0
    %3968 = vmatmul.mubr.bf16.gmra.mrb[0].mxu0 %v3930
    %v3969 = vpop.f32.mrb[0].mxu0
    %v3970 = vadd.f32 0.0, %v3969
    %v3971 = vpop.f32.mrb[0].mxu0
    %v3972 = vpop.f32.mrb[0].mxu0
    %v3973 = vpop.f32.mrb[0].mxu0
    %3974 = vdwg.mxu0
    %v3975 = vsel %vm511, %v3613, -inf
    %3976 = vmax.xlane.f32.xlu0 %v3975
    %v3977 = vpop.xlane.xlu0 %3976
    %v3978 = vsel %vm511, %v3664, -inf
    %3979 = vmax.xlane.f32.xlu0 %v3978
    %v3980 = vpop.xlane.xlu0 %3979
    %v3981 = vsel %vm511, %v3715, -inf
    %3982 = vmax.xlane.f32.xlu0 %v3981
    %v3983 = vpop.xlane.xlu0 %3982
    %v3984 = vsel %vm511, %v3766, -inf
    %3985 = vmax.xlane.f32.xlu0 %v3984
    %v3986 = vpop.xlane.xlu0 %3985
    %v3987 = vsel %vm511, %v3817, -inf
    %3988 = vmax.xlane.f32.xlu0 %v3987
    %v3989 = vpop.xlane.xlu0 %3988
    %v3990 = vsel %vm511, %v3868, -inf
    %3991 = vmax.xlane.f32.xlu0 %v3990
    %v3992 = vpop.xlane.xlu0 %3991
    %v3993 = vsel %vm511, %v3919, -inf
    %3994 = vmax.xlane.f32.xlu0 %v3993
    %v3995 = vpop.xlane.xlu0 %3994
    %v3996 = vsel %vm511, %v3970, -inf
    %3997 = vmax.xlane.f32.xlu0 %v3996
    %v3998 = vpop.xlane.xlu0 %3997
    %v3999 = vsub.f32 %v3613, %v3977
    %v4000 = vsub.f32 %v3664, %v3980
    %v4001 = vsub.f32 %v3715, %v3983
    %v4002 = vsub.f32 %v3766, %v3986
    %v4003 = vsub.f32 %v3817, %v3989
    %v4004 = vsub.f32 %v3868, %v3992
    %v4005 = vsub.f32 %v3919, %v3995
    %v4006 = vsub.f32 %v3970, %v3998
    %v4007 = vmul.f32 %v3999, 1.442695
    %v4008 = vpow.pop %v4007
    %v4009 = vmul.f32 %v4000, 1.442695
    %v4010 = vpow.pop %v4009
    %v4011 = vmul.f32 %v4001, 1.442695
    %v4012 = vpow.pop %v4011
    %v4013 = vmul.f32 %v4002, 1.442695
    %v4014 = vpow.pop %v4013
    %v4015 = vmul.f32 %v4003, 1.442695
    %v4016 = vpow.pop %v4015
    %v4017 = vmul.f32 %v4004, 1.442695
    %v4018 = vpow.pop %v4017
    %v4019 = vmul.f32 %v4005, 1.442695
    %v4020 = vpow.pop %v4019
    %v4021 = vmul.f32 %v4006, 1.442695
    %v4022 = vpow.pop %v4021
    %v4023 = vsel %vm511, %v4008, 0.0
    %4024 = vadd.xlane.f32.xlu0 %v4023
    %v4025 = vpop.xlane.xlu0 %4024
    %v4026 = vsel %vm511, %v4010, 0.0
    %4027 = vadd.xlane.f32.xlu0 %v4026
    %v4028 = vpop.xlane.xlu0 %4027
    %v4029 = vsel %vm511, %v4012, 0.0
    %4030 = vadd.xlane.f32.xlu0 %v4029
    %v4031 = vpop.xlane.xlu0 %4030
    %v4032 = vsel %vm511, %v4014, 0.0
    %4033 = vadd.xlane.f32.xlu0 %v4032
    %v4034 = vpop.xlane.xlu0 %4033
    %v4035 = vsel %vm511, %v4016, 0.0
    %4036 = vadd.xlane.f32.xlu0 %v4035
    %v4037 = vpop.xlane.xlu0 %4036
    %v4038 = vsel %vm511, %v4018, 0.0
    %4039 = vadd.xlane.f32.xlu0 %v4038
    %v4040 = vpop.xlane.xlu0 %4039
    %v4041 = vsel %vm511, %v4020, 0.0
    %4042 = vadd.xlane.f32.xlu0 %v4041
    %v4043 = vpop.xlane.xlu0 %4042
    %v4044 = vsel %vm511, %v4022, 0.0
    %4045 = vadd.xlane.f32.xlu0 %v4044
    %v4046 = vpop.xlane.xlu0 %4045
    %v4047 = vrcp.pop %v4025
    %v4048 = vrcp.pop %v4028
    %v4049 = vrcp.pop %v4031
    %v4050 = vrcp.pop %v4034
    %v4051 = vrcp.pop %v4037
    %v4052 = vrcp.pop %v4040
    %v4053 = vrcp.pop %v4043
    %v4054 = vrcp.pop %v4046
    %v4055 = vmul.f32 %v4008, %v4047
    %v4056 = vmul.f32 %v4010, %v4048
    %v4057 = vmul.f32 %v4012, %v4049
    %v4058 = vmul.f32 %v4014, %v4050
    %v4059 = vmul.f32 %v4016, %v4051
    %v4060 = vmul.f32 %v4018, %v4052
    %v4061 = vmul.f32 %v4020, %v4053
    %v4062 = vmul.f32 %v4022, %v4054
    %v4063 = vpack.c.bf16 %v4055, %v4055
    %v4064 = vpack.c.bf16 %v4056, %v4056
    %v4065 = vpack.c.bf16 %v4057, %v4057
    %v4066 = vpack.c.bf16 %v4058, %v4058
    %v4067 = vpack.c.bf16 %v4059, %v4059
    %v4068 = vpack.c.bf16 %v4060, %v4060
    %v4069 = vpack.c.bf16 %v4061, %v4061
    %v4070 = vpack.c.bf16 %v4062, %v4062
    %4071 = vrot.lane.b32.xlu0 %v495, 104
    %v4072 = vpop.permute.xlu0 %4071
    %v4074 = vsel %vm511, %v4063, 0
    %v4077 = vsel %vm986, %v4072, 0
    %4079 = vmatprep.subr.bf16.mxu0 0
    %4080 = vmatpush1.bf16.msra.mxu0 %v4077
    %4081 = vmatprep.subr.bf16.mxu0 0
    %4082 = vmatpush1.bf16.msra.mxu0 0
    %4083 = vmatprep.subr.bf16.mxu0 0
    %4084 = vmatpush1.bf16.msra.mxu0 0
    %4085 = vmatprep.subr.bf16.mxu0 0
    %4086 = vmatpush1.bf16.msra.mxu0 0
    %4087 = vmatprep.subr.bf16.mxu0 0
    %4088 = vmatpush1.bf16.msra.mxu0 0
    %4089 = vmatprep.subr.bf16.mxu0 0
    %4090 = vmatpush1.bf16.msra.mxu0 0
    %4091 = vmatprep.subr.bf16.mxu0 0
    %4092 = vmatpush1.bf16.msra.mxu0 0
    %4093 = vmatprep.subr.bf16.mxu0 0
    %4094 = vmatpush1.bf16.msra.mxu0 0
    %4095 = vmatprep.subr.bf16.mxu0 0
    %4096 = vmatpush1.bf16.msra.mxu0 0
    %4097 = vmatprep.subr.bf16.mxu0 0
    %4098 = vmatpush1.bf16.msra.mxu0 0
    %4099 = vmatprep.subr.bf16.mxu0 0
    %4100 = vmatpush1.bf16.msra.mxu0 0
    %4101 = vmatprep.subr.bf16.mxu0 0
    %4102 = vmatpush1.bf16.msra.mxu0 0
    %4103 = vmatprep.subr.bf16.mxu0 0
    %4104 = vmatpush1.bf16.msra.mxu0 0
    %4105 = vmatprep.subr.bf16.mxu0 0
    %4106 = vmatpush1.bf16.msra.mxu0 0
    %4107 = vmatprep.subr.bf16.mxu0 0
    %4108 = vmatpush1.bf16.msra.mxu0 0
    %4109 = vmatprep.subr.bf16.mxu0 0
    %4110 = vmatpush1.bf16.msra.mxu0 0
    %4111 = vmatprep.mubr.bf16.mxu0 0
    %4112 = vmatmul.mubr.bf16.gmra.mrb[0].mxu0 %v4074
    %v4113 = vpop.f32.mrb[0].mxu0
    %v4114 = vadd.f32 0.0, %v4113
    %v4115 = vpop.f32.mrb[0].mxu0
    %v4116 = vpop.f32.mrb[0].mxu0
    %v4117 = vpop.f32.mrb[0].mxu0
    %4118 = vdwg.mxu0
    %4119 = vrot.lane.b32.xlu0 %v497, 104
    %v4120 = vpop.permute.xlu0 %4119
    %v4122 = vsel %vm511, %v4064, 0
    %v4125 = vsel %vm986, %v4120, 0
    %4127 = vmatprep.subr.bf16.mxu0 0
    %4128 = vmatpush1.bf16.msra.mxu0 %v4125
    %4129 = vmatprep.subr.bf16.mxu0 0
    %4130 = vmatpush1.bf16.msra.mxu0 0
    %4131 = vmatprep.subr.bf16.mxu0 0
    %4132 = vmatpush1.bf16.msra.mxu0 0
    %4133 = vmatprep.subr.bf16.mxu0 0
    %4134 = vmatpush1.bf16.msra.mxu0 0
    %4135 = vmatprep.subr.bf16.mxu0 0
    %4136 = vmatpush1.bf16.msra.mxu0 0
    %4137 = vmatprep.subr.bf16.mxu0 0
    %4138 = vmatpush1.bf16.msra.mxu0 0
    %4139 = vmatprep.subr.bf16.mxu0 0
    %4140 = vmatpush1.bf16.msra.mxu0 0
    %4141 = vmatprep.subr.bf16.mxu0 0
    %4142 = vmatpush1.bf16.msra.mxu0 0
    %4143 = vmatprep.subr.bf16.mxu0 0
    %4144 = vmatpush1.bf16.msra.mxu0 0
    %4145 = vmatprep.subr.bf16.mxu0 0
    %4146 = vmatpush1.bf16.msra.mxu0 0
    %4147 = vmatprep.subr.bf16.mxu0 0
    %4148 = vmatpush1.bf16.msra.mxu0 0
    %4149 = vmatprep.subr.bf16.mxu0 0
    %4150 = vmatpush1.bf16.msra.mxu0 0
    %4151 = vmatprep.subr.bf16.mxu0 0
    %4152 = vmatpush1.bf16.msra.mxu0 0
    %4153 = vmatprep.subr.bf16.mxu0 0
    %4154 = vmatpush1.bf16.msra.mxu0 0
    %4155 = vmatprep.subr.bf16.mxu0 0
    %4156 = vmatpush1.bf16.msra.mxu0 0
    %4157 = vmatprep.subr.bf16.mxu0 0
    %4158 = vmatpush1.bf16.msra.mxu0 0
    %4159 = vmatprep.mubr.bf16.mxu0 0
    %4160 = vmatmul.mubr.bf16.gmra.mrb[0].mxu0 %v4122
    %v4161 = vpop.f32.mrb[0].mxu0
    %v4162 = vadd.f32 0.0, %v4161
    %v4163 = vpop.f32.mrb[0].mxu0
    %v4164 = vpop.f32.mrb[0].mxu0
    %v4165 = vpop.f32.mrb[0].mxu0
    %4166 = vdwg.mxu0
    %4167 = vrot.lane.b32.xlu0 %v499, 104
    %v4168 = vpop.permute.xlu0 %4167
    %v4170 = vsel %vm511, %v4065, 0
    %v4173 = vsel %vm986, %v4168, 0
    %4175 = vmatprep.subr.bf16.mxu0 0
    %4176 = vmatpush1.bf16.msra.mxu0 %v4173
    %4177 = vmatprep.subr.bf16.mxu0 0
    %4178 = vmatpush1.bf16.msra.mxu0 0
    %4179 = vmatprep.subr.bf16.mxu0 0
    %4180 = vmatpush1.bf16.msra.mxu0 0
    %4181 = vmatprep.subr.bf16.mxu0 0
    %4182 = vmatpush1.bf16.msra.mxu0 0
    %4183 = vmatprep.subr.bf16.mxu0 0
    %4184 = vmatpush1.bf16.msra.mxu0 0
    %4185 = vmatprep.subr.bf16.mxu0 0
    %4186 = vmatpush1.bf16.msra.mxu0 0
    %4187 = vmatprep.subr.bf16.mxu0 0
    %4188 = vmatpush1.bf16.msra.mxu0 0
    %4189 = vmatprep.subr.bf16.mxu0 0
    %4190 = vmatpush1.bf16.msra.mxu0 0
    %4191 = vmatprep.subr.bf16.mxu0 0
    %4192 = vmatpush1.bf16.msra.mxu0 0
    %4193 = vmatprep.subr.bf16.mxu0 0
    %4194 = vmatpush1.bf16.msra.mxu0 0
    %4195 = vmatprep.subr.bf16.mxu0 0
    %4196 = vmatpush1.bf16.msra.mxu0 0
    %4197 = vmatprep.subr.bf16.mxu0 0
    %4198 = vmatpush1.bf16.msra.mxu0 0
    %4199 = vmatprep.subr.bf16.mxu0 0
    %4200 = vmatpush1.bf16.msra.mxu0 0
    %4201 = vmatprep.subr.bf16.mxu0 0
    %4202 = vmatpush1.bf16.msra.mxu0 0
    %4203 = vmatprep.subr.bf16.mxu0 0
    %4204 = vmatpush1.bf16.msra.mxu0 0
    %4205 = vmatprep.subr.bf16.mxu0 0
    %4206 = vmatpush1.bf16.msra.mxu0 0
    %4207 = vmatprep.mubr.bf16.mxu0 0
    %4208 = vmatmul.mubr.bf16.gmra.mrb[0].mxu0 %v4170
    %v4209 = vpop.f32.mrb[0].mxu0
    %v4210 = vadd.f32 0.0, %v4209
    %v4211 = vpop.f32.mrb[0].mxu0
    %v4212 = vpop.f32.mrb[0].mxu0
    %v4213 = vpop.f32.mrb[0].mxu0
    %4214 = vdwg.mxu0
    %4215 = vrot.lane.b32.xlu0 %v501, 104
    %v4216 = vpop.permute.xlu0 %4215
    %v4218 = vsel %vm511, %v4066, 0
    %v4221 = vsel %vm986, %v4216, 0
    %4223 = vmatprep.subr.bf16.mxu0 0
    %4224 = vmatpush1.bf16.msra.mxu0 %v4221
    %4225 = vmatprep.subr.bf16.mxu0 0
    %4226 = vmatpush1.bf16.msra.mxu0 0
    %4227 = vmatprep.subr.bf16.mxu0 0
    %4228 = vmatpush1.bf16.msra.mxu0 0
    %4229 = vmatprep.subr.bf16.mxu0 0
    %4230 = vmatpush1.bf16.msra.mxu0 0
    %4231 = vmatprep.subr.bf16.mxu0 0
    %4232 = vmatpush1.bf16.msra.mxu0 0
    %4233 = vmatprep.subr.bf16.mxu0 0
    %4234 = vmatpush1.bf16.msra.mxu0 0
    %4235 = vmatprep.subr.bf16.mxu0 0
    %4236 = vmatpush1.bf16.msra.mxu0 0
    %4237 = vmatprep.subr.bf16.mxu0 0
    %4238 = vmatpush1.bf16.msra.mxu0 0
    %4239 = vmatprep.subr.bf16.mxu0 0
    %4240 = vmatpush1.bf16.msra.mxu0 0
    %4241 = vmatprep.subr.bf16.mxu0 0
    %4242 = vmatpush1.bf16.msra.mxu0 0
    %4243 = vmatprep.subr.bf16.mxu0 0
    %4244 = vmatpush1.bf16.msra.mxu0 0
    %4245 = vmatprep.subr.bf16.mxu0 0
    %4246 = vmatpush1.bf16.msra.mxu0 0
    %4247 = vmatprep.subr.bf16.mxu0 0
    %4248 = vmatpush1.bf16.msra.mxu0 0
    %4249 = vmatprep.subr.bf16.mxu0 0
    %4250 = vmatpush1.bf16.msra.mxu0 0
    %4251 = vmatprep.subr.bf16.mxu0 0
    %4252 = vmatpush1.bf16.msra.mxu0 0
    %4253 = vmatprep.subr.bf16.mxu0 0
    %4254 = vmatpush1.bf16.msra.mxu0 0
    %4255 = vmatprep.mubr.bf16.mxu0 0
    %4256 = vmatmul.mubr.bf16.gmra.mrb[0].mxu0 %v4218
    %v4257 = vpop.f32.mrb[0].mxu0
    %v4258 = vadd.f32 0.0, %v4257
    %v4259 = vpop.f32.mrb[0].mxu0
    %v4260 = vpop.f32.mrb[0].mxu0
    %v4261 = vpop.f32.mrb[0].mxu0
    %4262 = vdwg.mxu0
    %4263 = vrot.lane.b32.xlu0 %v503, 104
    %v4264 = vpop.permute.xlu0 %4263
    %v4266 = vsel %vm511, %v4067, 0
    %v4269 = vsel %vm986, %v4264, 0
    %4271 = vmatprep.subr.bf16.mxu0 0
    %4272 = vmatpush1.bf16.msra.mxu0 %v4269
    %4273 = vmatprep.subr.bf16.mxu0 0
    %4274 = vmatpush1.bf16.msra.mxu0 0
    %4275 = vmatprep.subr.bf16.mxu0 0
    %4276 = vmatpush1.bf16.msra.mxu0 0
    %4277 = vmatprep.subr.bf16.mxu0 0
    %4278 = vmatpush1.bf16.msra.mxu0 0
    %4279 = vmatprep.subr.bf16.mxu0 0
    %4280 = vmatpush1.bf16.msra.mxu0 0
    %4281 = vmatprep.subr.bf16.mxu0 0
    %4282 = vmatpush1.bf16.msra.mxu0 0
    %4283 = vmatprep.subr.bf16.mxu0 0
    %4284 = vmatpush1.bf16.msra.mxu0 0
    %4285 = vmatprep.subr.bf16.mxu0 0
    %4286 = vmatpush1.bf16.msra.mxu0 0
    %4287 = vmatprep.subr.bf16.mxu0 0
    %4288 = vmatpush1.bf16.msra.mxu0 0
    %4289 = vmatprep.subr.bf16.mxu0 0
    %4290 = vmatpush1.bf16.msra.mxu0 0
    %4291 = vmatprep.subr.bf16.mxu0 0
    %4292 = vmatpush1.bf16.msra.mxu0 0
    %4293 = vmatprep.subr.bf16.mxu0 0
    %4294 = vmatpush1.bf16.msra.mxu0 0
    %4295 = vmatprep.subr.bf16.mxu0 0
    %4296 = vmatpush1.bf16.msra.mxu0 0
    %4297 = vmatprep.subr.bf16.mxu0 0
    %4298 = vmatpush1.bf16.msra.mxu0 0
    %4299 = vmatprep.subr.bf16.mxu0 0
    %4300 = vmatpush1.bf16.msra.mxu0 0
    %4301 = vmatprep.subr.bf16.mxu0 0
    %4302 = vmatpush1.bf16.msra.mxu0 0
    %4303 = vmatprep.mubr.bf16.mxu0 0
    %4304 = vmatmul.mubr.bf16.gmra.mrb[0].mxu0 %v4266
    %v4305 = vpop.f32.mrb[0].mxu0
    %v4306 = vadd.f32 0.0, %v4305
    %v4307 = vpop.f32.mrb[0].mxu0
    %v4308 = vpop.f32.mrb[0].mxu0
    %v4309 = vpop.f32.mrb[0].mxu0
    %4310 = vdwg.mxu0
    %4311 = vrot.lane.b32.xlu0 %v505, 104
    %v4312 = vpop.permute.xlu0 %4311
    %v4314 = vsel %vm511, %v4068, 0
    %v4317 = vsel %vm986, %v4312, 0
    %4319 = vmatprep.subr.bf16.mxu0 0
    %4320 = vmatpush1.bf16.msra.mxu0 %v4317
    %4321 = vmatprep.subr.bf16.mxu0 0
    %4322 = vmatpush1.bf16.msra.mxu0 0
    %4323 = vmatprep.subr.bf16.mxu0 0
    %4324 = vmatpush1.bf16.msra.mxu0 0
    %4325 = vmatprep.subr.bf16.mxu0 0
    %4326 = vmatpush1.bf16.msra.mxu0 0
    %4327 = vmatprep.subr.bf16.mxu0 0
    %4328 = vmatpush1.bf16.msra.mxu0 0
    %4329 = vmatprep.subr.bf16.mxu0 0
    %4330 = vmatpush1.bf16.msra.mxu0 0
    %4331 = vmatprep.subr.bf16.mxu0 0
    %4332 = vmatpush1.bf16.msra.mxu0 0
    %4333 = vmatprep.subr.bf16.mxu0 0
    %4334 = vmatpush1.bf16.msra.mxu0 0
    %4335 = vmatprep.subr.bf16.mxu0 0
    %4336 = vmatpush1.bf16.msra.mxu0 0
    %4337 = vmatprep.subr.bf16.mxu0 0
    %4338 = vmatpush1.bf16.msra.mxu0 0
    %4339 = vmatprep.subr.bf16.mxu0 0
    %4340 = vmatpush1.bf16.msra.mxu0 0
    %4341 = vmatprep.subr.bf16.mxu0 0
    %4342 = vmatpush1.bf16.msra.mxu0 0
    %4343 = vmatprep.subr.bf16.mxu0 0
    %4344 = vmatpush1.bf16.msra.mxu0 0
    %4345 = vmatprep.subr.bf16.mxu0 0
    %4346 = vmatpush1.bf16.msra.mxu0 0
    %4347 = vmatprep.subr.bf16.mxu0 0
    %4348 = vmatpush1.bf16.msra.mxu0 0
    %4349 = vmatprep.subr.bf16.mxu0 0
    %4350 = vmatpush1.bf16.msra.mxu0 0
    %4351 = vmatprep.mubr.bf16.mxu0 0
    %4352 = vmatmul.mubr.bf16.gmra.mrb[0].mxu0 %v4314
    %v4353 = vpop.f32.mrb[0].mxu0
    %v4354 = vadd.f32 0.0, %v4353
    %v4355 = vpop.f32.mrb[0].mxu0
    %v4356 = vpop.f32.mrb[0].mxu0
    %v4357 = vpop.f32.mrb[0].mxu0
    %4358 = vdwg.mxu0
    %4359 = vrot.lane.b32.xlu0 %v507, 104
    %v4360 = vpop.permute.xlu0 %4359
    %v4362 = vsel %vm511, %v4069, 0
    %v4365 = vsel %vm986, %v4360, 0
    %4367 = vmatprep.subr.bf16.mxu0 0
    %4368 = vmatpush1.bf16.msra.mxu0 %v4365
    %4369 = vmatprep.subr.bf16.mxu0 0
    %4370 = vmatpush1.bf16.msra.mxu0 0
    %4371 = vmatprep.subr.bf16.mxu0 0
    %4372 = vmatpush1.bf16.msra.mxu0 0
    %4373 = vmatprep.subr.bf16.mxu0 0
    %4374 = vmatpush1.bf16.msra.mxu0 0
    %4375 = vmatprep.subr.bf16.mxu0 0
    %4376 = vmatpush1.bf16.msra.mxu0 0
    %4377 = vmatprep.subr.bf16.mxu0 0
    %4378 = vmatpush1.bf16.msra.mxu0 0
    %4379 = vmatprep.subr.bf16.mxu0 0
    %4380 = vmatpush1.bf16.msra.mxu0 0
    %4381 = vmatprep.subr.bf16.mxu0 0
    %4382 = vmatpush1.bf16.msra.mxu0 0
    %4383 = vmatprep.subr.bf16.mxu0 0
    %4384 = vmatpush1.bf16.msra.mxu0 0
    %4385 = vmatprep.subr.bf16.mxu0 0
    %4386 = vmatpush1.bf16.msra.mxu0 0
    %4387 = vmatprep.subr.bf16.mxu0 0
    %4388 = vmatpush1.bf16.msra.mxu0 0
    %4389 = vmatprep.subr.bf16.mxu0 0
    %4390 = vmatpush1.bf16.msra.mxu0 0
    %4391 = vmatprep.subr.bf16.mxu0 0
    %4392 = vmatpush1.bf16.msra.mxu0 0
    %4393 = vmatprep.subr.bf16.mxu0 0
    %4394 = vmatpush1.bf16.msra.mxu0 0
    %4395 = vmatprep.subr.bf16.mxu0 0
    %4396 = vmatpush1.bf16.msra.mxu0 0
    %4397 = vmatprep.subr.bf16.mxu0 0
    %4398 = vmatpush1.bf16.msra.mxu0 0
    %4399 = vmatprep.mubr.bf16.mxu0 0
    %4400 = vmatmul.mubr.bf16.gmra.mrb[0].mxu0 %v4362
    %v4401 = vpop.f32.mrb[0].mxu0
    %v4402 = vadd.f32 0.0, %v4401
    %v4403 = vpop.f32.mrb[0].mxu0
    %v4404 = vpop.f32.mrb[0].mxu0
    %v4405 = vpop.f32.mrb[0].mxu0
    %4406 = vdwg.mxu0
    %4407 = vrot.lane.b32.xlu0 %v509, 104
    %v4408 = vpop.permute.xlu0 %4407
    %v4410 = vsel %vm511, %v4070, 0
    %v4413 = vsel %vm986, %v4408, 0
    %4415 = vmatprep.subr.bf16.mxu0 0
    %4416 = vmatpush1.bf16.msra.mxu0 %v4413
    %4417 = vmatprep.subr.bf16.mxu0 0
    %4418 = vmatpush1.bf16.msra.mxu0 0
    %4419 = vmatprep.subr.bf16.mxu0 0
    %4420 = vmatpush1.bf16.msra.mxu0 0
    %4421 = vmatprep.subr.bf16.mxu0 0
    %4422 = vmatpush1.bf16.msra.mxu0 0
    %4423 = vmatprep.subr.bf16.mxu0 0
    %4424 = vmatpush1.bf16.msra.mxu0 0
    %4425 = vmatprep.subr.bf16.mxu0 0
    %4426 = vmatpush1.bf16.msra.mxu0 0
    %4427 = vmatprep.subr.bf16.mxu0 0
    %4428 = vmatpush1.bf16.msra.mxu0 0
    %4429 = vmatprep.subr.bf16.mxu0 0
    %4430 = vmatpush1.bf16.msra.mxu0 0
    %4431 = vmatprep.subr.bf16.mxu0 0
    %4432 = vmatpush1.bf16.msra.mxu0 0
    %4433 = vmatprep.subr.bf16.mxu0 0
    %4434 = vmatpush1.bf16.msra.mxu0 0
    %4435 = vmatprep.subr.bf16.mxu0 0
    %4436 = vmatpush1.bf16.msra.mxu0 0
    %4437 = vmatprep.subr.bf16.mxu0 0
    %4438 = vmatpush1.bf16.msra.mxu0 0
    %4439 = vmatprep.subr.bf16.mxu0 0
    %4440 = vmatpush1.bf16.msra.mxu0 0
    %4441 = vmatprep.subr.bf16.mxu0 0
    %4442 = vmatpush1.bf16.msra.mxu0 0
    %4443 = vmatprep.subr.bf16.mxu0 0
    %4444 = vmatpush1.bf16.msra.mxu0 0
    %4445 = vmatprep.subr.bf16.mxu0 0
    %4446 = vmatpush1.bf16.msra.mxu0 0
    %4447 = vmatprep.mubr.bf16.mxu0 0
    %4448 = vmatmul.mubr.bf16.gmra.mrb[0].mxu0 %v4410
    %v4449 = vpop.f32.mrb[0].mxu0
    %v4450 = vadd.f32 0.0, %v4449
    %v4451 = vpop.f32.mrb[0].mxu0
    %v4452 = vpop.f32.mrb[0].mxu0
    %v4453 = vpop.f32.mrb[0].mxu0
    %4454 = vdwg.mxu0
    %v4455 = vsel %vm511, %v4114, 0.0
    %v4456 = vrot.slane %v4455, 4
    %v4457 = vadd.f32 %v4455, %v4456
    %v4458 = vrot.slane %v4457, 2
    %v4459 = vadd.f32 %v4457, %v4458
    %v4460 = vrot.slane %v4459, 1
    %v4461 = vadd.f32 %v4459, %v4460
    %v4462 = vsel %vm511, %v4162, 0.0
    %v4463 = vrot.slane %v4462, 4
    %v4464 = vadd.f32 %v4462, %v4463
    %v4465 = vrot.slane %v4464, 2
    %v4466 = vadd.f32 %v4464, %v4465
    %v4467 = vrot.slane %v4466, 1
    %v4468 = vadd.f32 %v4466, %v4467
    %v4469 = vsel %vm511, %v4210, 0.0
    %v4470 = vrot.slane %v4469, 4
    %v4471 = vadd.f32 %v4469, %v4470
    %v4472 = vrot.slane %v4471, 2
    %v4473 = vadd.f32 %v4471, %v4472
    %v4474 = vrot.slane %v4473, 1
    %v4475 = vadd.f32 %v4473, %v4474
    %v4476 = vsel %vm511, %v4258, 0.0
    %v4477 = vrot.slane %v4476, 4
    %v4478 = vadd.f32 %v4476, %v4477
    %v4479 = vrot.slane %v4478, 2
    %v4480 = vadd.f32 %v4478, %v4479
    %v4481 = vrot.slane %v4480, 1
    %v4482 = vadd.f32 %v4480, %v4481
    %v4483 = vsel %vm511, %v4306, 0.0
    %v4484 = vrot.slane %v4483, 4
    %v4485 = vadd.f32 %v4483, %v4484
    %v4486 = vrot.slane %v4485, 2
    %v4487 = vadd.f32 %v4485, %v4486
    %v4488 = vrot.slane %v4487, 1
    %v4489 = vadd.f32 %v4487, %v4488
    %v4490 = vsel %vm511, %v4354, 0.0
    %v4491 = vrot.slane %v4490, 4
    %v4492 = vadd.f32 %v4490, %v4491
    %v4493 = vrot.slane %v4492, 2
    %v4494 = vadd.f32 %v4492, %v4493
    %v4495 = vrot.slane %v4494, 1
    %v4496 = vadd.f32 %v4494, %v4495
    %v4497 = vsel %vm511, %v4402, 0.0
    %v4498 = vrot.slane %v4497, 4
    %v4499 = vadd.f32 %v4497, %v4498
    %v4500 = vrot.slane %v4499, 2
    %v4501 = vadd.f32 %v4499, %v4500
    %v4502 = vrot.slane %v4501, 1
    %v4503 = vadd.f32 %v4501, %v4502
    %v4504 = vsel %vm511, %v4450, 0.0
    %v4505 = vrot.slane %v4504, 4
    %v4506 = vadd.f32 %v4504, %v4505
    %v4507 = vrot.slane %v4506, 2
    %v4508 = vadd.f32 %v4506, %v4507
    %v4509 = vrot.slane %v4508, 1
    %v4510 = vadd.f32 %v4508, %v4509
    %v4511 = vpack.c.bf16 %v4162, %v4114
    %v4512 = vpack.c.bf16 %v4258, %v4210
    %v4513 = vpack.c.bf16 %v4354, %v4306
    %v4514 = vpack.c.bf16 %v4450, %v4402
    %v4515 = vld [vmem:[#allocation7 + $0xc] sm:$0xf]
    %v4517 = vsel %vm511, %v4511, 0
    %v4520 = vsel %vm511, %v4512, 0
    %v4523 = vsel %vm511, %v4513, 0
    %v4526 = vsel %vm511, %v4514, 0
    %v4529 = vsel %vm986, %v4515, 0
    %4531 = vmatprep.subr.bf16.mxu0 0
    %4532 = vmatpush1.bf16.msra.mxu0 %v4529
    %4533 = vmatprep.subr.bf16.mxu0 0
    %4534 = vmatpush1.bf16.msra.mxu0 0
    %4535 = vmatprep.subr.bf16.mxu0 0
    %4536 = vmatpush1.bf16.msra.mxu0 0
    %4537 = vmatprep.subr.bf16.mxu0 0
    %4538 = vmatpush1.bf16.msra.mxu0 0
    %4539 = vmatprep.subr.bf16.mxu0 0
    %4540 = vmatpush1.bf16.msra.mxu0 0
    %4541 = vmatprep.subr.bf16.mxu0 0
    %4542 = vmatpush1.bf16.msra.mxu0 0
    %4543 = vmatprep.subr.bf16.mxu0 0
    %4544 = vmatpush1.bf16.msra.mxu0 0
    %4545 = vmatprep.subr.bf16.mxu0 0
    %4546 = vmatpush1.bf16.msra.mxu0 0
    %4547 = vmatprep.subr.bf16.mxu0 0
    %4548 = vmatpush1.bf16.msra.mxu0 0
    %4549 = vmatprep.subr.bf16.mxu0 0
    %4550 = vmatpush1.bf16.msra.mxu0 0
    %4551 = vmatprep.subr.bf16.mxu0 0
    %4552 = vmatpush1.bf16.msra.mxu0 0
    %4553 = vmatprep.subr.bf16.mxu0 0
    %4554 = vmatpush1.bf16.msra.mxu0 0
    %4555 = vmatprep.subr.bf16.mxu0 0
    %4556 = vmatpush1.bf16.msra.mxu0 0
    %4557 = vmatprep.subr.bf16.mxu0 0
    %4558 = vmatpush1.bf16.msra.mxu0 0
    %4559 = vmatprep.subr.bf16.mxu0 0
    %4560 = vmatpush1.bf16.msra.mxu0 0
    %4561 = vmatprep.subr.bf16.mxu0 0
    %4562 = vmatpush1.bf16.msra.mxu0 0
    %4563 = vmatprep.mubr.bf16.mxu0 0
    %4564 = vmatmul.mubr.bf16.gmra.mrb[0].mxu0 %v4517
    %v4565 = vpop.f32.mrb[0].mxu0
    %v4566 = vadd.f32 0.0, %v4565
    %v4567 = vpop.f32.mrb[0].mxu0
    %v4568 = vpop.f32.mrb[0].mxu0
    %v4569 = vadd.f32 0.0, %v4568
    %v4570 = vpop.f32.mrb[0].mxu0
    %4571 = vmatprep.mubr.bf16.mxu0 0
    %4572 = vmatmul.mubr.bf16.gmra.mrb[0].mxu0 %v4520
    %v4573 = vpop.f32.mrb[0].mxu0
    %v4574 = vadd.f32 0.0, %v4573
    %v4575 = vpop.f32.mrb[0].mxu0
    %v4576 = vpop.f32.mrb[0].mxu0
    %v4577 = vadd.f32 0.0, %v4576
    %v4578 = vpop.f32.mrb[0].mxu0
    %4579 = vmatprep.mubr.bf16.mxu0 0
    %4580 = vmatmul.mubr.bf16.gmra.mrb[0].mxu0 %v4523
    %v4581 = vpop.f32.mrb[0].mxu0
    %v4582 = vadd.f32 0.0, %v4581
    %v4583 = vpop.f32.mrb[0].mxu0
    %v4584 = vpop.f32.mrb[0].mxu0
    %v4585 = vadd.f32 0.0, %v4584
    %v4586 = vpop.f32.mrb[0].mxu0
    %4587 = vmatprep.mubr.bf16.mxu0 0
    %4588 = vmatmul.mubr.bf16.gmra.mrb[0].mxu0 %v4526
    %v4589 = vpop.f32.mrb[0].mxu0
    %v4590 = vadd.f32 0.0, %v4589
    %v4591 = vpop.f32.mrb[0].mxu0
    %v4592 = vpop.f32.mrb[0].mxu0
    %v4593 = vadd.f32 0.0, %v4592
    %v4594 = vpop.f32.mrb[0].mxu0
    %4595 = vdwg.mxu0
    %v4596 = vadd.f32 %v3559, %v4566
    %v4597 = vadd.f32 %v3560, %v4569
    %v4598 = vadd.f32 %v3561, %v4574
    %v4599 = vadd.f32 %v3562, %v4577
    %v4600 = vadd.f32 %v3563, %v4582
    %v4601 = vadd.f32 %v3564, %v4585
    %v4602 = vadd.f32 %v3565, %v4590
    %v4603 = vadd.f32 %v3566, %v4593
    %v4604 = vld [vmem:[%s3] sm:$0x1]
    %v4606 = vlaneseq
    %v4607 = vshrl.u32 %v4606, 7
    %v4608 = vsub.s32 0, %v4607
    %v4609 = vrot.slane %v4604, %v4608
    %v4611 = vadd.f32 %v4596, %v4609
    %v4612 = vadd.f32 %v4597, %v4609
    %v4613 = vadd.f32 %v4598, %v4609
    %v4614 = vadd.f32 %v4599, %v4609
    %v4615 = vadd.f32 %v4600, %v4609
    %v4616 = vadd.f32 %v4601, %v4609
    %v4617 = vadd.f32 %v4602, %v4609
    %v4618 = vadd.f32 %v4603, %v4609
    %v4619 = vmax.f32 %v4611, 0.0
    %v4620 = vmax.f32 %v4612, 0.0
    %v4621 = vmax.f32 %v4613, 0.0
    %v4622 = vmax.f32 %v4614, 0.0
    %v4623 = vmax.f32 %v4615, 0.0
    %v4624 = vmax.f32 %v4616, 0.0
    %v4625 = vmax.f32 %v4617, 0.0
    %v4626 = vmax.f32 %v4618, 0.0
    %v4627 = vrot.slane %v4619, 4
    %v4628 = vadd.f32 %v4619, %v4627
    %v4629 = vrot.slane %v4628, 2
    %v4630 = vadd.f32 %v4628, %v4629
    %v4631 = vrot.slane %v4630, 1
    %v4632 = vadd.f32 %v4630, %v4631
    %v4633 = vrot.slane %v4620, 4
    %v4634 = vadd.f32 %v4620, %v4633
    %v4635 = vrot.slane %v4634, 2
    %v4636 = vadd.f32 %v4634, %v4635
    %v4637 = vrot.slane %v4636, 1
    %v4638 = vadd.f32 %v4636, %v4637
    %v4639 = vrot.slane %v4621, 4
    %v4640 = vadd.f32 %v4621, %v4639
    %v4641 = vrot.slane %v4640, 2
    %v4642 = vadd.f32 %v4640, %v4641
    %v4643 = vrot.slane %v4642, 1
    %v4644 = vadd.f32 %v4642, %v4643
    %v4645 = vrot.slane %v4622, 4
    %v4646 = vadd.f32 %v4622, %v4645
    %v4647 = vrot.slane %v4646, 2
    %v4648 = vadd.f32 %v4646, %v4647
    %v4649 = vrot.slane %v4648, 1
    %v4650 = vadd.f32 %v4648, %v4649
    %v4651 = vrot.slane %v4623, 4
    %v4652 = vadd.f32 %v4623, %v4651
    %v4653 = vrot.slane %v4652, 2
    %v4654 = vadd.f32 %v4652, %v4653
    %v4655 = vrot.slane %v4654, 1
    %v4656 = vadd.f32 %v4654, %v4655
    %v4657 = vrot.slane %v4624, 4
    %v4658 = vadd.f32 %v4624, %v4657
    %v4659 = vrot.slane %v4658, 2
    %v4660 = vadd.f32 %v4658, %v4659
    %v4661 = vrot.slane %v4660, 1
    %v4662 = vadd.f32 %v4660, %v4661
    %v4663 = vrot.slane %v4625, 4
    %v4664 = vadd.f32 %v4625, %v4663
    %v4665 = vrot.slane %v4664, 2
    %v4666 = vadd.f32 %v4664, %v4665
    %v4667 = vrot.slane %v4666, 1
    %v4668 = vadd.f32 %v4666, %v4667
    %v4669 = vrot.slane %v4626, 4
    %v4670 = vadd.f32 %v4626, %v4669
    %v4671 = vrot.slane %v4670, 2
    %v4672 = vadd.f32 %v4670, %v4671
    %v4673 = vrot.slane %v4672, 1
    %v4674 = vadd.f32 %v4672, %v4673
    %vm4683 = vcmask 1041409
    %v4684 = vsel %vm4683, %v1365, %v1358
    %vm4685 = vcmask 1042434
    %v4686 = vsel %vm4685, %v1372, %v4684
    %vm4687 = vcmask 1043459
    %v4688 = vsel %vm4687, %v1379, %v4686
    %vm4689 = vcmask 1044484
    %v4690 = vsel %vm4689, %v1386, %v4688
    %vm4691 = vcmask 1045509
    %v4692 = vsel %vm4691, %v1393, %v4690
    %vm4693 = vcmask 1046534
    %v4694 = vsel %vm4693, %v1400, %v4692
    %vm4695 = vcmask 1047559
    %v4696 = vsel %vm4695, %v1407, %v4694
    %v4706 = vsel %vm4683, %v2322, %v2315
    %v4707 = vsel %vm4685, %v2329, %v4706
    %v4708 = vsel %vm4687, %v2336, %v4707
    %v4709 = vsel %vm4689, %v2343, %v4708
    %v4710 = vsel %vm4691, %v2350, %v4709
    %v4711 = vsel %vm4693, %v2357, %v4710
    %v4712 = vsel %vm4695, %v2364, %v4711
    %4713 = vrot.lane.b32.xlu0 %v4712, 8
    %v4714 = vpop.permute.xlu0 %4713
    %v4724 = vsel %vm4683, %v3431, %v3424
    %v4725 = vsel %vm4685, %v3438, %v4724
    %v4726 = vsel %vm4687, %v3445, %v4725
    %v4727 = vsel %vm4689, %v3452, %v4726
    %v4728 = vsel %vm4691, %v3459, %v4727
    %v4729 = vsel %vm4693, %v3466, %v4728
    %v4730 = vsel %vm4695, %v3473, %v4729
    %4731 = vrot.lane.b32.xlu0 %v4730, 16
    %v4732 = vpop.permute.xlu0 %4731
    %v4742 = vsel %vm4683, %v4468, %v4461
    %v4743 = vsel %vm4685, %v4475, %v4742
    %v4744 = vsel %vm4687, %v4482, %v4743
    %v4745 = vsel %vm4689, %v4489, %v4744
    %v4746 = vsel %vm4691, %v4496, %v4745
    %v4747 = vsel %vm4693, %v4503, %v4746
    %v4748 = vsel %vm4695, %v4510, %v4747
    %4749 = vrot.lane.b32.xlu0 %v4748, 24
    %v4750 = vpop.permute.xlu0 %4749
    %v4752 = vsel %vm511, %v4696, %v4714
    %vm4753 = vcmask 130048
    %v4754 = vsel %vm4753, %v4752, %v4732
    %vm4755 = vcmask 195584
    %v4756 = vsel %vm4755, %v4754, %v4750
    %vm4757 = vcmask 261120
    %v4758 = vsel %vm4757, %v4756, 0.0
    %v4760 = vrot.slane %v4758, 1
    %v4761 = vrot.slane %v4758, 2
    %v4762 = vrot.slane %v4758, 3
    %v4763 = vrot.slane %v4758, 4
    %v4764 = vrot.slane %v4758, 5
    %v4765 = vrot.slane %v4758, 6
    %v4766 = vrot.slane %v4758, 7
    %v4775 = vadd.f32 %v4632, %v4758
    %v4776 = vadd.f32 %v4638, %v4760
    %v4777 = vadd.f32 %v4644, %v4761
    %v4778 = vadd.f32 %v4650, %v4762
    %v4779 = vadd.f32 %v4656, %v4763
    %v4780 = vadd.f32 %v4662, %v4764
    %v4781 = vadd.f32 %v4668, %v4765
    %v4782 = vadd.f32 %v4674, %v4766
    %v4783 = vadd.f32 %v4775, %v81
    %v4784 = vadd.f32 %v4776, %v87
    %v4785 = vadd.f32 %v4777, %v93
    %v4786 = vadd.f32 %v4778, %v99
    %v4787 = vadd.f32 %v4779, %v105
    %v4788 = vadd.f32 %v4780, %v111
    %v4789 = vadd.f32 %v4781, %v117
    %v4790 = vadd.f32 %v4782, %v123
    %v4791 = vmul.f32 %v4783, 0.125
    %v4792 = vmul.f32 %v4784, 0.125
    %v4793 = vmul.f32 %v4785, 0.125
    %v4794 = vmul.f32 %v4786, 0.125
    %v4795 = vmul.f32 %v4787, 0.125
    %v4796 = vmul.f32 %v4788, 0.125
    %v4797 = vmul.f32 %v4789, 0.125
    %v4798 = vmul.f32 %v4790, 0.125
    %v4807 = vrot.slane %v4792, 7
    %v4808 = vsel %vm4683, %v4807, %v4791
    %v4809 = vrot.slane %v4793, 6
    %v4810 = vsel %vm4685, %v4809, %v4808
    %v4811 = vrot.slane %v4794, 5
    %v4812 = vsel %vm4687, %v4811, %v4810
    %v4813 = vrot.slane %v4795, 4
    %v4814 = vsel %vm4689, %v4813, %v4812
    %v4815 = vrot.slane %v4796, 3
    %v4816 = vsel %vm4691, %v4815, %v4814
    %v4817 = vrot.slane %v4797, 2
    %v4818 = vsel %vm4693, %v4817, %v4816
    %v4819 = vrot.slane %v4798, 1
    %v4820 = vsel %vm4695, %v4819, %v4818
    %4822 = vst [vmem:[#allocation8] sm:$0xff] %v4820
    // Predicated region
    $region30: #{tpu_custom_call.1} parent=1 // pred_check
      _
    $region31: #{tpu_custom_call.1} parent=1 // pred_check_branch
      %4824 = sbr.rel (0) target = $region33
    $region32: #{tpu_custom_call.1} parent=1 // pred_region
      %s4826 = ssub.s32 128, 128
      %4827 = vsyncadd [#allocation4], %s4826
      %s4829 = sshll.u32 [#allocation8], 4
      %s4830 = int_to_ptr.vmem [resolvable:$true] %s4829
      %4832 = dma.vmem_to_hbm [thread:$0]  %s4830, 128, %s4, [#allocation4]
    $region33: #{tpu_custom_call.1} parent=1 // pred_fallthru
      _
    // Predicated region
    $region34: #{tpu_custom_call.1} parent=1 // pred_check
      _
    $region35: #{tpu_custom_call.1} parent=1 // pred_check_branch
      %4834 = sbr.rel (0) target = $region37
    $region36: #{tpu_custom_call.1} parent=1 // pred_region
      %4835 = dma.done [#allocation4], 128
    $region37: #{tpu_custom_call.1} parent=1 // pred_fallthru
      _
    %4836 = vsyncpa [#allocation3], 1
    %4837 = vsyncpa [#allocation6], 1
    %4838 = vsyncpa [#allocation4], 1

</llo_original>
